<compile_context>
chip_gen: v6e
topology: v6e:2x2x1
jax: 0.10.0
libtpu: 0.0.40
codegen_flags: <defaults>
</compile_context>

<pallas_src>
import jax
import jax.numpy as jnp
from jax import lax
from jax.experimental import pallas as pl
from jax.experimental.pallas import tpu as pltpu


def _round_up(x, m):
    return ((x + m - 1) // m) * m


def _pad_gates_last(arr, h, h_pad):
    """Pad the last dim (3*h, laid out [r|z|n]) gate-wise to 3*h_pad."""
    parts = jnp.split(arr, 3, axis=-1)
    pad = [(0, 0)] * (arr.ndim - 1) + [(0, h_pad - h)]
    return jnp.concatenate([jnp.pad(p, pad) for p in parts], axis=-1)


# ----------------------------------------------------------------------------
# Pallas kernel: one chunk of t_chunk GRU timesteps per grid iteration.
# Only the recurrent h @ W_hh matmul lives here; input gates are precomputed.
# ----------------------------------------------------------------------------
def _gru_chunk_kernel(gx_ref, lens_ref, whh_ref, bhn_ref, out_ref, hid_ref):
    # gx_ref:   (t_chunk, b_tile, 3*H_pad) bf16  precomputed x@W_ih^T (+ folded r/z/n input biases)
    # lens_ref: (b_tile, 1)                i32   valid sequence length per batch row
    # whh_ref:  (H_pad, 3*H_pad)           bf16  hidden->gates weights (pre-transposed)
    # bhn_ref:  (1, H_pad)                 f32   hidden bias for the n gate (sits under r)
    # out_ref:  (t_chunk, b_tile, H_pad)   f32   outputs for this chunk (lane-dense, time-major)
    # hid_ref:  (b_tile, H_pad)            f32   carried hidden (grid-resident over the time axis)
    chunk = pl.program_id(1)

    @pl.when(chunk == 0)
    def _():
        hid_ref[...] = jnp.zeros_like(hid_ref)

    bt, hp = hid_ref.shape
    t_chunk = gx_ref.shape[0]

    lens = lens_ref[...]                       # (bt, 1) int32, fetched once per batch tile
    t_base = chunk * t_chunk
    # Hoisted out of the unrolled loop: JAX does not CSE broadcast_in_dim.
    b_hn = jnp.broadcast_to(bhn_ref[...], (bt, hp))

    def step(t, h):
        gx = gx_ref[t].astype(jnp.float32)     # (bt, 3*hp), bf16 stream -> f32 math
        # MXU consumes W_hh straight from VMEM (no vreg hoist / spill risk).
        gh = jnp.dot(h.astype(jnp.bfloat16), whh_ref[...],
                     preferred_element_type=jnp.float32)
        # PyTorch GRU gate ordering: r, z, n (b_ih+b_hh for r/z pre-folded into gx).
        r = jax.nn.sigmoid(gx[:, :hp] + gh[:, :hp])
        z = jax.nn.sigmoid(gx[:, hp:2 * hp] + gh[:, hp:2 * hp])
        n = jnp.tanh(gx[:, 2 * hp:] + r * (gh[:, 2 * hp:] + b_hn))
        h_cand = (1.0 - z) * n + z * h
        # Packed-sequence masking: state only advances for valid timesteps,
        # padded output positions are zero (pad_packed_sequence semantics).
        valid = (t_base + t) < lens            # (bt, 1) bool
        out_ref[t] = jnp.where(valid, h_cand, 0.0)
        return jnp.where(valid, h_cand, h)

    hid_ref[...] = lax.fori_loop(0, t_chunk, step, hid_ref[...], unroll=True)


def _gru_recurrence_pallas(gates_x, lens, w_hh_bf16, b_hn, *, t_chunk, b_tile, h_pad):
    """gates_x: (T_pad, B_pad, 3*H_pad) bf16; lens: (B_pad, 1) int32."""
    T_pad, B_pad, G = gates_x.shape
    n_chunks = T_pad // t_chunk
    n_btiles = B_pad // b_tile

    # VMEM budget: 2x double-buffered streaming blocks + resident params/state,
    # clamped to stay comfortably under v7x's 64 MiB physical VMEM.
    gates_blk = t_chunk * b_tile * G * 2           # bf16
    out_blk = t_chunk * b_tile * h_pad * 4         # f32
    fixed = h_pad * G * 2 + h_pad * 4 + b_tile * 4 + b_tile * h_pad * 4
    vmem_limit = int(min(48 * 2**20,
                         max(32 * 2**20, 2 * (gates_blk + out_blk + fixed) + (4 << 20))))

    outputs, hidden = pl.pallas_call(
        _gru_chunk_kernel,
        grid=(n_btiles, n_chunks),
        in_specs=[
            pl.BlockSpec((t_chunk, b_tile, G), lambda b, c: (c, b, 0)),      # gates_x (bf16)
            pl.BlockSpec((b_tile, 1), lambda b, c: (b, 0)),                  # lengths (fetched once/tile)
            pl.BlockSpec((h_pad, G), lambda b, c: (0, 0)),                   # W_hh^T (bf16)
            pl.BlockSpec((1, h_pad), lambda b, c: (0, 0)),                   # b_hn
        ],
        out_specs=[
            pl.BlockSpec((t_chunk, b_tile, h_pad), lambda b, c: (c, b, 0)),  # outputs (time-major)
            pl.BlockSpec((b_tile, h_pad), lambda b, c: (b, 0)),              # final hidden (resident)
        ],
        out_shape=[
            jax.ShapeDtypeStruct((T_pad, B_pad, h_pad), jnp.float32),
            jax.ShapeDtypeStruct((B_pad, h_pad), jnp.float32),
        ],
        compiler_params=pltpu.CompilerParams(
            # batch tiles are independent -> shard across v7x's 2 TensorCores;
            # the time-chunk axis is the serial recurrence.
            dimension_semantics=("parallel", "arbitrary"),
            vmem_limit_bytes=vmem_limit,
        ),
    )(gates_x, lens, w_hh_bf16, b_hn)
    return outputs, hidden


# ----------------------------------------------------------------------------
# Encoder wrapper: embedding lookup + hoisted bf16 input-gate GEMM + GRU kernel.
# ----------------------------------------------------------------------------
def encoder_forward(params, src, src_lengths, *, max_src_len=None,
                    t_chunk=16, b_tile=None):
    """src: [B, T] int32 token ids; src_lengths: [B] int32 (sorted descending).

    Returns (outputs [B, max_src_len, H], hidden [1, B, H]) matching the
    PyTorch module with cell_type='gru', n_layers=1, bidirectional=False,
    eval mode. `max_src_len` must be a static Python int under jit
    (pad_packed_sequence truncation); defaults to the full T.
    """
    B, T = src.shape
    H = params["w_hh_t"].shape[0]
    E = params["embedding"].shape[1]

    H_pad = _round_up(H, 128)              # lane-dense stores
    if b_tile is None:
        # Fill MXU rows; tiny batches fall back to one full tile (b_tile == B_pad).
        # On v7x with large B, prefer b_tile such that B_pad // b_tile >= 2.
        b_tile = min(128, _round_up(B, 8))
    B_pad = _round_up(B, b_tile)
    T_pad = _round_up(T, t_chunk)

    # Embedding lookup (+ dropout in eval mode == identity), time-major + padded.
    emb = params["embedding"][src]                       # [B, T, E]
    x = jnp.transpose(emb, (1, 0, 2))                    # [T, B, E]
    x = jnp.pad(x, ((0, T_pad - T), (0, B_pad - B), (0, 0)))

    # --- prepare padded / folded parameters (cheap one-time XLA glue) ---
    w_ih_p = _pad_gates_last(params["w_ih_t"], H, H_pad).astype(jnp.bfloat16)   # (E, 3*H_pad)
    w_hh_p = _pad_gates_last(params["w_hh_t"], H, H_pad)                        # (H, 3*H_pad)
    w_hh_p = jnp.pad(w_hh_p, ((0, H_pad - H), (0, 0))).astype(jnp.bfloat16)     # (H_pad, 3*H_pad)
    b_ir, b_iz, b_in = jnp.split(params["b_ih"], 3)
    b_hr, b_hz, b_hn = jnp.split(params["b_hh"], 3)
    # fold b_ih + b_hh for r/z into the input-gate bias; keep b_hn separate (under r).
    bias_x = _pad_gates_last(
        jnp.concatenate([b_ir + b_hr, b_iz + b_hz, b_in])[None, :], H, H_pad)   # (1, 3*H_pad) f32
    b_hn_p = jnp.pad(b_hn[None, :], ((0, 0), (0, H_pad - H)))                   # (1, H_pad) f32

    # --- hoisted input-gate GEMM: one large bf16 MXU matmul, f32 acc + bias ---
    gates_x = jnp.dot(x.reshape(T_pad * B_pad, E).astype(jnp.bfloat16), w_ih_p,
                      preferred_element_type=jnp.float32) + bias_x
    # streamed to the kernel as bf16 (halves HBM traffic / VMEM block size)
    gates_x = gates_x.astype(jnp.bfloat16).reshape(T_pad, B_pad, 3 * H_pad)

    # --- per-row valid lengths (replaces the old (T,B,1) mask stream) ---
    lens = jnp.pad(src_lengths.astype(jnp.int32), (0, B_pad - B))[:, None]      # (B_pad, 1)

    out_p, hid_p = _gru_recurrence_pallas(
        gates_x, lens, w_hh_p, b_hn_p, t_chunk=t_chunk, b_tile=b_tile, h_pad=H_pad)

    if max_src_len is None:
        max_src_len = T          # static; pass explicitly under jit
    # Slice before the batch-first transpose to minimize the extra HBM pass.
    outputs = jnp.transpose(out_p[:max_src_len, :B, :H], (1, 0, 2))   # [B, T_max, H]
    hidden = hid_p[:B, :H][None, :, :]                                # [1, B, H]
    return outputs, hidden


# ----------------------------------------------------------------------------
# Pure-JAX reference (lax.scan) with numerics that mirror the kernel pipeline:
# bf16 input GEMM + bf16 gx stream + bf16 W_hh, f32 accumulation / gate math.
# ----------------------------------------------------------------------------
def gru_encoder_ref(emb_bte, lengths, w_ih_t, w_hh_t, b_ih, b_hh):
    B, T, E = emb_bte.shape
    H = w_hh_t.shape[0]
    x_tbe = jnp.transpose(emb_bte, (1, 0, 2))

    b_ir, b_iz, b_in = jnp.split(b_ih, 3)
    b_hr, b_hz, b_hn = jnp.split(b_hh, 3)
    bias_x = jnp.concatenate([b_ir + b_hr, b_iz + b_hz, b_in])[None, :]

    gx_all = jnp.dot(x_tbe.reshape(T * B, E).astype(jnp.bfloat16),
                     w_ih_t.astype(jnp.bfloat16),
                     preferred_element_type=jnp.float32) + bias_x
    gx_all = gx_all.astype(jnp.bfloat16).astype(jnp.float32).reshape(T, B, 3 * H)
    w_hh_bf16 = w_hh_t.astype(jnp.bfloat16)

    def step(h, inp):
        gx, t = inp
        gh = jnp.dot(h.astype(jnp.bfloat16), w_hh_bf16,
                     preferred_element_type=jnp.float32)
        r = jax.nn.sigmoid(gx[:, :H] + gh[:, :H])
        z = jax.nn.sigmoid(gx[:, H:2 * H] + gh[:, H:2 * H])
        n = jnp.tanh(gx[:, 2 * H:] + r * (gh[:, 2 * H:] + b_hn))
        h_cand = (1.0 - z) * n + z * h
        m = (lengths > t)[:, None]
        return jnp.where(m, h_cand, h), jnp.where(m, h_cand, 0.0)

    h0 = jnp.zeros((B, H), jnp.float32)
    hT, outs = lax.scan(step, h0, (gx_all, jnp.arange(T)))
    return jnp.transpose(outs, (1, 0, 2)), hT      # [B, T, H], [B, H]


# ----------------------------------------------------------------------------
# Deterministic parameter init (PyTorch-style uniform(-1/sqrt(H), 1/sqrt(H)))
# ----------------------------------------------------------------------------
def init_params(key, input_dim, emb_dim, hidden_dim):
    k_emb, k_wi, k_wh, k_bi, k_bh = jax.random.split(key, 5)
    bound = 1.0 / jnp.sqrt(hidden_dim)
    return {
        "embedding": jax.random.normal(k_emb, (input_dim, emb_dim), jnp.float32),
        # stored pre-transposed: W_ih is (3H, E) in PyTorch -> (E, 3H) here
        "w_ih_t": jax.random.uniform(k_wi, (emb_dim, 3 * hidden_dim), jnp.float32,
                                     -bound, bound),
        "w_hh_t": jax.random.uniform(k_wh, (hidden_dim, 3 * hidden_dim), jnp.float32,
                                     -bound, bound),
        "b_ih": jax.random.uniform(k_bi, (3 * hidden_dim,), jnp.float32, -bound, bound),
        "b_hh": jax.random.uniform(k_bh, (3 * hidden_dim,), jnp.float32, -bound, bound),
    }


if __name__ == "__main__":
    # Config consistent with the module: input_dim=vocab, emb_dim, hidden_dim,
    # n_layers=1, dropout=0.1 (eval -> identity), bidirectional=False, cell='gru'
    INPUT_DIM, EMB_DIM, HIDDEN_DIM = 20, 16, 32
    B, T = 2, 8

    key = jax.random.PRNGKey(0)
    k_params, k_src = jax.random.split(key)
    params = init_params(k_params, INPUT_DIM, EMB_DIM, HIDDEN_DIM)

    src = jax.random.randint(k_src, (B, T), 0, INPUT_DIM, dtype=jnp.int32)
    # enforce_sorted=True => lengths sorted descending; max length == T.
    src_lengths_host = [T, T - 3]
    src_lengths = jnp.array(src_lengths_host, dtype=jnp.int32)
    # Static (host-side) max length -> jit-safe, no int(jnp.max(...)) concretization.
    max_src_len = max(src_lengths_host)

    outputs, hidden = encoder_forward(params, src, src_lengths,
                                      max_src_len=max_src_len, t_chunk=16)
    outputs = jax.block_until_ready(outputs)
    hidden = jax.block_until_ready(hidden)

    # Verify against the pure-JAX reference (identical mixed-precision numerics).
    emb = params["embedding"][src]
    ref_outputs, ref_hidden = gru_encoder_ref(
        emb, src_lengths, params["w_ih_t"], params["w_hh_t"],
        params["b_ih"], params["b_hh"])
    ref_outputs = ref_outputs[:, :max_src_len, :]

    assert outputs.shape == (B, max_src_len, HIDDEN_DIM), outputs.shape
    assert hidden.shape == (1, B, HIDDEN_DIM), hidden.shape
    assert jnp.allclose(outputs, ref_outputs, atol=1e-3, rtol=1e-3)
    assert jnp.allclose(hidden[0], ref_hidden, atol=1e-3, rtol=1e-3)

    print("KERNEL_OK")
</pallas_src>

<mosaic_0001>
module attributes {stable_mosaic.version = 11 : i64} {
  func.func @_gru_chunk_kernel(%arg0: i32, %arg1: i32, %arg2: memref<16x8x384xbf16, #tpu.memory_space<vmem>>, %arg3: memref<8x1xi32, #tpu.memory_space<vmem>>, %arg4: memref<128x384xbf16, #tpu.memory_space<vmem>>, %arg5: memref<1x128xf32, #tpu.memory_space<vmem>>, %arg6: memref<16x8x128xf32, #tpu.memory_space<vmem>>, %arg7: memref<8x128xf32, #tpu.memory_space<vmem>>) attributes {dimension_semantics = [#tpu.dimension_semantics<parallel>, #tpu.dimension_semantics<arbitrary>], iteration_bounds = array<i64: 1, 1>, scalar_prefetch = 0 : i64, scratch_operands = 0 : i64, tpu.core_type = #tpu.core_type<tc>, window_params = [{transform_indices = @transform_0, window_bounds = array<i64: 16, 8, 384>}, {transform_indices = @transform_1, window_bounds = array<i64: 8, 1>}, {pipeline_mode = #tpu.pipeline_mode<synchronous>, transform_indices = @transform_2, window_bounds = array<i64: 128, 384>}, {pipeline_mode = #tpu.pipeline_mode<synchronous>, transform_indices = @transform_3, window_bounds = array<i64: 1, 128>}, {transform_indices = @transform_4, window_bounds = array<i64: 16, 8, 128>}, {transform_indices = @transform_5, window_bounds = array<i64: 8, 128>}]} {
    %c0_i32 = arith.constant 0 : i32
    %0 = arith.cmpi eq, %arg1, %c0_i32 : i32
    %1 = arith.extui %0 : i1 to i32
    %c0_i32_0 = arith.constant 0 : i32
    %2 = arith.cmpi ne, %1, %c0_i32_0 : i32
    scf.if %2 {
      %cst_185 = arith.constant 0.000000e+00 : f32
      %778 = vector.broadcast %cst_185 : f32 to vector<8x128xf32>
      %c0_186 = arith.constant 0 : index
      %c0_187 = arith.constant 0 : index
      %779 = vector.load %arg7[%c0_186, %c0_187] : memref<8x128xf32, #tpu.memory_space<vmem>>, vector<8x128xf32>
      tpu.vector_store %arg7[%c0_186, %c0_187], %778 {strides = array<i32>} : memref<8x128xf32, #tpu.memory_space<vmem>>, vector<8x128xf32>,
    } else {
    }
    %c0 = arith.constant 0 : index
    %c0_1 = arith.constant 0 : index
    %3 = vector.load %arg3[%c0, %c0_1] : memref<8x1xi32, #tpu.memory_space<vmem>>, vector<8x1xi32>
    %c16_i32 = arith.constant 16 : i32
    %4 = arith.muli %arg1, %c16_i32 : i32
    %c0_2 = arith.constant 0 : index
    %c0_3 = arith.constant 0 : index
    %5 = vector.load %arg5[%c0_2, %c0_3] : memref<1x128xf32, #tpu.memory_space<vmem>>, vector<1x128xf32>
    %6 = vector.shape_cast %5 : vector<1x128xf32> to vector<1x128xf32>
    %7 = vector.broadcast %6 : vector<1x128xf32> to vector<8x128xf32>
    %c0_4 = arith.constant 0 : index
    %c0_5 = arith.constant 0 : index
    %8 = vector.load %arg7[%c0_4, %c0_5] : memref<8x128xf32, #tpu.memory_space<vmem>>, vector<8x128xf32>
    %c0_i32_6 = arith.constant 0 : i32
    %9 = arith.index_cast %c0_i32_6 : i32 to index
    %c0_7 = arith.constant 0 : index
    %c0_8 = arith.constant 0 : index
    %10 = vector.load %arg2[%9, %c0_7, %c0_8] : memref<16x8x384xbf16, #tpu.memory_space<vmem>>, vector<1x8x384xbf16>
    %11 = vector.shape_cast %10 : vector<1x8x384xbf16> to vector<8x384xbf16>
    %12 = arith.extf %11 : vector<8x384xbf16> to vector<8x384xf32>
    %13 = arith.truncf %8 : vector<8x128xf32> to vector<8x128xbf16>
    %c0_9 = arith.constant 0 : index
    %c0_10 = arith.constant 0 : index
    %14 = vector.load %arg4[%c0_9, %c0_10] : memref<128x384xbf16, #tpu.memory_space<vmem>>, vector<128x384xbf16>
    %cst = arith.constant dense<0.000000e+00> : vector<8x384xf32>
    %15 = tpu.matmul %13, %14, %cst {dimension_numbers = #tpu.dot_dimension_numbers<[1], [0], [0], [1], [0, 0, 1, 1], [], []>} : vector<8x128xbf16>, vector<128x384xbf16>, vector<8x384xf32> -> vector<8x384xf32>
    %16 = vector.extract_strided_slice %12 {offsets = [0, 0], sizes = [8, 128], strides = [1, 1]} : vector<8x384xf32> to vector<8x128xf32>
    %17 = vector.extract_strided_slice %15 {offsets = [0, 0], sizes = [8, 128], strides = [1, 1]} : vector<8x384xf32> to vector<8x128xf32>
    %18 = arith.addf %16, %17 : vector<8x128xf32>
    %19 = arith.negf %18 : vector<8x128xf32>
    %20 = math.exp %19 : vector<8x128xf32>
    %cst_11 = arith.constant 1.000000e+00 : f32
    %21 = vector.broadcast %cst_11 : f32 to vector<8x128xf32>
    %22 = arith.addf %21, %20 : vector<8x128xf32>
    %23 = arith.divf %21, %22 : vector<8x128xf32>
    %24 = vector.extract_strided_slice %12 {offsets = [0, 128], sizes = [8, 128], strides = [1, 1]} : vector<8x384xf32> to vector<8x128xf32>
    %25 = vector.extract_strided_slice %15 {offsets = [0, 128], sizes = [8, 128], strides = [1, 1]} : vector<8x384xf32> to vector<8x128xf32>
    %26 = arith.addf %24, %25 : vector<8x128xf32>
    %27 = arith.negf %26 : vector<8x128xf32>
    %28 = math.exp %27 : vector<8x128xf32>
    %cst_12 = arith.constant 1.000000e+00 : f32
    %29 = vector.broadcast %cst_12 : f32 to vector<8x128xf32>
    %30 = arith.addf %29, %28 : vector<8x128xf32>
    %31 = arith.divf %29, %30 : vector<8x128xf32>
    %32 = vector.extract_strided_slice %12 {offsets = [0, 256], sizes = [8, 128], strides = [1, 1]} : vector<8x384xf32> to vector<8x128xf32>
    %33 = vector.extract_strided_slice %15 {offsets = [0, 256], sizes = [8, 128], strides = [1, 1]} : vector<8x384xf32> to vector<8x128xf32>
    %34 = arith.addf %33, %7 : vector<8x128xf32>
    %35 = arith.mulf %23, %34 : vector<8x128xf32>
    %36 = arith.addf %32, %35 : vector<8x128xf32>
    %37 = math.tanh %36 : vector<8x128xf32>
    %cst_13 = arith.constant 1.000000e+00 : f32
    %38 = vector.broadcast %cst_13 : f32 to vector<8x128xf32>
    %39 = arith.subf %38, %31 : vector<8x128xf32>
    %40 = arith.mulf %39, %37 : vector<8x128xf32>
    %41 = arith.mulf %31, %8 : vector<8x128xf32>
    %42 = arith.addf %40, %41 : vector<8x128xf32>
    %43 = arith.addi %4, %c0_i32_6 : i32
    %44 = vector.broadcast %43 : i32 to vector<8x1xi32>
    %45 = arith.cmpi slt, %44, %3 : vector<8x1xi32>
    %cst_14 = arith.constant 0.000000e+00 : f32
    %46 = vector.shape_cast %45 : vector<8x1xi1> to vector<8x1xi1>
    %47 = vector.broadcast %46 : vector<8x1xi1> to vector<8x128xi1>
    %48 = vector.broadcast %cst_14 : f32 to vector<8x128xf32>
    %49 = arith.select %47, %42, %48 : vector<8x128xi1>, vector<8x128xf32>
    %50 = arith.index_cast %c0_i32_6 : i32 to index
    %c0_15 = arith.constant 0 : index
    %c0_16 = arith.constant 0 : index
    %51 = vector.load %arg6[%50, %c0_15, %c0_16] : memref<16x8x128xf32, #tpu.memory_space<vmem>>, vector<1x8x128xf32>
    %52 = vector.shape_cast %51 : vector<1x8x128xf32> to vector<8x128xf32>
    %53 = vector.shape_cast %49 : vector<8x128xf32> to vector<1x8x128xf32>
    tpu.vector_store %arg6[%50, %c0_15, %c0_16], %53 {strides = array<i32>} : memref<16x8x128xf32, #tpu.memory_space<vmem>>, vector<1x8x128xf32>,
    %54 = vector.shape_cast %45 : vector<8x1xi1> to vector<8x1xi1>
    %55 = vector.broadcast %54 : vector<8x1xi1> to vector<8x128xi1>
    %56 = arith.select %55, %42, %8 : vector<8x128xi1>, vector<8x128xf32>
    %c1_i32 = arith.constant 1 : i32
    %57 = arith.index_cast %c1_i32 : i32 to index
    %c0_17 = arith.constant 0 : index
    %c0_18 = arith.constant 0 : index
    %58 = vector.load %arg2[%57, %c0_17, %c0_18] : memref<16x8x384xbf16, #tpu.memory_space<vmem>>, vector<1x8x384xbf16>
    %59 = vector.shape_cast %58 : vector<1x8x384xbf16> to vector<8x384xbf16>
    %60 = arith.extf %59 : vector<8x384xbf16> to vector<8x384xf32>
    %61 = arith.truncf %56 : vector<8x128xf32> to vector<8x128xbf16>
    %c0_19 = arith.constant 0 : index
    %c0_20 = arith.constant 0 : index
    %62 = vector.load %arg4[%c0_19, %c0_20] : memref<128x384xbf16, #tpu.memory_space<vmem>>, vector<128x384xbf16>
    %cst_21 = arith.constant dense<0.000000e+00> : vector<8x384xf32>
    %63 = tpu.matmul %61, %62, %cst_21 {dimension_numbers = #tpu.dot_dimension_numbers<[1], [0], [0], [1], [0, 0, 1, 1], [], []>} : vector<8x128xbf16>, vector<128x384xbf16>, vector<8x384xf32> -> vector<8x384xf32>
    %64 = vector.extract_strided_slice %60 {offsets = [0, 0], sizes = [8, 128], strides = [1, 1]} : vector<8x384xf32> to vector<8x128xf32>
    %65 = vector.extract_strided_slice %63 {offsets = [0, 0], sizes = [8, 128], strides = [1, 1]} : vector<8x384xf32> to vector<8x128xf32>
    %66 = arith.addf %64, %65 : vector<8x128xf32>
    %67 = arith.negf %66 : vector<8x128xf32>
    %68 = math.exp %67 : vector<8x128xf32>
    %cst_22 = arith.constant 1.000000e+00 : f32
    %69 = vector.broadcast %cst_22 : f32 to vector<8x128xf32>
    %70 = arith.addf %69, %68 : vector<8x128xf32>
    %71 = arith.divf %69, %70 : vector<8x128xf32>
    %72 = vector.extract_strided_slice %60 {offsets = [0, 128], sizes = [8, 128], strides = [1, 1]} : vector<8x384xf32> to vector<8x128xf32>
    %73 = vector.extract_strided_slice %63 {offsets = [0, 128], sizes = [8, 128], strides = [1, 1]} : vector<8x384xf32> to vector<8x128xf32>
    %74 = arith.addf %72, %73 : vector<8x128xf32>
    %75 = arith.negf %74 : vector<8x128xf32>
    %76 = math.exp %75 : vector<8x128xf32>
    %cst_23 = arith.constant 1.000000e+00 : f32
    %77 = vector.broadcast %cst_23 : f32 to vector<8x128xf32>
    %78 = arith.addf %77, %76 : vector<8x128xf32>
    %79 = arith.divf %77, %78 : vector<8x128xf32>
    %80 = vector.extract_strided_slice %60 {offsets = [0, 256], sizes = [8, 128], strides = [1, 1]} : vector<8x384xf32> to vector<8x128xf32>
    %81 = vector.extract_strided_slice %63 {offsets = [0, 256], sizes = [8, 128], strides = [1, 1]} : vector<8x384xf32> to vector<8x128xf32>
    %82 = arith.addf %81, %7 : vector<8x128xf32>
    %83 = arith.mulf %71, %82 : vector<8x128xf32>
    %84 = arith.addf %80, %83 : vector<8x128xf32>
    %85 = math.tanh %84 : vector<8x128xf32>
    %cst_24 = arith.constant 1.000000e+00 : f32
    %86 = vector.broadcast %cst_24 : f32 to vector<8x128xf32>
    %87 = arith.subf %86, %79 : vector<8x128xf32>
    %88 = arith.mulf %87, %85 : vector<8x128xf32>
    %89 = arith.mulf %79, %56 : vector<8x128xf32>
    %90 = arith.addf %88, %89 : vector<8x128xf32>
    %91 = arith.addi %4, %c1_i32 : i32
    %92 = vector.broadcast %91 : i32 to vector<8x1xi32>
    %93 = arith.cmpi slt, %92, %3 : vector<8x1xi32>
    %cst_25 = arith.constant 0.000000e+00 : f32
    %94 = vector.shape_cast %93 : vector<8x1xi1> to vector<8x1xi1>
    %95 = vector.broadcast %94 : vector<8x1xi1> to vector<8x128xi1>
    %96 = vector.broadcast %cst_25 : f32 to vector<8x128xf32>
    %97 = arith.select %95, %90, %96 : vector<8x128xi1>, vector<8x128xf32>
    %98 = arith.index_cast %c1_i32 : i32 to index
    %c0_26 = arith.constant 0 : index
    %c0_27 = arith.constant 0 : index
    %99 = vector.load %arg6[%98, %c0_26, %c0_27] : memref<16x8x128xf32, #tpu.memory_space<vmem>>, vector<1x8x128xf32>
    %100 = vector.shape_cast %99 : vector<1x8x128xf32> to vector<8x128xf32>
    %101 = vector.shape_cast %97 : vector<8x128xf32> to vector<1x8x128xf32>
    tpu.vector_store %arg6[%98, %c0_26, %c0_27], %101 {strides = array<i32>} : memref<16x8x128xf32, #tpu.memory_space<vmem>>, vector<1x8x128xf32>,
    %102 = vector.shape_cast %93 : vector<8x1xi1> to vector<8x1xi1>
    %103 = vector.broadcast %102 : vector<8x1xi1> to vector<8x128xi1>
    %104 = arith.select %103, %90, %56 : vector<8x128xi1>, vector<8x128xf32>
    %c2_i32 = arith.constant 2 : i32
    %105 = arith.index_cast %c2_i32 : i32 to index
    %c0_28 = arith.constant 0 : index
    %c0_29 = arith.constant 0 : index
    %106 = vector.load %arg2[%105, %c0_28, %c0_29] : memref<16x8x384xbf16, #tpu.memory_space<vmem>>, vector<1x8x384xbf16>
    %107 = vector.shape_cast %106 : vector<1x8x384xbf16> to vector<8x384xbf16>
    %108 = arith.extf %107 : vector<8x384xbf16> to vector<8x384xf32>
    %109 = arith.truncf %104 : vector<8x128xf32> to vector<8x128xbf16>
    %c0_30 = arith.constant 0 : index
    %c0_31 = arith.constant 0 : index
    %110 = vector.load %arg4[%c0_30, %c0_31] : memref<128x384xbf16, #tpu.memory_space<vmem>>, vector<128x384xbf16>
    %cst_32 = arith.constant dense<0.000000e+00> : vector<8x384xf32>
    %111 = tpu.matmul %109, %110, %cst_32 {dimension_numbers = #tpu.dot_dimension_numbers<[1], [0], [0], [1], [0, 0, 1, 1], [], []>} : vector<8x128xbf16>, vector<128x384xbf16>, vector<8x384xf32> -> vector<8x384xf32>
    %112 = vector.extract_strided_slice %108 {offsets = [0, 0], sizes = [8, 128], strides = [1, 1]} : vector<8x384xf32> to vector<8x128xf32>
    %113 = vector.extract_strided_slice %111 {offsets = [0, 0], sizes = [8, 128], strides = [1, 1]} : vector<8x384xf32> to vector<8x128xf32>
    %114 = arith.addf %112, %113 : vector<8x128xf32>
    %115 = arith.negf %114 : vector<8x128xf32>
    %116 = math.exp %115 : vector<8x128xf32>
    %cst_33 = arith.constant 1.000000e+00 : f32
    %117 = vector.broadcast %cst_33 : f32 to vector<8x128xf32>
    %118 = arith.addf %117, %116 : vector<8x128xf32>
    %119 = arith.divf %117, %118 : vector<8x128xf32>
    %120 = vector.extract_strided_slice %108 {offsets = [0, 128], sizes = [8, 128], strides = [1, 1]} : vector<8x384xf32> to vector<8x128xf32>
    %121 = vector.extract_strided_slice %111 {offsets = [0, 128], sizes = [8, 128], strides = [1, 1]} : vector<8x384xf32> to vector<8x128xf32>
    %122 = arith.addf %120, %121 : vector<8x128xf32>
    %123 = arith.negf %122 : vector<8x128xf32>
    %124 = math.exp %123 : vector<8x128xf32>
    %cst_34 = arith.constant 1.000000e+00 : f32
    %125 = vector.broadcast %cst_34 : f32 to vector<8x128xf32>
    %126 = arith.addf %125, %124 : vector<8x128xf32>
    %127 = arith.divf %125, %126 : vector<8x128xf32>
    %128 = vector.extract_strided_slice %108 {offsets = [0, 256], sizes = [8, 128], strides = [1, 1]} : vector<8x384xf32> to vector<8x128xf32>
    %129 = vector.extract_strided_slice %111 {offsets = [0, 256], sizes = [8, 128], strides = [1, 1]} : vector<8x384xf32> to vector<8x128xf32>
    %130 = arith.addf %129, %7 : vector<8x128xf32>
    %131 = arith.mulf %119, %130 : vector<8x128xf32>
    %132 = arith.addf %128, %131 : vector<8x128xf32>
    %133 = math.tanh %132 : vector<8x128xf32>
    %cst_35 = arith.constant 1.000000e+00 : f32
    %134 = vector.broadcast %cst_35 : f32 to vector<8x128xf32>
    %135 = arith.subf %134, %127 : vector<8x128xf32>
    %136 = arith.mulf %135, %133 : vector<8x128xf32>
    %137 = arith.mulf %127, %104 : vector<8x128xf32>
    %138 = arith.addf %136, %137 : vector<8x128xf32>
    %139 = arith.addi %4, %c2_i32 : i32
    %140 = vector.broadcast %139 : i32 to vector<8x1xi32>
    %141 = arith.cmpi slt, %140, %3 : vector<8x1xi32>
    %cst_36 = arith.constant 0.000000e+00 : f32
    %142 = vector.shape_cast %141 : vector<8x1xi1> to vector<8x1xi1>
    %143 = vector.broadcast %142 : vector<8x1xi1> to vector<8x128xi1>
    %144 = vector.broadcast %cst_36 : f32 to vector<8x128xf32>
    %145 = arith.select %143, %138, %144 : vector<8x128xi1>, vector<8x128xf32>
    %146 = arith.index_cast %c2_i32 : i32 to index
    %c0_37 = arith.constant 0 : index
    %c0_38 = arith.constant 0 : index
    %147 = vector.load %arg6[%146, %c0_37, %c0_38] : memref<16x8x128xf32, #tpu.memory_space<vmem>>, vector<1x8x128xf32>
    %148 = vector.shape_cast %147 : vector<1x8x128xf32> to vector<8x128xf32>
    %149 = vector.shape_cast %145 : vector<8x128xf32> to vector<1x8x128xf32>
    tpu.vector_store %arg6[%146, %c0_37, %c0_38], %149 {strides = array<i32>} : memref<16x8x128xf32, #tpu.memory_space<vmem>>, vector<1x8x128xf32>,
    %150 = vector.shape_cast %141 : vector<8x1xi1> to vector<8x1xi1>
    %151 = vector.broadcast %150 : vector<8x1xi1> to vector<8x128xi1>
    %152 = arith.select %151, %138, %104 : vector<8x128xi1>, vector<8x128xf32>
    %c3_i32 = arith.constant 3 : i32
    %153 = arith.index_cast %c3_i32 : i32 to index
    %c0_39 = arith.constant 0 : index
    %c0_40 = arith.constant 0 : index
    %154 = vector.load %arg2[%153, %c0_39, %c0_40] : memref<16x8x384xbf16, #tpu.memory_space<vmem>>, vector<1x8x384xbf16>
    %155 = vector.shape_cast %154 : vector<1x8x384xbf16> to vector<8x384xbf16>
    %156 = arith.extf %155 : vector<8x384xbf16> to vector<8x384xf32>
    %157 = arith.truncf %152 : vector<8x128xf32> to vector<8x128xbf16>
    %c0_41 = arith.constant 0 : index
    %c0_42 = arith.constant 0 : index
    %158 = vector.load %arg4[%c0_41, %c0_42] : memref<128x384xbf16, #tpu.memory_space<vmem>>, vector<128x384xbf16>
    %cst_43 = arith.constant dense<0.000000e+00> : vector<8x384xf32>
    %159 = tpu.matmul %157, %158, %cst_43 {dimension_numbers = #tpu.dot_dimension_numbers<[1], [0], [0], [1], [0, 0, 1, 1], [], []>} : vector<8x128xbf16>, vector<128x384xbf16>, vector<8x384xf32> -> vector<8x384xf32>
    %160 = vector.extract_strided_slice %156 {offsets = [0, 0], sizes = [8, 128], strides = [1, 1]} : vector<8x384xf32> to vector<8x128xf32>
    %161 = vector.extract_strided_slice %159 {offsets = [0, 0], sizes = [8, 128], strides = [1, 1]} : vector<8x384xf32> to vector<8x128xf32>
    %162 = arith.addf %160, %161 : vector<8x128xf32>
    %163 = arith.negf %162 : vector<8x128xf32>
    %164 = math.exp %163 : vector<8x128xf32>
    %cst_44 = arith.constant 1.000000e+00 : f32
    %165 = vector.broadcast %cst_44 : f32 to vector<8x128xf32>
    %166 = arith.addf %165, %164 : vector<8x128xf32>
    %167 = arith.divf %165, %166 : vector<8x128xf32>
    %168 = vector.extract_strided_slice %156 {offsets = [0, 128], sizes = [8, 128], strides = [1, 1]} : vector<8x384xf32> to vector<8x128xf32>
    %169 = vector.extract_strided_slice %159 {offsets = [0, 128], sizes = [8, 128], strides = [1, 1]} : vector<8x384xf32> to vector<8x128xf32>
    %170 = arith.addf %168, %169 : vector<8x128xf32>
    %171 = arith.negf %170 : vector<8x128xf32>
    %172 = math.exp %171 : vector<8x128xf32>
    %cst_45 = arith.constant 1.000000e+00 : f32
    %173 = vector.broadcast %cst_45 : f32 to vector<8x128xf32>
    %174 = arith.addf %173, %172 : vector<8x128xf32>
    %175 = arith.divf %173, %174 : vector<8x128xf32>
    %176 = vector.extract_strided_slice %156 {offsets = [0, 256], sizes = [8, 128], strides = [1, 1]} : vector<8x384xf32> to vector<8x128xf32>
    %177 = vector.extract_strided_slice %159 {offsets = [0, 256], sizes = [8, 128], strides = [1, 1]} : vector<8x384xf32> to vector<8x128xf32>
    %178 = arith.addf %177, %7 : vector<8x128xf32>
    %179 = arith.mulf %167, %178 : vector<8x128xf32>
    %180 = arith.addf %176, %179 : vector<8x128xf32>
    %181 = math.tanh %180 : vector<8x128xf32>
    %cst_46 = arith.constant 1.000000e+00 : f32
    %182 = vector.broadcast %cst_46 : f32 to vector<8x128xf32>
    %183 = arith.subf %182, %175 : vector<8x128xf32>
    %184 = arith.mulf %183, %181 : vector<8x128xf32>
    %185 = arith.mulf %175, %152 : vector<8x128xf32>
    %186 = arith.addf %184, %185 : vector<8x128xf32>
    %187 = arith.addi %4, %c3_i32 : i32
    %188 = vector.broadcast %187 : i32 to vector<8x1xi32>
    %189 = arith.cmpi slt, %188, %3 : vector<8x1xi32>
    %cst_47 = arith.constant 0.000000e+00 : f32
    %190 = vector.shape_cast %189 : vector<8x1xi1> to vector<8x1xi1>
    %191 = vector.broadcast %190 : vector<8x1xi1> to vector<8x128xi1>
    %192 = vector.broadcast %cst_47 : f32 to vector<8x128xf32>
    %193 = arith.select %191, %186, %192 : vector<8x128xi1>, vector<8x128xf32>
    %194 = arith.index_cast %c3_i32 : i32 to index
    %c0_48 = arith.constant 0 : index
    %c0_49 = arith.constant 0 : index
    %195 = vector.load %arg6[%194, %c0_48, %c0_49] : memref<16x8x128xf32, #tpu.memory_space<vmem>>, vector<1x8x128xf32>
    %196 = vector.shape_cast %195 : vector<1x8x128xf32> to vector<8x128xf32>
    %197 = vector.shape_cast %193 : vector<8x128xf32> to vector<1x8x128xf32>
    tpu.vector_store %arg6[%194, %c0_48, %c0_49], %197 {strides = array<i32>} : memref<16x8x128xf32, #tpu.memory_space<vmem>>, vector<1x8x128xf32>,
    %198 = vector.shape_cast %189 : vector<8x1xi1> to vector<8x1xi1>
    %199 = vector.broadcast %198 : vector<8x1xi1> to vector<8x128xi1>
    %200 = arith.select %199, %186, %152 : vector<8x128xi1>, vector<8x128xf32>
    %c4_i32 = arith.constant 4 : i32
    %201 = arith.index_cast %c4_i32 : i32 to index
    %c0_50 = arith.constant 0 : index
    %c0_51 = arith.constant 0 : index
    %202 = vector.load %arg2[%201, %c0_50, %c0_51] : memref<16x8x384xbf16, #tpu.memory_space<vmem>>, vector<1x8x384xbf16>
    %203 = vector.shape_cast %202 : vector<1x8x384xbf16> to vector<8x384xbf16>
    %204 = arith.extf %203 : vector<8x384xbf16> to vector<8x384xf32>
    %205 = arith.truncf %200 : vector<8x128xf32> to vector<8x128xbf16>
    %c0_52 = arith.constant 0 : index
    %c0_53 = arith.constant 0 : index
    %206 = vector.load %arg4[%c0_52, %c0_53] : memref<128x384xbf16, #tpu.memory_space<vmem>>, vector<128x384xbf16>
    %cst_54 = arith.constant dense<0.000000e+00> : vector<8x384xf32>
    %207 = tpu.matmul %205, %206, %cst_54 {dimension_numbers = #tpu.dot_dimension_numbers<[1], [0], [0], [1], [0, 0, 1, 1], [], []>} : vector<8x128xbf16>, vector<128x384xbf16>, vector<8x384xf32> -> vector<8x384xf32>
    %208 = vector.extract_strided_slice %204 {offsets = [0, 0], sizes = [8, 128], strides = [1, 1]} : vector<8x384xf32> to vector<8x128xf32>
    %209 = vector.extract_strided_slice %207 {offsets = [0, 0], sizes = [8, 128], strides = [1, 1]} : vector<8x384xf32> to vector<8x128xf32>
    %210 = arith.addf %208, %209 : vector<8x128xf32>
    %211 = arith.negf %210 : vector<8x128xf32>
    %212 = math.exp %211 : vector<8x128xf32>
    %cst_55 = arith.constant 1.000000e+00 : f32
    %213 = vector.broadcast %cst_55 : f32 to vector<8x128xf32>
    %214 = arith.addf %213, %212 : vector<8x128xf32>
    %215 = arith.divf %213, %214 : vector<8x128xf32>
    %216 = vector.extract_strided_slice %204 {offsets = [0, 128], sizes = [8, 128], strides = [1, 1]} : vector<8x384xf32> to vector<8x128xf32>
    %217 = vector.extract_strided_slice %207 {offsets = [0, 128], sizes = [8, 128], strides = [1, 1]} : vector<8x384xf32> to vector<8x128xf32>
    %218 = arith.addf %216, %217 : vector<8x128xf32>
    %219 = arith.negf %218 : vector<8x128xf32>
    %220 = math.exp %219 : vector<8x128xf32>
    %cst_56 = arith.constant 1.000000e+00 : f32
    %221 = vector.broadcast %cst_56 : f32 to vector<8x128xf32>
    %222 = arith.addf %221, %220 : vector<8x128xf32>
    %223 = arith.divf %221, %222 : vector<8x128xf32>
    %224 = vector.extract_strided_slice %204 {offsets = [0, 256], sizes = [8, 128], strides = [1, 1]} : vector<8x384xf32> to vector<8x128xf32>
    %225 = vector.extract_strided_slice %207 {offsets = [0, 256], sizes = [8, 128], strides = [1, 1]} : vector<8x384xf32> to vector<8x128xf32>
    %226 = arith.addf %225, %7 : vector<8x128xf32>
    %227 = arith.mulf %215, %226 : vector<8x128xf32>
    %228 = arith.addf %224, %227 : vector<8x128xf32>
    %229 = math.tanh %228 : vector<8x128xf32>
    %cst_57 = arith.constant 1.000000e+00 : f32
    %230 = vector.broadcast %cst_57 : f32 to vector<8x128xf32>
    %231 = arith.subf %230, %223 : vector<8x128xf32>
    %232 = arith.mulf %231, %229 : vector<8x128xf32>
    %233 = arith.mulf %223, %200 : vector<8x128xf32>
    %234 = arith.addf %232, %233 : vector<8x128xf32>
    %235 = arith.addi %4, %c4_i32 : i32
    %236 = vector.broadcast %235 : i32 to vector<8x1xi32>
    %237 = arith.cmpi slt, %236, %3 : vector<8x1xi32>
    %cst_58 = arith.constant 0.000000e+00 : f32
    %238 = vector.shape_cast %237 : vector<8x1xi1> to vector<8x1xi1>
    %239 = vector.broadcast %238 : vector<8x1xi1> to vector<8x128xi1>
    %240 = vector.broadcast %cst_58 : f32 to vector<8x128xf32>
    %241 = arith.select %239, %234, %240 : vector<8x128xi1>, vector<8x128xf32>
    %242 = arith.index_cast %c4_i32 : i32 to index
    %c0_59 = arith.constant 0 : index
    %c0_60 = arith.constant 0 : index
    %243 = vector.load %arg6[%242, %c0_59, %c0_60] : memref<16x8x128xf32, #tpu.memory_space<vmem>>, vector<1x8x128xf32>
    %244 = vector.shape_cast %243 : vector<1x8x128xf32> to vector<8x128xf32>
    %245 = vector.shape_cast %241 : vector<8x128xf32> to vector<1x8x128xf32>
    tpu.vector_store %arg6[%242, %c0_59, %c0_60], %245 {strides = array<i32>} : memref<16x8x128xf32, #tpu.memory_space<vmem>>, vector<1x8x128xf32>,
    %246 = vector.shape_cast %237 : vector<8x1xi1> to vector<8x1xi1>
    %247 = vector.broadcast %246 : vector<8x1xi1> to vector<8x128xi1>
    %248 = arith.select %247, %234, %200 : vector<8x128xi1>, vector<8x128xf32>
    %c5_i32 = arith.constant 5 : i32
    %249 = arith.index_cast %c5_i32 : i32 to index
    %c0_61 = arith.constant 0 : index
    %c0_62 = arith.constant 0 : index
    %250 = vector.load %arg2[%249, %c0_61, %c0_62] : memref<16x8x384xbf16, #tpu.memory_space<vmem>>, vector<1x8x384xbf16>
    %251 = vector.shape_cast %250 : vector<1x8x384xbf16> to vector<8x384xbf16>
    %252 = arith.extf %251 : vector<8x384xbf16> to vector<8x384xf32>
    %253 = arith.truncf %248 : vector<8x128xf32> to vector<8x128xbf16>
    %c0_63 = arith.constant 0 : index
    %c0_64 = arith.constant 0 : index
    %254 = vector.load %arg4[%c0_63, %c0_64] : memref<128x384xbf16, #tpu.memory_space<vmem>>, vector<128x384xbf16>
    %cst_65 = arith.constant dense<0.000000e+00> : vector<8x384xf32>
    %255 = tpu.matmul %253, %254, %cst_65 {dimension_numbers = #tpu.dot_dimension_numbers<[1], [0], [0], [1], [0, 0, 1, 1], [], []>} : vector<8x128xbf16>, vector<128x384xbf16>, vector<8x384xf32> -> vector<8x384xf32>
    %256 = vector.extract_strided_slice %252 {offsets = [0, 0], sizes = [8, 128], strides = [1, 1]} : vector<8x384xf32> to vector<8x128xf32>
    %257 = vector.extract_strided_slice %255 {offsets = [0, 0], sizes = [8, 128], strides = [1, 1]} : vector<8x384xf32> to vector<8x128xf32>
    %258 = arith.addf %256, %257 : vector<8x128xf32>
    %259 = arith.negf %258 : vector<8x128xf32>
    %260 = math.exp %259 : vector<8x128xf32>
    %cst_66 = arith.constant 1.000000e+00 : f32
    %261 = vector.broadcast %cst_66 : f32 to vector<8x128xf32>
    %262 = arith.addf %261, %260 : vector<8x128xf32>
    %263 = arith.divf %261, %262 : vector<8x128xf32>
    %264 = vector.extract_strided_slice %252 {offsets = [0, 128], sizes = [8, 128], strides = [1, 1]} : vector<8x384xf32> to vector<8x128xf32>
    %265 = vector.extract_strided_slice %255 {offsets = [0, 128], sizes = [8, 128], strides = [1, 1]} : vector<8x384xf32> to vector<8x128xf32>
    %266 = arith.addf %264, %265 : vector<8x128xf32>
    %267 = arith.negf %266 : vector<8x128xf32>
    %268 = math.exp %267 : vector<8x128xf32>
    %cst_67 = arith.constant 1.000000e+00 : f32
    %269 = vector.broadcast %cst_67 : f32 to vector<8x128xf32>
    %270 = arith.addf %269, %268 : vector<8x128xf32>
    %271 = arith.divf %269, %270 : vector<8x128xf32>
    %272 = vector.extract_strided_slice %252 {offsets = [0, 256], sizes = [8, 128], strides = [1, 1]} : vector<8x384xf32> to vector<8x128xf32>
    %273 = vector.extract_strided_slice %255 {offsets = [0, 256], sizes = [8, 128], strides = [1, 1]} : vector<8x384xf32> to vector<8x128xf32>
    %274 = arith.addf %273, %7 : vector<8x128xf32>
    %275 = arith.mulf %263, %274 : vector<8x128xf32>
    %276 = arith.addf %272, %275 : vector<8x128xf32>
    %277 = math.tanh %276 : vector<8x128xf32>
    %cst_68 = arith.constant 1.000000e+00 : f32
    %278 = vector.broadcast %cst_68 : f32 to vector<8x128xf32>
    %279 = arith.subf %278, %271 : vector<8x128xf32>
    %280 = arith.mulf %279, %277 : vector<8x128xf32>
    %281 = arith.mulf %271, %248 : vector<8x128xf32>
    %282 = arith.addf %280, %281 : vector<8x128xf32>
    %283 = arith.addi %4, %c5_i32 : i32
    %284 = vector.broadcast %283 : i32 to vector<8x1xi32>
    %285 = arith.cmpi slt, %284, %3 : vector<8x1xi32>
    %cst_69 = arith.constant 0.000000e+00 : f32
    %286 = vector.shape_cast %285 : vector<8x1xi1> to vector<8x1xi1>
    %287 = vector.broadcast %286 : vector<8x1xi1> to vector<8x128xi1>
    %288 = vector.broadcast %cst_69 : f32 to vector<8x128xf32>
    %289 = arith.select %287, %282, %288 : vector<8x128xi1>, vector<8x128xf32>
    %290 = arith.index_cast %c5_i32 : i32 to index
    %c0_70 = arith.constant 0 : index
    %c0_71 = arith.constant 0 : index
    %291 = vector.load %arg6[%290, %c0_70, %c0_71] : memref<16x8x128xf32, #tpu.memory_space<vmem>>, vector<1x8x128xf32>
    %292 = vector.shape_cast %291 : vector<1x8x128xf32> to vector<8x128xf32>
    %293 = vector.shape_cast %289 : vector<8x128xf32> to vector<1x8x128xf32>
    tpu.vector_store %arg6[%290, %c0_70, %c0_71], %293 {strides = array<i32>} : memref<16x8x128xf32, #tpu.memory_space<vmem>>, vector<1x8x128xf32>,
    %294 = vector.shape_cast %285 : vector<8x1xi1> to vector<8x1xi1>
    %295 = vector.broadcast %294 : vector<8x1xi1> to vector<8x128xi1>
    %296 = arith.select %295, %282, %248 : vector<8x128xi1>, vector<8x128xf32>
    %c6_i32 = arith.constant 6 : i32
    %297 = arith.index_cast %c6_i32 : i32 to index
    %c0_72 = arith.constant 0 : index
    %c0_73 = arith.constant 0 : index
    %298 = vector.load %arg2[%297, %c0_72, %c0_73] : memref<16x8x384xbf16, #tpu.memory_space<vmem>>, vector<1x8x384xbf16>
    %299 = vector.shape_cast %298 : vector<1x8x384xbf16> to vector<8x384xbf16>
    %300 = arith.extf %299 : vector<8x384xbf16> to vector<8x384xf32>
    %301 = arith.truncf %296 : vector<8x128xf32> to vector<8x128xbf16>
    %c0_74 = arith.constant 0 : index
    %c0_75 = arith.constant 0 : index
    %302 = vector.load %arg4[%c0_74, %c0_75] : memref<128x384xbf16, #tpu.memory_space<vmem>>, vector<128x384xbf16>
    %cst_76 = arith.constant dense<0.000000e+00> : vector<8x384xf32>
    %303 = tpu.matmul %301, %302, %cst_76 {dimension_numbers = #tpu.dot_dimension_numbers<[1], [0], [0], [1], [0, 0, 1, 1], [], []>} : vector<8x128xbf16>, vector<128x384xbf16>, vector<8x384xf32> -> vector<8x384xf32>
    %304 = vector.extract_strided_slice %300 {offsets = [0, 0], sizes = [8, 128], strides = [1, 1]} : vector<8x384xf32> to vector<8x128xf32>
    %305 = vector.extract_strided_slice %303 {offsets = [0, 0], sizes = [8, 128], strides = [1, 1]} : vector<8x384xf32> to vector<8x128xf32>
    %306 = arith.addf %304, %305 : vector<8x128xf32>
    %307 = arith.negf %306 : vector<8x128xf32>
    %308 = math.exp %307 : vector<8x128xf32>
    %cst_77 = arith.constant 1.000000e+00 : f32
    %309 = vector.broadcast %cst_77 : f32 to vector<8x128xf32>
    %310 = arith.addf %309, %308 : vector<8x128xf32>
    %311 = arith.divf %309, %310 : vector<8x128xf32>
    %312 = vector.extract_strided_slice %300 {offsets = [0, 128], sizes = [8, 128], strides = [1, 1]} : vector<8x384xf32> to vector<8x128xf32>
    %313 = vector.extract_strided_slice %303 {offsets = [0, 128], sizes = [8, 128], strides = [1, 1]} : vector<8x384xf32> to vector<8x128xf32>
    %314 = arith.addf %312, %313 : vector<8x128xf32>
    %315 = arith.negf %314 : vector<8x128xf32>
    %316 = math.exp %315 : vector<8x128xf32>
    %cst_78 = arith.constant 1.000000e+00 : f32
    %317 = vector.broadcast %cst_78 : f32 to vector<8x128xf32>
    %318 = arith.addf %317, %316 : vector<8x128xf32>
    %319 = arith.divf %317, %318 : vector<8x128xf32>
    %320 = vector.extract_strided_slice %300 {offsets = [0, 256], sizes = [8, 128], strides = [1, 1]} : vector<8x384xf32> to vector<8x128xf32>
    %321 = vector.extract_strided_slice %303 {offsets = [0, 256], sizes = [8, 128], strides = [1, 1]} : vector<8x384xf32> to vector<8x128xf32>
    %322 = arith.addf %321, %7 : vector<8x128xf32>
    %323 = arith.mulf %311, %322 : vector<8x128xf32>
    %324 = arith.addf %320, %323 : vector<8x128xf32>
    %325 = math.tanh %324 : vector<8x128xf32>
    %cst_79 = arith.constant 1.000000e+00 : f32
    %326 = vector.broadcast %cst_79 : f32 to vector<8x128xf32>
    %327 = arith.subf %326, %319 : vector<8x128xf32>
    %328 = arith.mulf %327, %325 : vector<8x128xf32>
    %329 = arith.mulf %319, %296 : vector<8x128xf32>
    %330 = arith.addf %328, %329 : vector<8x128xf32>
    %331 = arith.addi %4, %c6_i32 : i32
    %332 = vector.broadcast %331 : i32 to vector<8x1xi32>
    %333 = arith.cmpi slt, %332, %3 : vector<8x1xi32>
    %cst_80 = arith.constant 0.000000e+00 : f32
    %334 = vector.shape_cast %333 : vector<8x1xi1> to vector<8x1xi1>
    %335 = vector.broadcast %334 : vector<8x1xi1> to vector<8x128xi1>
    %336 = vector.broadcast %cst_80 : f32 to vector<8x128xf32>
    %337 = arith.select %335, %330, %336 : vector<8x128xi1>, vector<8x128xf32>
    %338 = arith.index_cast %c6_i32 : i32 to index
    %c0_81 = arith.constant 0 : index
    %c0_82 = arith.constant 0 : index
    %339 = vector.load %arg6[%338, %c0_81, %c0_82] : memref<16x8x128xf32, #tpu.memory_space<vmem>>, vector<1x8x128xf32>
    %340 = vector.shape_cast %339 : vector<1x8x128xf32> to vector<8x128xf32>
    %341 = vector.shape_cast %337 : vector<8x128xf32> to vector<1x8x128xf32>
    tpu.vector_store %arg6[%338, %c0_81, %c0_82], %341 {strides = array<i32>} : memref<16x8x128xf32, #tpu.memory_space<vmem>>, vector<1x8x128xf32>,
    %342 = vector.shape_cast %333 : vector<8x1xi1> to vector<8x1xi1>
    %343 = vector.broadcast %342 : vector<8x1xi1> to vector<8x128xi1>
    %344 = arith.select %343, %330, %296 : vector<8x128xi1>, vector<8x128xf32>
    %c7_i32 = arith.constant 7 : i32
    %345 = arith.index_cast %c7_i32 : i32 to index
    %c0_83 = arith.constant 0 : index
    %c0_84 = arith.constant 0 : index
    %346 = vector.load %arg2[%345, %c0_83, %c0_84] : memref<16x8x384xbf16, #tpu.memory_space<vmem>>, vector<1x8x384xbf16>
    %347 = vector.shape_cast %346 : vector<1x8x384xbf16> to vector<8x384xbf16>
    %348 = arith.extf %347 : vector<8x384xbf16> to vector<8x384xf32>
    %349 = arith.truncf %344 : vector<8x128xf32> to vector<8x128xbf16>
    %c0_85 = arith.constant 0 : index
    %c0_86 = arith.constant 0 : index
    %350 = vector.load %arg4[%c0_85, %c0_86] : memref<128x384xbf16, #tpu.memory_space<vmem>>, vector<128x384xbf16>
    %cst_87 = arith.constant dense<0.000000e+00> : vector<8x384xf32>
    %351 = tpu.matmul %349, %350, %cst_87 {dimension_numbers = #tpu.dot_dimension_numbers<[1], [0], [0], [1], [0, 0, 1, 1], [], []>} : vector<8x128xbf16>, vector<128x384xbf16>, vector<8x384xf32> -> vector<8x384xf32>
    %352 = vector.extract_strided_slice %348 {offsets = [0, 0], sizes = [8, 128], strides = [1, 1]} : vector<8x384xf32> to vector<8x128xf32>
    %353 = vector.extract_strided_slice %351 {offsets = [0, 0], sizes = [8, 128], strides = [1, 1]} : vector<8x384xf32> to vector<8x128xf32>
    %354 = arith.addf %352, %353 : vector<8x128xf32>
    %355 = arith.negf %354 : vector<8x128xf32>
    %356 = math.exp %355 : vector<8x128xf32>
    %cst_88 = arith.constant 1.000000e+00 : f32
    %357 = vector.broadcast %cst_88 : f32 to vector<8x128xf32>
    %358 = arith.addf %357, %356 : vector<8x128xf32>
    %359 = arith.divf %357, %358 : vector<8x128xf32>
    %360 = vector.extract_strided_slice %348 {offsets = [0, 128], sizes = [8, 128], strides = [1, 1]} : vector<8x384xf32> to vector<8x128xf32>
    %361 = vector.extract_strided_slice %351 {offsets = [0, 128], sizes = [8, 128], strides = [1, 1]} : vector<8x384xf32> to vector<8x128xf32>
    %362 = arith.addf %360, %361 : vector<8x128xf32>
    %363 = arith.negf %362 : vector<8x128xf32>
    %364 = math.exp %363 : vector<8x128xf32>
    %cst_89 = arith.constant 1.000000e+00 : f32
    %365 = vector.broadcast %cst_89 : f32 to vector<8x128xf32>
    %366 = arith.addf %365, %364 : vector<8x128xf32>
    %367 = arith.divf %365, %366 : vector<8x128xf32>
    %368 = vector.extract_strided_slice %348 {offsets = [0, 256], sizes = [8, 128], strides = [1, 1]} : vector<8x384xf32> to vector<8x128xf32>
    %369 = vector.extract_strided_slice %351 {offsets = [0, 256], sizes = [8, 128], strides = [1, 1]} : vector<8x384xf32> to vector<8x128xf32>
    %370 = arith.addf %369, %7 : vector<8x128xf32>
    %371 = arith.mulf %359, %370 : vector<8x128xf32>
    %372 = arith.addf %368, %371 : vector<8x128xf32>
    %373 = math.tanh %372 : vector<8x128xf32>
    %cst_90 = arith.constant 1.000000e+00 : f32
    %374 = vector.broadcast %cst_90 : f32 to vector<8x128xf32>
    %375 = arith.subf %374, %367 : vector<8x128xf32>
    %376 = arith.mulf %375, %373 : vector<8x128xf32>
    %377 = arith.mulf %367, %344 : vector<8x128xf32>
    %378 = arith.addf %376, %377 : vector<8x128xf32>
    %379 = arith.addi %4, %c7_i32 : i32
    %380 = vector.broadcast %379 : i32 to vector<8x1xi32>
    %381 = arith.cmpi slt, %380, %3 : vector<8x1xi32>
    %cst_91 = arith.constant 0.000000e+00 : f32
    %382 = vector.shape_cast %381 : vector<8x1xi1> to vector<8x1xi1>
    %383 = vector.broadcast %382 : vector<8x1xi1> to vector<8x128xi1>
    %384 = vector.broadcast %cst_91 : f32 to vector<8x128xf32>
    %385 = arith.select %383, %378, %384 : vector<8x128xi1>, vector<8x128xf32>
    %386 = arith.index_cast %c7_i32 : i32 to index
    %c0_92 = arith.constant 0 : index
    %c0_93 = arith.constant 0 : index
    %387 = vector.load %arg6[%386, %c0_92, %c0_93] : memref<16x8x128xf32, #tpu.memory_space<vmem>>, vector<1x8x128xf32>
    %388 = vector.shape_cast %387 : vector<1x8x128xf32> to vector<8x128xf32>
    %389 = vector.shape_cast %385 : vector<8x128xf32> to vector<1x8x128xf32>
    tpu.vector_store %arg6[%386, %c0_92, %c0_93], %389 {strides = array<i32>} : memref<16x8x128xf32, #tpu.memory_space<vmem>>, vector<1x8x128xf32>,
    %390 = vector.shape_cast %381 : vector<8x1xi1> to vector<8x1xi1>
    %391 = vector.broadcast %390 : vector<8x1xi1> to vector<8x128xi1>
    %392 = arith.select %391, %378, %344 : vector<8x128xi1>, vector<8x128xf32>
    %c8_i32 = arith.constant 8 : i32
    %393 = arith.index_cast %c8_i32 : i32 to index
    %c0_94 = arith.constant 0 : index
    %c0_95 = arith.constant 0 : index
    %394 = vector.load %arg2[%393, %c0_94, %c0_95] : memref<16x8x384xbf16, #tpu.memory_space<vmem>>, vector<1x8x384xbf16>
    %395 = vector.shape_cast %394 : vector<1x8x384xbf16> to vector<8x384xbf16>
    %396 = arith.extf %395 : vector<8x384xbf16> to vector<8x384xf32>
    %397 = arith.truncf %392 : vector<8x128xf32> to vector<8x128xbf16>
    %c0_96 = arith.constant 0 : index
    %c0_97 = arith.constant 0 : index
    %398 = vector.load %arg4[%c0_96, %c0_97] : memref<128x384xbf16, #tpu.memory_space<vmem>>, vector<128x384xbf16>
    %cst_98 = arith.constant dense<0.000000e+00> : vector<8x384xf32>
    %399 = tpu.matmul %397, %398, %cst_98 {dimension_numbers = #tpu.dot_dimension_numbers<[1], [0], [0], [1], [0, 0, 1, 1], [], []>} : vector<8x128xbf16>, vector<128x384xbf16>, vector<8x384xf32> -> vector<8x384xf32>
    %400 = vector.extract_strided_slice %396 {offsets = [0, 0], sizes = [8, 128], strides = [1, 1]} : vector<8x384xf32> to vector<8x128xf32>
    %401 = vector.extract_strided_slice %399 {offsets = [0, 0], sizes = [8, 128], strides = [1, 1]} : vector<8x384xf32> to vector<8x128xf32>
    %402 = arith.addf %400, %401 : vector<8x128xf32>
    %403 = arith.negf %402 : vector<8x128xf32>
    %404 = math.exp %403 : vector<8x128xf32>
    %cst_99 = arith.constant 1.000000e+00 : f32
    %405 = vector.broadcast %cst_99 : f32 to vector<8x128xf32>
    %406 = arith.addf %405, %404 : vector<8x128xf32>
    %407 = arith.divf %405, %406 : vector<8x128xf32>
    %408 = vector.extract_strided_slice %396 {offsets = [0, 128], sizes = [8, 128], strides = [1, 1]} : vector<8x384xf32> to vector<8x128xf32>
    %409 = vector.extract_strided_slice %399 {offsets = [0, 128], sizes = [8, 128], strides = [1, 1]} : vector<8x384xf32> to vector<8x128xf32>
    %410 = arith.addf %408, %409 : vector<8x128xf32>
    %411 = arith.negf %410 : vector<8x128xf32>
    %412 = math.exp %411 : vector<8x128xf32>
    %cst_100 = arith.constant 1.000000e+00 : f32
    %413 = vector.broadcast %cst_100 : f32 to vector<8x128xf32>
    %414 = arith.addf %413, %412 : vector<8x128xf32>
    %415 = arith.divf %413, %414 : vector<8x128xf32>
    %416 = vector.extract_strided_slice %396 {offsets = [0, 256], sizes = [8, 128], strides = [1, 1]} : vector<8x384xf32> to vector<8x128xf32>
    %417 = vector.extract_strided_slice %399 {offsets = [0, 256], sizes = [8, 128], strides = [1, 1]} : vector<8x384xf32> to vector<8x128xf32>
    %418 = arith.addf %417, %7 : vector<8x128xf32>
    %419 = arith.mulf %407, %418 : vector<8x128xf32>
    %420 = arith.addf %416, %419 : vector<8x128xf32>
    %421 = math.tanh %420 : vector<8x128xf32>
    %cst_101 = arith.constant 1.000000e+00 : f32
    %422 = vector.broadcast %cst_101 : f32 to vector<8x128xf32>
    %423 = arith.subf %422, %415 : vector<8x128xf32>
    %424 = arith.mulf %423, %421 : vector<8x128xf32>
    %425 = arith.mulf %415, %392 : vector<8x128xf32>
    %426 = arith.addf %424, %425 : vector<8x128xf32>
    %427 = arith.addi %4, %c8_i32 : i32
    %428 = vector.broadcast %427 : i32 to vector<8x1xi32>
    %429 = arith.cmpi slt, %428, %3 : vector<8x1xi32>
    %cst_102 = arith.constant 0.000000e+00 : f32
    %430 = vector.shape_cast %429 : vector<8x1xi1> to vector<8x1xi1>
    %431 = vector.broadcast %430 : vector<8x1xi1> to vector<8x128xi1>
    %432 = vector.broadcast %cst_102 : f32 to vector<8x128xf32>
    %433 = arith.select %431, %426, %432 : vector<8x128xi1>, vector<8x128xf32>
    %434 = arith.index_cast %c8_i32 : i32 to index
    %c0_103 = arith.constant 0 : index
    %c0_104 = arith.constant 0 : index
    %435 = vector.load %arg6[%434, %c0_103, %c0_104] : memref<16x8x128xf32, #tpu.memory_space<vmem>>, vector<1x8x128xf32>
    %436 = vector.shape_cast %435 : vector<1x8x128xf32> to vector<8x128xf32>
    %437 = vector.shape_cast %433 : vector<8x128xf32> to vector<1x8x128xf32>
    tpu.vector_store %arg6[%434, %c0_103, %c0_104], %437 {strides = array<i32>} : memref<16x8x128xf32, #tpu.memory_space<vmem>>, vector<1x8x128xf32>,
    %438 = vector.shape_cast %429 : vector<8x1xi1> to vector<8x1xi1>
    %439 = vector.broadcast %438 : vector<8x1xi1> to vector<8x128xi1>
    %440 = arith.select %439, %426, %392 : vector<8x128xi1>, vector<8x128xf32>
    %c9_i32 = arith.constant 9 : i32
    %441 = arith.index_cast %c9_i32 : i32 to index
    %c0_105 = arith.constant 0 : index
    %c0_106 = arith.constant 0 : index
    %442 = vector.load %arg2[%441, %c0_105, %c0_106] : memref<16x8x384xbf16, #tpu.memory_space<vmem>>, vector<1x8x384xbf16>
    %443 = vector.shape_cast %442 : vector<1x8x384xbf16> to vector<8x384xbf16>
    %444 = arith.extf %443 : vector<8x384xbf16> to vector<8x384xf32>
    %445 = arith.truncf %440 : vector<8x128xf32> to vector<8x128xbf16>
    %c0_107 = arith.constant 0 : index
    %c0_108 = arith.constant 0 : index
    %446 = vector.load %arg4[%c0_107, %c0_108] : memref<128x384xbf16, #tpu.memory_space<vmem>>, vector<128x384xbf16>
    %cst_109 = arith.constant dense<0.000000e+00> : vector<8x384xf32>
    %447 = tpu.matmul %445, %446, %cst_109 {dimension_numbers = #tpu.dot_dimension_numbers<[1], [0], [0], [1], [0, 0, 1, 1], [], []>} : vector<8x128xbf16>, vector<128x384xbf16>, vector<8x384xf32> -> vector<8x384xf32>
    %448 = vector.extract_strided_slice %444 {offsets = [0, 0], sizes = [8, 128], strides = [1, 1]} : vector<8x384xf32> to vector<8x128xf32>
    %449 = vector.extract_strided_slice %447 {offsets = [0, 0], sizes = [8, 128], strides = [1, 1]} : vector<8x384xf32> to vector<8x128xf32>
    %450 = arith.addf %448, %449 : vector<8x128xf32>
    %451 = arith.negf %450 : vector<8x128xf32>
    %452 = math.exp %451 : vector<8x128xf32>
    %cst_110 = arith.constant 1.000000e+00 : f32
    %453 = vector.broadcast %cst_110 : f32 to vector<8x128xf32>
    %454 = arith.addf %453, %452 : vector<8x128xf32>
    %455 = arith.divf %453, %454 : vector<8x128xf32>
    %456 = vector.extract_strided_slice %444 {offsets = [0, 128], sizes = [8, 128], strides = [1, 1]} : vector<8x384xf32> to vector<8x128xf32>
    %457 = vector.extract_strided_slice %447 {offsets = [0, 128], sizes = [8, 128], strides = [1, 1]} : vector<8x384xf32> to vector<8x128xf32>
    %458 = arith.addf %456, %457 : vector<8x128xf32>
    %459 = arith.negf %458 : vector<8x128xf32>
    %460 = math.exp %459 : vector<8x128xf32>
    %cst_111 = arith.constant 1.000000e+00 : f32
    %461 = vector.broadcast %cst_111 : f32 to vector<8x128xf32>
    %462 = arith.addf %461, %460 : vector<8x128xf32>
    %463 = arith.divf %461, %462 : vector<8x128xf32>
    %464 = vector.extract_strided_slice %444 {offsets = [0, 256], sizes = [8, 128], strides = [1, 1]} : vector<8x384xf32> to vector<8x128xf32>
    %465 = vector.extract_strided_slice %447 {offsets = [0, 256], sizes = [8, 128], strides = [1, 1]} : vector<8x384xf32> to vector<8x128xf32>
    %466 = arith.addf %465, %7 : vector<8x128xf32>
    %467 = arith.mulf %455, %466 : vector<8x128xf32>
    %468 = arith.addf %464, %467 : vector<8x128xf32>
    %469 = math.tanh %468 : vector<8x128xf32>
    %cst_112 = arith.constant 1.000000e+00 : f32
    %470 = vector.broadcast %cst_112 : f32 to vector<8x128xf32>
    %471 = arith.subf %470, %463 : vector<8x128xf32>
    %472 = arith.mulf %471, %469 : vector<8x128xf32>
    %473 = arith.mulf %463, %440 : vector<8x128xf32>
    %474 = arith.addf %472, %473 : vector<8x128xf32>
    %475 = arith.addi %4, %c9_i32 : i32
    %476 = vector.broadcast %475 : i32 to vector<8x1xi32>
    %477 = arith.cmpi slt, %476, %3 : vector<8x1xi32>
    %cst_113 = arith.constant 0.000000e+00 : f32
    %478 = vector.shape_cast %477 : vector<8x1xi1> to vector<8x1xi1>
    %479 = vector.broadcast %478 : vector<8x1xi1> to vector<8x128xi1>
    %480 = vector.broadcast %cst_113 : f32 to vector<8x128xf32>
    %481 = arith.select %479, %474, %480 : vector<8x128xi1>, vector<8x128xf32>
    %482 = arith.index_cast %c9_i32 : i32 to index
    %c0_114 = arith.constant 0 : index
    %c0_115 = arith.constant 0 : index
    %483 = vector.load %arg6[%482, %c0_114, %c0_115] : memref<16x8x128xf32, #tpu.memory_space<vmem>>, vector<1x8x128xf32>
    %484 = vector.shape_cast %483 : vector<1x8x128xf32> to vector<8x128xf32>
    %485 = vector.shape_cast %481 : vector<8x128xf32> to vector<1x8x128xf32>
    tpu.vector_store %arg6[%482, %c0_114, %c0_115], %485 {strides = array<i32>} : memref<16x8x128xf32, #tpu.memory_space<vmem>>, vector<1x8x128xf32>,
    %486 = vector.shape_cast %477 : vector<8x1xi1> to vector<8x1xi1>
    %487 = vector.broadcast %486 : vector<8x1xi1> to vector<8x128xi1>
    %488 = arith.select %487, %474, %440 : vector<8x128xi1>, vector<8x128xf32>
    %c10_i32 = arith.constant 10 : i32
    %489 = arith.index_cast %c10_i32 : i32 to index
    %c0_116 = arith.constant 0 : index
    %c0_117 = arith.constant 0 : index
    %490 = vector.load %arg2[%489, %c0_116, %c0_117] : memref<16x8x384xbf16, #tpu.memory_space<vmem>>, vector<1x8x384xbf16>
    %491 = vector.shape_cast %490 : vector<1x8x384xbf16> to vector<8x384xbf16>
    %492 = arith.extf %491 : vector<8x384xbf16> to vector<8x384xf32>
    %493 = arith.truncf %488 : vector<8x128xf32> to vector<8x128xbf16>
    %c0_118 = arith.constant 0 : index
    %c0_119 = arith.constant 0 : index
    %494 = vector.load %arg4[%c0_118, %c0_119] : memref<128x384xbf16, #tpu.memory_space<vmem>>, vector<128x384xbf16>
    %cst_120 = arith.constant dense<0.000000e+00> : vector<8x384xf32>
    %495 = tpu.matmul %493, %494, %cst_120 {dimension_numbers = #tpu.dot_dimension_numbers<[1], [0], [0], [1], [0, 0, 1, 1], [], []>} : vector<8x128xbf16>, vector<128x384xbf16>, vector<8x384xf32> -> vector<8x384xf32>
    %496 = vector.extract_strided_slice %492 {offsets = [0, 0], sizes = [8, 128], strides = [1, 1]} : vector<8x384xf32> to vector<8x128xf32>
    %497 = vector.extract_strided_slice %495 {offsets = [0, 0], sizes = [8, 128], strides = [1, 1]} : vector<8x384xf32> to vector<8x128xf32>
    %498 = arith.addf %496, %497 : vector<8x128xf32>
    %499 = arith.negf %498 : vector<8x128xf32>
    %500 = math.exp %499 : vector<8x128xf32>
    %cst_121 = arith.constant 1.000000e+00 : f32
    %501 = vector.broadcast %cst_121 : f32 to vector<8x128xf32>
    %502 = arith.addf %501, %500 : vector<8x128xf32>
    %503 = arith.divf %501, %502 : vector<8x128xf32>
    %504 = vector.extract_strided_slice %492 {offsets = [0, 128], sizes = [8, 128], strides = [1, 1]} : vector<8x384xf32> to vector<8x128xf32>
    %505 = vector.extract_strided_slice %495 {offsets = [0, 128], sizes = [8, 128], strides = [1, 1]} : vector<8x384xf32> to vector<8x128xf32>
    %506 = arith.addf %504, %505 : vector<8x128xf32>
    %507 = arith.negf %506 : vector<8x128xf32>
    %508 = math.exp %507 : vector<8x128xf32>
    %cst_122 = arith.constant 1.000000e+00 : f32
    %509 = vector.broadcast %cst_122 : f32 to vector<8x128xf32>
    %510 = arith.addf %509, %508 : vector<8x128xf32>
    %511 = arith.divf %509, %510 : vector<8x128xf32>
    %512 = vector.extract_strided_slice %492 {offsets = [0, 256], sizes = [8, 128], strides = [1, 1]} : vector<8x384xf32> to vector<8x128xf32>
    %513 = vector.extract_strided_slice %495 {offsets = [0, 256], sizes = [8, 128], strides = [1, 1]} : vector<8x384xf32> to vector<8x128xf32>
    %514 = arith.addf %513, %7 : vector<8x128xf32>
    %515 = arith.mulf %503, %514 : vector<8x128xf32>
    %516 = arith.addf %512, %515 : vector<8x128xf32>
    %517 = math.tanh %516 : vector<8x128xf32>
    %cst_123 = arith.constant 1.000000e+00 : f32
    %518 = vector.broadcast %cst_123 : f32 to vector<8x128xf32>
    %519 = arith.subf %518, %511 : vector<8x128xf32>
    %520 = arith.mulf %519, %517 : vector<8x128xf32>
    %521 = arith.mulf %511, %488 : vector<8x128xf32>
    %522 = arith.addf %520, %521 : vector<8x128xf32>
    %523 = arith.addi %4, %c10_i32 : i32
    %524 = vector.broadcast %523 : i32 to vector<8x1xi32>
    %525 = arith.cmpi slt, %524, %3 : vector<8x1xi32>
    %cst_124 = arith.constant 0.000000e+00 : f32
    %526 = vector.shape_cast %525 : vector<8x1xi1> to vector<8x1xi1>
    %527 = vector.broadcast %526 : vector<8x1xi1> to vector<8x128xi1>
    %528 = vector.broadcast %cst_124 : f32 to vector<8x128xf32>
    %529 = arith.select %527, %522, %528 : vector<8x128xi1>, vector<8x128xf32>
    %530 = arith.index_cast %c10_i32 : i32 to index
    %c0_125 = arith.constant 0 : index
    %c0_126 = arith.constant 0 : index
    %531 = vector.load %arg6[%530, %c0_125, %c0_126] : memref<16x8x128xf32, #tpu.memory_space<vmem>>, vector<1x8x128xf32>
    %532 = vector.shape_cast %531 : vector<1x8x128xf32> to vector<8x128xf32>
    %533 = vector.shape_cast %529 : vector<8x128xf32> to vector<1x8x128xf32>
    tpu.vector_store %arg6[%530, %c0_125, %c0_126], %533 {strides = array<i32>} : memref<16x8x128xf32, #tpu.memory_space<vmem>>, vector<1x8x128xf32>,
    %534 = vector.shape_cast %525 : vector<8x1xi1> to vector<8x1xi1>
    %535 = vector.broadcast %534 : vector<8x1xi1> to vector<8x128xi1>
    %536 = arith.select %535, %522, %488 : vector<8x128xi1>, vector<8x128xf32>
    %c11_i32 = arith.constant 11 : i32
    %537 = arith.index_cast %c11_i32 : i32 to index
    %c0_127 = arith.constant 0 : index
    %c0_128 = arith.constant 0 : index
    %538 = vector.load %arg2[%537, %c0_127, %c0_128] : memref<16x8x384xbf16, #tpu.memory_space<vmem>>, vector<1x8x384xbf16>
    %539 = vector.shape_cast %538 : vector<1x8x384xbf16> to vector<8x384xbf16>
    %540 = arith.extf %539 : vector<8x384xbf16> to vector<8x384xf32>
    %541 = arith.truncf %536 : vector<8x128xf32> to vector<8x128xbf16>
    %c0_129 = arith.constant 0 : index
    %c0_130 = arith.constant 0 : index
    %542 = vector.load %arg4[%c0_129, %c0_130] : memref<128x384xbf16, #tpu.memory_space<vmem>>, vector<128x384xbf16>
    %cst_131 = arith.constant dense<0.000000e+00> : vector<8x384xf32>
    %543 = tpu.matmul %541, %542, %cst_131 {dimension_numbers = #tpu.dot_dimension_numbers<[1], [0], [0], [1], [0, 0, 1, 1], [], []>} : vector<8x128xbf16>, vector<128x384xbf16>, vector<8x384xf32> -> vector<8x384xf32>
    %544 = vector.extract_strided_slice %540 {offsets = [0, 0], sizes = [8, 128], strides = [1, 1]} : vector<8x384xf32> to vector<8x128xf32>
    %545 = vector.extract_strided_slice %543 {offsets = [0, 0], sizes = [8, 128], strides = [1, 1]} : vector<8x384xf32> to vector<8x128xf32>
    %546 = arith.addf %544, %545 : vector<8x128xf32>
    %547 = arith.negf %546 : vector<8x128xf32>
    %548 = math.exp %547 : vector<8x128xf32>
    %cst_132 = arith.constant 1.000000e+00 : f32
    %549 = vector.broadcast %cst_132 : f32 to vector<8x128xf32>
    %550 = arith.addf %549, %548 : vector<8x128xf32>
    %551 = arith.divf %549, %550 : vector<8x128xf32>
    %552 = vector.extract_strided_slice %540 {offsets = [0, 128], sizes = [8, 128], strides = [1, 1]} : vector<8x384xf32> to vector<8x128xf32>
    %553 = vector.extract_strided_slice %543 {offsets = [0, 128], sizes = [8, 128], strides = [1, 1]} : vector<8x384xf32> to vector<8x128xf32>
    %554 = arith.addf %552, %553 : vector<8x128xf32>
    %555 = arith.negf %554 : vector<8x128xf32>
    %556 = math.exp %555 : vector<8x128xf32>
    %cst_133 = arith.constant 1.000000e+00 : f32
    %557 = vector.broadcast %cst_133 : f32 to vector<8x128xf32>
    %558 = arith.addf %557, %556 : vector<8x128xf32>
    %559 = arith.divf %557, %558 : vector<8x128xf32>
    %560 = vector.extract_strided_slice %540 {offsets = [0, 256], sizes = [8, 128], strides = [1, 1]} : vector<8x384xf32> to vector<8x128xf32>
    %561 = vector.extract_strided_slice %543 {offsets = [0, 256], sizes = [8, 128], strides = [1, 1]} : vector<8x384xf32> to vector<8x128xf32>
    %562 = arith.addf %561, %7 : vector<8x128xf32>
    %563 = arith.mulf %551, %562 : vector<8x128xf32>
    %564 = arith.addf %560, %563 : vector<8x128xf32>
    %565 = math.tanh %564 : vector<8x128xf32>
    %cst_134 = arith.constant 1.000000e+00 : f32
    %566 = vector.broadcast %cst_134 : f32 to vector<8x128xf32>
    %567 = arith.subf %566, %559 : vector<8x128xf32>
    %568 = arith.mulf %567, %565 : vector<8x128xf32>
    %569 = arith.mulf %559, %536 : vector<8x128xf32>
    %570 = arith.addf %568, %569 : vector<8x128xf32>
    %571 = arith.addi %4, %c11_i32 : i32
    %572 = vector.broadcast %571 : i32 to vector<8x1xi32>
    %573 = arith.cmpi slt, %572, %3 : vector<8x1xi32>
    %cst_135 = arith.constant 0.000000e+00 : f32
    %574 = vector.shape_cast %573 : vector<8x1xi1> to vector<8x1xi1>
    %575 = vector.broadcast %574 : vector<8x1xi1> to vector<8x128xi1>
    %576 = vector.broadcast %cst_135 : f32 to vector<8x128xf32>
    %577 = arith.select %575, %570, %576 : vector<8x128xi1>, vector<8x128xf32>
    %578 = arith.index_cast %c11_i32 : i32 to index
    %c0_136 = arith.constant 0 : index
    %c0_137 = arith.constant 0 : index
    %579 = vector.load %arg6[%578, %c0_136, %c0_137] : memref<16x8x128xf32, #tpu.memory_space<vmem>>, vector<1x8x128xf32>
    %580 = vector.shape_cast %579 : vector<1x8x128xf32> to vector<8x128xf32>
    %581 = vector.shape_cast %577 : vector<8x128xf32> to vector<1x8x128xf32>
    tpu.vector_store %arg6[%578, %c0_136, %c0_137], %581 {strides = array<i32>} : memref<16x8x128xf32, #tpu.memory_space<vmem>>, vector<1x8x128xf32>,
    %582 = vector.shape_cast %573 : vector<8x1xi1> to vector<8x1xi1>
    %583 = vector.broadcast %582 : vector<8x1xi1> to vector<8x128xi1>
    %584 = arith.select %583, %570, %536 : vector<8x128xi1>, vector<8x128xf32>
    %c12_i32 = arith.constant 12 : i32
    %585 = arith.index_cast %c12_i32 : i32 to index
    %c0_138 = arith.constant 0 : index
    %c0_139 = arith.constant 0 : index
    %586 = vector.load %arg2[%585, %c0_138, %c0_139] : memref<16x8x384xbf16, #tpu.memory_space<vmem>>, vector<1x8x384xbf16>
    %587 = vector.shape_cast %586 : vector<1x8x384xbf16> to vector<8x384xbf16>
    %588 = arith.extf %587 : vector<8x384xbf16> to vector<8x384xf32>
    %589 = arith.truncf %584 : vector<8x128xf32> to vector<8x128xbf16>
    %c0_140 = arith.constant 0 : index
    %c0_141 = arith.constant 0 : index
    %590 = vector.load %arg4[%c0_140, %c0_141] : memref<128x384xbf16, #tpu.memory_space<vmem>>, vector<128x384xbf16>
    %cst_142 = arith.constant dense<0.000000e+00> : vector<8x384xf32>
    %591 = tpu.matmul %589, %590, %cst_142 {dimension_numbers = #tpu.dot_dimension_numbers<[1], [0], [0], [1], [0, 0, 1, 1], [], []>} : vector<8x128xbf16>, vector<128x384xbf16>, vector<8x384xf32> -> vector<8x384xf32>
    %592 = vector.extract_strided_slice %588 {offsets = [0, 0], sizes = [8, 128], strides = [1, 1]} : vector<8x384xf32> to vector<8x128xf32>
    %593 = vector.extract_strided_slice %591 {offsets = [0, 0], sizes = [8, 128], strides = [1, 1]} : vector<8x384xf32> to vector<8x128xf32>
    %594 = arith.addf %592, %593 : vector<8x128xf32>
    %595 = arith.negf %594 : vector<8x128xf32>
    %596 = math.exp %595 : vector<8x128xf32>
    %cst_143 = arith.constant 1.000000e+00 : f32
    %597 = vector.broadcast %cst_143 : f32 to vector<8x128xf32>
    %598 = arith.addf %597, %596 : vector<8x128xf32>
    %599 = arith.divf %597, %598 : vector<8x128xf32>
    %600 = vector.extract_strided_slice %588 {offsets = [0, 128], sizes = [8, 128], strides = [1, 1]} : vector<8x384xf32> to vector<8x128xf32>
    %601 = vector.extract_strided_slice %591 {offsets = [0, 128], sizes = [8, 128], strides = [1, 1]} : vector<8x384xf32> to vector<8x128xf32>
    %602 = arith.addf %600, %601 : vector<8x128xf32>
    %603 = arith.negf %602 : vector<8x128xf32>
    %604 = math.exp %603 : vector<8x128xf32>
    %cst_144 = arith.constant 1.000000e+00 : f32
    %605 = vector.broadcast %cst_144 : f32 to vector<8x128xf32>
    %606 = arith.addf %605, %604 : vector<8x128xf32>
    %607 = arith.divf %605, %606 : vector<8x128xf32>
    %608 = vector.extract_strided_slice %588 {offsets = [0, 256], sizes = [8, 128], strides = [1, 1]} : vector<8x384xf32> to vector<8x128xf32>
    %609 = vector.extract_strided_slice %591 {offsets = [0, 256], sizes = [8, 128], strides = [1, 1]} : vector<8x384xf32> to vector<8x128xf32>
    %610 = arith.addf %609, %7 : vector<8x128xf32>
    %611 = arith.mulf %599, %610 : vector<8x128xf32>
    %612 = arith.addf %608, %611 : vector<8x128xf32>
    %613 = math.tanh %612 : vector<8x128xf32>
    %cst_145 = arith.constant 1.000000e+00 : f32
    %614 = vector.broadcast %cst_145 : f32 to vector<8x128xf32>
    %615 = arith.subf %614, %607 : vector<8x128xf32>
    %616 = arith.mulf %615, %613 : vector<8x128xf32>
    %617 = arith.mulf %607, %584 : vector<8x128xf32>
    %618 = arith.addf %616, %617 : vector<8x128xf32>
    %619 = arith.addi %4, %c12_i32 : i32
    %620 = vector.broadcast %619 : i32 to vector<8x1xi32>
    %621 = arith.cmpi slt, %620, %3 : vector<8x1xi32>
    %cst_146 = arith.constant 0.000000e+00 : f32
    %622 = vector.shape_cast %621 : vector<8x1xi1> to vector<8x1xi1>
    %623 = vector.broadcast %622 : vector<8x1xi1> to vector<8x128xi1>
    %624 = vector.broadcast %cst_146 : f32 to vector<8x128xf32>
    %625 = arith.select %623, %618, %624 : vector<8x128xi1>, vector<8x128xf32>
    %626 = arith.index_cast %c12_i32 : i32 to index
    %c0_147 = arith.constant 0 : index
    %c0_148 = arith.constant 0 : index
    %627 = vector.load %arg6[%626, %c0_147, %c0_148] : memref<16x8x128xf32, #tpu.memory_space<vmem>>, vector<1x8x128xf32>
    %628 = vector.shape_cast %627 : vector<1x8x128xf32> to vector<8x128xf32>
    %629 = vector.shape_cast %625 : vector<8x128xf32> to vector<1x8x128xf32>
    tpu.vector_store %arg6[%626, %c0_147, %c0_148], %629 {strides = array<i32>} : memref<16x8x128xf32, #tpu.memory_space<vmem>>, vector<1x8x128xf32>,
    %630 = vector.shape_cast %621 : vector<8x1xi1> to vector<8x1xi1>
    %631 = vector.broadcast %630 : vector<8x1xi1> to vector<8x128xi1>
    %632 = arith.select %631, %618, %584 : vector<8x128xi1>, vector<8x128xf32>
    %c13_i32 = arith.constant 13 : i32
    %633 = arith.index_cast %c13_i32 : i32 to index
    %c0_149 = arith.constant 0 : index
    %c0_150 = arith.constant 0 : index
    %634 = vector.load %arg2[%633, %c0_149, %c0_150] : memref<16x8x384xbf16, #tpu.memory_space<vmem>>, vector<1x8x384xbf16>
    %635 = vector.shape_cast %634 : vector<1x8x384xbf16> to vector<8x384xbf16>
    %636 = arith.extf %635 : vector<8x384xbf16> to vector<8x384xf32>
    %637 = arith.truncf %632 : vector<8x128xf32> to vector<8x128xbf16>
    %c0_151 = arith.constant 0 : index
    %c0_152 = arith.constant 0 : index
    %638 = vector.load %arg4[%c0_151, %c0_152] : memref<128x384xbf16, #tpu.memory_space<vmem>>, vector<128x384xbf16>
    %cst_153 = arith.constant dense<0.000000e+00> : vector<8x384xf32>
    %639 = tpu.matmul %637, %638, %cst_153 {dimension_numbers = #tpu.dot_dimension_numbers<[1], [0], [0], [1], [0, 0, 1, 1], [], []>} : vector<8x128xbf16>, vector<128x384xbf16>, vector<8x384xf32> -> vector<8x384xf32>
    %640 = vector.extract_strided_slice %636 {offsets = [0, 0], sizes = [8, 128], strides = [1, 1]} : vector<8x384xf32> to vector<8x128xf32>
    %641 = vector.extract_strided_slice %639 {offsets = [0, 0], sizes = [8, 128], strides = [1, 1]} : vector<8x384xf32> to vector<8x128xf32>
    %642 = arith.addf %640, %641 : vector<8x128xf32>
    %643 = arith.negf %642 : vector<8x128xf32>
    %644 = math.exp %643 : vector<8x128xf32>
    %cst_154 = arith.constant 1.000000e+00 : f32
    %645 = vector.broadcast %cst_154 : f32 to vector<8x128xf32>
    %646 = arith.addf %645, %644 : vector<8x128xf32>
    %647 = arith.divf %645, %646 : vector<8x128xf32>
    %648 = vector.extract_strided_slice %636 {offsets = [0, 128], sizes = [8, 128], strides = [1, 1]} : vector<8x384xf32> to vector<8x128xf32>
    %649 = vector.extract_strided_slice %639 {offsets = [0, 128], sizes = [8, 128], strides = [1, 1]} : vector<8x384xf32> to vector<8x128xf32>
    %650 = arith.addf %648, %649 : vector<8x128xf32>
    %651 = arith.negf %650 : vector<8x128xf32>
    %652 = math.exp %651 : vector<8x128xf32>
    %cst_155 = arith.constant 1.000000e+00 : f32
    %653 = vector.broadcast %cst_155 : f32 to vector<8x128xf32>
    %654 = arith.addf %653, %652 : vector<8x128xf32>
    %655 = arith.divf %653, %654 : vector<8x128xf32>
    %656 = vector.extract_strided_slice %636 {offsets = [0, 256], sizes = [8, 128], strides = [1, 1]} : vector<8x384xf32> to vector<8x128xf32>
    %657 = vector.extract_strided_slice %639 {offsets = [0, 256], sizes = [8, 128], strides = [1, 1]} : vector<8x384xf32> to vector<8x128xf32>
    %658 = arith.addf %657, %7 : vector<8x128xf32>
    %659 = arith.mulf %647, %658 : vector<8x128xf32>
    %660 = arith.addf %656, %659 : vector<8x128xf32>
    %661 = math.tanh %660 : vector<8x128xf32>
    %cst_156 = arith.constant 1.000000e+00 : f32
    %662 = vector.broadcast %cst_156 : f32 to vector<8x128xf32>
    %663 = arith.subf %662, %655 : vector<8x128xf32>
    %664 = arith.mulf %663, %661 : vector<8x128xf32>
    %665 = arith.mulf %655, %632 : vector<8x128xf32>
    %666 = arith.addf %664, %665 : vector<8x128xf32>
    %667 = arith.addi %4, %c13_i32 : i32
    %668 = vector.broadcast %667 : i32 to vector<8x1xi32>
    %669 = arith.cmpi slt, %668, %3 : vector<8x1xi32>
    %cst_157 = arith.constant 0.000000e+00 : f32
    %670 = vector.shape_cast %669 : vector<8x1xi1> to vector<8x1xi1>
    %671 = vector.broadcast %670 : vector<8x1xi1> to vector<8x128xi1>
    %672 = vector.broadcast %cst_157 : f32 to vector<8x128xf32>
    %673 = arith.select %671, %666, %672 : vector<8x128xi1>, vector<8x128xf32>
    %674 = arith.index_cast %c13_i32 : i32 to index
    %c0_158 = arith.constant 0 : index
    %c0_159 = arith.constant 0 : index
    %675 = vector.load %arg6[%674, %c0_158, %c0_159] : memref<16x8x128xf32, #tpu.memory_space<vmem>>, vector<1x8x128xf32>
    %676 = vector.shape_cast %675 : vector<1x8x128xf32> to vector<8x128xf32>
    %677 = vector.shape_cast %673 : vector<8x128xf32> to vector<1x8x128xf32>
    tpu.vector_store %arg6[%674, %c0_158, %c0_159], %677 {strides = array<i32>} : memref<16x8x128xf32, #tpu.memory_space<vmem>>, vector<1x8x128xf32>,
    %678 = vector.shape_cast %669 : vector<8x1xi1> to vector<8x1xi1>
    %679 = vector.broadcast %678 : vector<8x1xi1> to vector<8x128xi1>
    %680 = arith.select %679, %666, %632 : vector<8x128xi1>, vector<8x128xf32>
    %c14_i32 = arith.constant 14 : i32
    %681 = arith.index_cast %c14_i32 : i32 to index
    %c0_160 = arith.constant 0 : index
    %c0_161 = arith.constant 0 : index
    %682 = vector.load %arg2[%681, %c0_160, %c0_161] : memref<16x8x384xbf16, #tpu.memory_space<vmem>>, vector<1x8x384xbf16>
    %683 = vector.shape_cast %682 : vector<1x8x384xbf16> to vector<8x384xbf16>
    %684 = arith.extf %683 : vector<8x384xbf16> to vector<8x384xf32>
    %685 = arith.truncf %680 : vector<8x128xf32> to vector<8x128xbf16>
    %c0_162 = arith.constant 0 : index
    %c0_163 = arith.constant 0 : index
    %686 = vector.load %arg4[%c0_162, %c0_163] : memref<128x384xbf16, #tpu.memory_space<vmem>>, vector<128x384xbf16>
    %cst_164 = arith.constant dense<0.000000e+00> : vector<8x384xf32>
    %687 = tpu.matmul %685, %686, %cst_164 {dimension_numbers = #tpu.dot_dimension_numbers<[1], [0], [0], [1], [0, 0, 1, 1], [], []>} : vector<8x128xbf16>, vector<128x384xbf16>, vector<8x384xf32> -> vector<8x384xf32>
    %688 = vector.extract_strided_slice %684 {offsets = [0, 0], sizes = [8, 128], strides = [1, 1]} : vector<8x384xf32> to vector<8x128xf32>
    %689 = vector.extract_strided_slice %687 {offsets = [0, 0], sizes = [8, 128], strides = [1, 1]} : vector<8x384xf32> to vector<8x128xf32>
    %690 = arith.addf %688, %689 : vector<8x128xf32>
    %691 = arith.negf %690 : vector<8x128xf32>
    %692 = math.exp %691 : vector<8x128xf32>
    %cst_165 = arith.constant 1.000000e+00 : f32
    %693 = vector.broadcast %cst_165 : f32 to vector<8x128xf32>
    %694 = arith.addf %693, %692 : vector<8x128xf32>
    %695 = arith.divf %693, %694 : vector<8x128xf32>
    %696 = vector.extract_strided_slice %684 {offsets = [0, 128], sizes = [8, 128], strides = [1, 1]} : vector<8x384xf32> to vector<8x128xf32>
    %697 = vector.extract_strided_slice %687 {offsets = [0, 128], sizes = [8, 128], strides = [1, 1]} : vector<8x384xf32> to vector<8x128xf32>
    %698 = arith.addf %696, %697 : vector<8x128xf32>
    %699 = arith.negf %698 : vector<8x128xf32>
    %700 = math.exp %699 : vector<8x128xf32>
    %cst_166 = arith.constant 1.000000e+00 : f32
    %701 = vector.broadcast %cst_166 : f32 to vector<8x128xf32>
    %702 = arith.addf %701, %700 : vector<8x128xf32>
    %703 = arith.divf %701, %702 : vector<8x128xf32>
    %704 = vector.extract_strided_slice %684 {offsets = [0, 256], sizes = [8, 128], strides = [1, 1]} : vector<8x384xf32> to vector<8x128xf32>
    %705 = vector.extract_strided_slice %687 {offsets = [0, 256], sizes = [8, 128], strides = [1, 1]} : vector<8x384xf32> to vector<8x128xf32>
    %706 = arith.addf %705, %7 : vector<8x128xf32>
    %707 = arith.mulf %695, %706 : vector<8x128xf32>
    %708 = arith.addf %704, %707 : vector<8x128xf32>
    %709 = math.tanh %708 : vector<8x128xf32>
    %cst_167 = arith.constant 1.000000e+00 : f32
    %710 = vector.broadcast %cst_167 : f32 to vector<8x128xf32>
    %711 = arith.subf %710, %703 : vector<8x128xf32>
    %712 = arith.mulf %711, %709 : vector<8x128xf32>
    %713 = arith.mulf %703, %680 : vector<8x128xf32>
    %714 = arith.addf %712, %713 : vector<8x128xf32>
    %715 = arith.addi %4, %c14_i32 : i32
    %716 = vector.broadcast %715 : i32 to vector<8x1xi32>
    %717 = arith.cmpi slt, %716, %3 : vector<8x1xi32>
    %cst_168 = arith.constant 0.000000e+00 : f32
    %718 = vector.shape_cast %717 : vector<8x1xi1> to vector<8x1xi1>
    %719 = vector.broadcast %718 : vector<8x1xi1> to vector<8x128xi1>
    %720 = vector.broadcast %cst_168 : f32 to vector<8x128xf32>
    %721 = arith.select %719, %714, %720 : vector<8x128xi1>, vector<8x128xf32>
    %722 = arith.index_cast %c14_i32 : i32 to index
    %c0_169 = arith.constant 0 : index
    %c0_170 = arith.constant 0 : index
    %723 = vector.load %arg6[%722, %c0_169, %c0_170] : memref<16x8x128xf32, #tpu.memory_space<vmem>>, vector<1x8x128xf32>
    %724 = vector.shape_cast %723 : vector<1x8x128xf32> to vector<8x128xf32>
    %725 = vector.shape_cast %721 : vector<8x128xf32> to vector<1x8x128xf32>
    tpu.vector_store %arg6[%722, %c0_169, %c0_170], %725 {strides = array<i32>} : memref<16x8x128xf32, #tpu.memory_space<vmem>>, vector<1x8x128xf32>,
    %726 = vector.shape_cast %717 : vector<8x1xi1> to vector<8x1xi1>
    %727 = vector.broadcast %726 : vector<8x1xi1> to vector<8x128xi1>
    %728 = arith.select %727, %714, %680 : vector<8x128xi1>, vector<8x128xf32>
    %c15_i32 = arith.constant 15 : i32
    %729 = arith.index_cast %c15_i32 : i32 to index
    %c0_171 = arith.constant 0 : index
    %c0_172 = arith.constant 0 : index
    %730 = vector.load %arg2[%729, %c0_171, %c0_172] : memref<16x8x384xbf16, #tpu.memory_space<vmem>>, vector<1x8x384xbf16>
    %731 = vector.shape_cast %730 : vector<1x8x384xbf16> to vector<8x384xbf16>
    %732 = arith.extf %731 : vector<8x384xbf16> to vector<8x384xf32>
    %733 = arith.truncf %728 : vector<8x128xf32> to vector<8x128xbf16>
    %c0_173 = arith.constant 0 : index
    %c0_174 = arith.constant 0 : index
    %734 = vector.load %arg4[%c0_173, %c0_174] : memref<128x384xbf16, #tpu.memory_space<vmem>>, vector<128x384xbf16>
    %cst_175 = arith.constant dense<0.000000e+00> : vector<8x384xf32>
    %735 = tpu.matmul %733, %734, %cst_175 {dimension_numbers = #tpu.dot_dimension_numbers<[1], [0], [0], [1], [0, 0, 1, 1], [], []>} : vector<8x128xbf16>, vector<128x384xbf16>, vector<8x384xf32> -> vector<8x384xf32>
    %736 = vector.extract_strided_slice %732 {offsets = [0, 0], sizes = [8, 128], strides = [1, 1]} : vector<8x384xf32> to vector<8x128xf32>
    %737 = vector.extract_strided_slice %735 {offsets = [0, 0], sizes = [8, 128], strides = [1, 1]} : vector<8x384xf32> to vector<8x128xf32>
    %738 = arith.addf %736, %737 : vector<8x128xf32>
    %739 = arith.negf %738 : vector<8x128xf32>
    %740 = math.exp %739 : vector<8x128xf32>
    %cst_176 = arith.constant 1.000000e+00 : f32
    %741 = vector.broadcast %cst_176 : f32 to vector<8x128xf32>
    %742 = arith.addf %741, %740 : vector<8x128xf32>
    %743 = arith.divf %741, %742 : vector<8x128xf32>
    %744 = vector.extract_strided_slice %732 {offsets = [0, 128], sizes = [8, 128], strides = [1, 1]} : vector<8x384xf32> to vector<8x128xf32>
    %745 = vector.extract_strided_slice %735 {offsets = [0, 128], sizes = [8, 128], strides = [1, 1]} : vector<8x384xf32> to vector<8x128xf32>
    %746 = arith.addf %744, %745 : vector<8x128xf32>
    %747 = arith.negf %746 : vector<8x128xf32>
    %748 = math.exp %747 : vector<8x128xf32>
    %cst_177 = arith.constant 1.000000e+00 : f32
    %749 = vector.broadcast %cst_177 : f32 to vector<8x128xf32>
    %750 = arith.addf %749, %748 : vector<8x128xf32>
    %751 = arith.divf %749, %750 : vector<8x128xf32>
    %752 = vector.extract_strided_slice %732 {offsets = [0, 256], sizes = [8, 128], strides = [1, 1]} : vector<8x384xf32> to vector<8x128xf32>
    %753 = vector.extract_strided_slice %735 {offsets = [0, 256], sizes = [8, 128], strides = [1, 1]} : vector<8x384xf32> to vector<8x128xf32>
    %754 = arith.addf %753, %7 : vector<8x128xf32>
    %755 = arith.mulf %743, %754 : vector<8x128xf32>
    %756 = arith.addf %752, %755 : vector<8x128xf32>
    %757 = math.tanh %756 : vector<8x128xf32>
    %cst_178 = arith.constant 1.000000e+00 : f32
    %758 = vector.broadcast %cst_178 : f32 to vector<8x128xf32>
    %759 = arith.subf %758, %751 : vector<8x128xf32>
    %760 = arith.mulf %759, %757 : vector<8x128xf32>
    %761 = arith.mulf %751, %728 : vector<8x128xf32>
    %762 = arith.addf %760, %761 : vector<8x128xf32>
    %763 = arith.addi %4, %c15_i32 : i32
    %764 = vector.broadcast %763 : i32 to vector<8x1xi32>
    %765 = arith.cmpi slt, %764, %3 : vector<8x1xi32>
    %cst_179 = arith.constant 0.000000e+00 : f32
    %766 = vector.shape_cast %765 : vector<8x1xi1> to vector<8x1xi1>
    %767 = vector.broadcast %766 : vector<8x1xi1> to vector<8x128xi1>
    %768 = vector.broadcast %cst_179 : f32 to vector<8x128xf32>
    %769 = arith.select %767, %762, %768 : vector<8x128xi1>, vector<8x128xf32>
    %770 = arith.index_cast %c15_i32 : i32 to index
    %c0_180 = arith.constant 0 : index
    %c0_181 = arith.constant 0 : index
    %771 = vector.load %arg6[%770, %c0_180, %c0_181] : memref<16x8x128xf32, #tpu.memory_space<vmem>>, vector<1x8x128xf32>
    %772 = vector.shape_cast %771 : vector<1x8x128xf32> to vector<8x128xf32>
    %773 = vector.shape_cast %769 : vector<8x128xf32> to vector<1x8x128xf32>
    tpu.vector_store %arg6[%770, %c0_180, %c0_181], %773 {strides = array<i32>} : memref<16x8x128xf32, #tpu.memory_space<vmem>>, vector<1x8x128xf32>,
    %774 = vector.shape_cast %765 : vector<8x1xi1> to vector<8x1xi1>
    %775 = vector.broadcast %774 : vector<8x1xi1> to vector<8x128xi1>
    %776 = arith.select %775, %762, %728 : vector<8x128xi1>, vector<8x128xf32>
    %c16_i32_182 = arith.constant 16 : i32
    %c0_183 = arith.constant 0 : index
    %c0_184 = arith.constant 0 : index
    %777 = vector.load %arg7[%c0_183, %c0_184] : memref<8x128xf32, #tpu.memory_space<vmem>>, vector<8x128xf32>
    tpu.vector_store %arg7[%c0_183, %c0_184], %776 {strides = array<i32>} : memref<8x128xf32, #tpu.memory_space<vmem>>, vector<8x128xf32>,
    return
  }
  func.func @transform_0(%arg0: i32, %arg1: i32) -> (i32, i32, i32) {
    %c0_i32 = arith.constant 0 : i32
    %c0_i32_0 = arith.constant 0 : i32
    return %arg1, %arg0, %c0_i32 : i32, i32, i32
  }
  func.func @transform_1(%arg0: i32, %arg1: i32) -> (i32, i32) {
    %c0_i32 = arith.constant 0 : i32
    %c0_i32_0 = arith.constant 0 : i32
    return %arg0, %c0_i32 : i32, i32
  }
  func.func @transform_2(%arg0: i32, %arg1: i32) -> (i32, i32) {
    %c0_i32 = arith.constant 0 : i32
    %c0_i32_0 = arith.constant 0 : i32
    %c0_i32_1 = arith.constant 0 : i32
    return %c0_i32, %c0_i32_0 : i32, i32
  }
  func.func @transform_3(%arg0: i32, %arg1: i32) -> (i32, i32) {
    %c0_i32 = arith.constant 0 : i32
    %c0_i32_0 = arith.constant 0 : i32
    %c0_i32_1 = arith.constant 0 : i32
    return %c0_i32, %c0_i32_0 : i32, i32
  }
  func.func @transform_4(%arg0: i32, %arg1: i32) -> (i32, i32, i32) {
    %c0_i32 = arith.constant 0 : i32
    %c0_i32_0 = arith.constant 0 : i32
    return %arg1, %arg0, %c0_i32 : i32, i32, i32
  }
  func.func @transform_5(%arg0: i32, %arg1: i32) -> (i32, i32) {
    %c0_i32 = arith.constant 0 : i32
    %c0_i32_0 = arith.constant 0 : i32
    return %arg0, %c0_i32 : i32, i32
  }
}

</mosaic_0001>

<llo_original>
// kernel: tpu_custom_call.1
$region0: #{tpu_custom_call.1}
  #allocation0 [shape = 'u32[]', space=smem, size = 0x4, offset = 0x4, fixed_abs, tag = 'smem constant byte address 0x4 - core index']
  #allocation1 [shape = 'u32[144,128]{1,0:T(1,128)}', space=vmem, size = 0x12000, scoped, tag = 'internal scratch']
  %s0 = inlined_call_operand.hbm [shape: bf16[16,8,384], index: 0, kind: input, shape index: {}]
  %s1 = inlined_call_operand.vmem [shape: s32[8,1], index: 1, kind: input, shape index: {}]
  %s2 = inlined_call_operand.hbm [shape: bf16[128,384], index: 2, kind: input, shape index: {}]
  %s3 = inlined_call_operand.vmem [shape: f32[1,128], index: 3, kind: input, shape index: {}]
  %s4 = inlined_call_operand.hbm [shape: f32[16,8,128], index: 4, kind: output, shape index: {0}]
  %s5 = inlined_call_operand.hbm [shape: f32[8,128], index: 5, kind: output, shape index: {1}]
  %6 = xla_tuple %s4, %s5
  %s7 = sld [smem:[#allocation0]]
  $region46: #{tpu_custom_call.1} parent=0
    _
  %s9 = ssub.s32 1, %s7
  %s10 = scalar_select 0, %s9, %s7
  $region1: #{tpu_custom_call.1} parent=0
    #allocation2 [shape = 'u8[98304]{0}', space=vmem, size = 0x18000, scoped, tag = 'input window, operand 0, single buffered']
    #allocation3 [shape = 's32[1]{0}', space=sflag, size = 0x4, scoped, tag = 'scoped memory for tpu_custom_call.1']
    #allocation4 [shape = 's32[1]{0}', space=sflag, size = 0x4, scoped, tag = 'scoped memory for tpu_custom_call.1']
    #allocation5 [shape = 'u8[98304]{0}', space=vmem, size = 0x18000, scoped, tag = 'input window, operand 2, single buffered']
    #allocation6 [shape = 's32[1]{0}', space=sflag, size = 0x4, scoped, tag = 'scoped memory for tpu_custom_call.1']
    #allocation7 [shape = 'u8[65536]{0}', space=vmem, size = 0x10000, scoped, tag = 'output window, operand 0, single buffered']
    #allocation8 [shape = 'u8[4096]{0}', space=vmem, size = 0x1000, scoped, tag = 'output window, operand 1, single buffered']
    #allocation9 [shape = 's32[1]{0}', space=sflag, size = 0x4, scoped, tag = 'scoped memory for tpu_custom_call.1']
    %11 = vsyncpa [#allocation3], 0
    %12 = vsyncpa [#allocation6], 0
    %13 = vsyncpa [#allocation4], 0
    %14 = vsyncpa [#allocation9], 0
    // Predicated region
    $region2: #{tpu_custom_call.1} parent=1 // pred_check
      _
    $region3: #{tpu_custom_call.1} parent=1 // pred_check_branch
      %16 = sbr.rel (0) target = $region5
    $region4: #{tpu_custom_call.1} parent=1 // pred_region
      %s18 = ssub.s32 3072, 3072
      %19 = vsyncadd [#allocation3], %s18
      %s20 = sshll.u32 [#allocation2], 4
      %s21 = int_to_ptr.vmem [resolvable:$true] %s20
      %26 = dma.hbm_to_vmem [thread:$0]  %s0, 3072, %s21, [#allocation3], 192, 192, 12
    $region5: #{tpu_custom_call.1} parent=1 // pred_fallthru
      _
    // Predicated region
    $region6: #{tpu_custom_call.1} parent=1 // pred_check
      _
    $region7: #{tpu_custom_call.1} parent=1 // pred_check_branch
      %28 = sbr.rel (0) target = $region9
    $region8: #{tpu_custom_call.1} parent=1 // pred_region
      _
    $region9: #{tpu_custom_call.1} parent=1 // pred_fallthru
      _
    // Predicated region
    $region10: #{tpu_custom_call.1} parent=1 // pred_check
      _
    $region11: #{tpu_custom_call.1} parent=1 // pred_check_branch
      %30 = sbr.rel (0) target = $region13
    $region12: #{tpu_custom_call.1} parent=1 // pred_region
      %s32 = ssub.s32 3072, 3072
      %33 = vsyncadd [#allocation6], %s32
      %s34 = sshll.u32 [#allocation5], 4
      %s35 = int_to_ptr.vmem [resolvable:$true] %s34
      %40 = dma.hbm_to_vmem [thread:$0]  %s2, 3072, %s35, [#allocation6], 192, 192, 12
    $region13: #{tpu_custom_call.1} parent=1 // pred_fallthru
      _
    // Predicated region
    $region14: #{tpu_custom_call.1} parent=1 // pred_check
      _
    $region15: #{tpu_custom_call.1} parent=1 // pred_check_branch
      %42 = sbr.rel (0) target = $region17
    $region16: #{tpu_custom_call.1} parent=1 // pred_region
      _
    $region17: #{tpu_custom_call.1} parent=1 // pred_fallthru
      _
    // Predicated region
    $region18: #{tpu_custom_call.1} parent=1 // pred_check
      _
    $region19: #{tpu_custom_call.1} parent=1 // pred_check_branch
      %44 = sbr.rel (0) target = $region21
    $region20: #{tpu_custom_call.1} parent=1 // pred_region
      %45 = dma.done [#allocation3], 3072
    $region21: #{tpu_custom_call.1} parent=1 // pred_fallthru
      _
    // Predicated region
    $region22: #{tpu_custom_call.1} parent=1 // pred_check
      _
    $region23: #{tpu_custom_call.1} parent=1 // pred_check_branch
      %47 = sbr.rel (0) target = $region25
    $region24: #{tpu_custom_call.1} parent=1 // pred_region
      %48 = dma.done [#allocation6], 3072
    $region25: #{tpu_custom_call.1} parent=1 // pred_fallthru
      _
    %p50 = scmp.eq.s32.totalorder 0, 0
    // Predicated region
    $region26: #{tpu_custom_call.1} parent=1 // pred_check
      %p51 = pneg %p50
    $region27: #{tpu_custom_call.1} parent=1 // pred_check_branch
      %53 = sbr.rel (%p51) target = $region29
    $region28: #{tpu_custom_call.1} parent=1 // pred_region
      %54 = vst [vmem:[#allocation8] sm:$0xff] 0.0
    $region29: #{tpu_custom_call.1} parent=1 // pred_fallthru
      _
    %v55 = vld [vmem:[%s1] sm:$0xff]
    %s56 = smul.u32 0, 16
    %v57 = vld [vmem:[%s3] sm:$0x1]
    %v59 = vlaneseq
    %v60 = vshrl.u32 %v59, 7
    %v61 = vsub.s32 0, %v60
    %v62 = vrot.slane %v57, %v61
    %v64 = vld [vmem:[#allocation8] sm:$0xff]
    %v65 = vld [vmem:[#allocation2] sm:$0xff]
    %v66 = vld [vmem:[#allocation2 + $0x8] sm:$0xf]
    %v67 = vunpack.c.l.bf16 %v65
    %v68 = vunpack.c.h.bf16 %v65
    %v69 = vunpack.c.l.bf16 %v66
    %v70 = vpack.c.bf16 %v64, %v64
    %v71 = vld [vmem:[#allocation5] sm:$0xff]
    %v72 = vld [vmem:[#allocation5 + $0x8] sm:$0xf]
    %v73 = vld [vmem:[#allocation5 + $0xc] sm:$0xff]
    %v74 = vld [vmem:[#allocation5 + $0x14] sm:$0xf]
    %v75 = vld [vmem:[#allocation5 + $0x18] sm:$0xff]
    %v76 = vld [vmem:[#allocation5 + $0x20] sm:$0xf]
    %v77 = vld [vmem:[#allocation5 + $0x24] sm:$0xff]
    %v78 = vld [vmem:[#allocation5 + $0x2c] sm:$0xf]
    %v79 = vld [vmem:[#allocation5 + $0x30] sm:$0xff]
    %v80 = vld [vmem:[#allocation5 + $0x38] sm:$0xf]
    %v81 = vld [vmem:[#allocation5 + $0x3c] sm:$0xff]
    %v82 = vld [vmem:[#allocation5 + $0x44] sm:$0xf]
    %v83 = vld [vmem:[#allocation5 + $0x48] sm:$0xff]
    %v84 = vld [vmem:[#allocation5 + $0x50] sm:$0xf]
    %v85 = vld [vmem:[#allocation5 + $0x54] sm:$0xff]
    %v86 = vld [vmem:[#allocation5 + $0x5c] sm:$0xf]
    %v87 = vld [vmem:[#allocation5 + $0x60] sm:$0xff]
    %v88 = vld [vmem:[#allocation5 + $0x68] sm:$0xf]
    %v89 = vld [vmem:[#allocation5 + $0x6c] sm:$0xff]
    %v90 = vld [vmem:[#allocation5 + $0x74] sm:$0xf]
    %v91 = vld [vmem:[#allocation5 + $0x78] sm:$0xff]
    %v92 = vld [vmem:[#allocation5 + $0x80] sm:$0xf]
    %v93 = vld [vmem:[#allocation5 + $0x84] sm:$0xff]
    %v94 = vld [vmem:[#allocation5 + $0x8c] sm:$0xf]
    %v95 = vld [vmem:[#allocation5 + $0x90] sm:$0xff]
    %v96 = vld [vmem:[#allocation5 + $0x98] sm:$0xf]
    %v97 = vld [vmem:[#allocation5 + $0x9c] sm:$0xff]
    %v98 = vld [vmem:[#allocation5 + $0xa4] sm:$0xf]
    %v99 = vld [vmem:[#allocation5 + $0xa8] sm:$0xff]
    %v100 = vld [vmem:[#allocation5 + $0xb0] sm:$0xf]
    %v101 = vld [vmem:[#allocation5 + $0xb4] sm:$0xff]
    %v102 = vld [vmem:[#allocation5 + $0xbc] sm:$0xf]
    %v135 = vunpack.c.l.b16 %v71
    %v136 = vunpack.c.h.b16 %v71
    %v137 = vunpack.c.l.b16 %v72
    %v138 = vunpack.c.l.b16 %v73
    %v139 = vunpack.c.h.b16 %v73
    %v140 = vunpack.c.l.b16 %v74
    %v141 = vunpack.c.l.b16 %v75
    %v142 = vunpack.c.h.b16 %v75
    %v143 = vunpack.c.l.b16 %v76
    %v144 = vunpack.c.l.b16 %v77
    %v145 = vunpack.c.h.b16 %v77
    %v146 = vunpack.c.l.b16 %v78
    %v147 = vunpack.c.l.b16 %v79
    %v148 = vunpack.c.h.b16 %v79
    %v149 = vunpack.c.l.b16 %v80
    %v150 = vunpack.c.l.b16 %v81
    %v151 = vunpack.c.h.b16 %v81
    %v152 = vunpack.c.l.b16 %v82
    %v153 = vunpack.c.l.b16 %v83
    %v154 = vunpack.c.h.b16 %v83
    %v155 = vunpack.c.l.b16 %v84
    %v156 = vunpack.c.l.b16 %v85
    %v157 = vunpack.c.h.b16 %v85
    %v158 = vunpack.c.l.b16 %v86
    %v159 = vunpack.c.l.b16 %v87
    %v160 = vunpack.c.h.b16 %v87
    %v161 = vunpack.c.l.b16 %v88
    %v162 = vunpack.c.l.b16 %v89
    %v163 = vunpack.c.h.b16 %v89
    %v164 = vunpack.c.l.b16 %v90
    %v165 = vunpack.c.l.b16 %v91
    %v166 = vunpack.c.h.b16 %v91
    %v167 = vunpack.c.l.b16 %v92
    %v168 = vunpack.c.l.b16 %v93
    %v169 = vunpack.c.h.b16 %v93
    %v170 = vunpack.c.l.b16 %v94
    %v171 = vunpack.c.l.b16 %v95
    %v172 = vunpack.c.h.b16 %v95
    %v173 = vunpack.c.l.b16 %v96
    %v174 = vunpack.c.l.b16 %v97
    %v175 = vunpack.c.h.b16 %v97
    %v176 = vunpack.c.l.b16 %v98
    %v177 = vunpack.c.l.b16 %v99
    %v178 = vunpack.c.h.b16 %v99
    %v179 = vunpack.c.l.b16 %v100
    %v180 = vunpack.c.l.b16 %v101
    %v181 = vunpack.c.h.b16 %v101
    %v182 = vunpack.c.l.b16 %v102
    %v183 = vpack.c.b16 %v138, %v135
    %v184 = vpack.c.b16 %v139, %v136
    %v185 = vpack.c.b16 %v140, %v137
    %v186 = vpack.c.b16 %v144, %v141
    %v187 = vpack.c.b16 %v145, %v142
    %v188 = vpack.c.b16 %v146, %v143
    %v189 = vpack.c.b16 %v150, %v147
    %v190 = vpack.c.b16 %v151, %v148
    %v191 = vpack.c.b16 %v152, %v149
    %v192 = vpack.c.b16 %v156, %v153
    %v193 = vpack.c.b16 %v157, %v154
    %v194 = vpack.c.b16 %v158, %v155
    %v195 = vpack.c.b16 %v162, %v159
    %v196 = vpack.c.b16 %v163, %v160
    %v197 = vpack.c.b16 %v164, %v161
    %v198 = vpack.c.b16 %v168, %v165
    %v199 = vpack.c.b16 %v169, %v166
    %v200 = vpack.c.b16 %v170, %v167
    %v201 = vpack.c.b16 %v174, %v171
    %v202 = vpack.c.b16 %v175, %v172
    %v203 = vpack.c.b16 %v176, %v173
    %v204 = vpack.c.b16 %v180, %v177
    %v205 = vpack.c.b16 %v181, %v178
    %v206 = vpack.c.b16 %v182, %v179
    %231 = vmatprep.subr.bf16.mxu0 %v205
    %232 = vmatpush1.bf16.msra.mxu0 %v204
    %233 = vmatprep.subr.bf16.mxu0 %v202
    %234 = vmatpush1.bf16.msra.mxu0 %v201
    %235 = vmatprep.subr.bf16.mxu0 %v199
    %236 = vmatpush1.bf16.msra.mxu0 %v198
    %237 = vmatprep.subr.bf16.mxu0 %v196
    %238 = vmatpush1.bf16.msra.mxu0 %v195
    %239 = vmatprep.subr.bf16.mxu0 %v193
    %240 = vmatpush1.bf16.msra.mxu0 %v192
    %241 = vmatprep.subr.bf16.mxu0 %v190
    %242 = vmatpush1.bf16.msra.mxu0 %v189
    %243 = vmatprep.subr.bf16.mxu0 %v187
    %244 = vmatpush1.bf16.msra.mxu0 %v186
    %245 = vmatprep.subr.bf16.mxu0 %v184
    %246 = vmatpush1.bf16.msra.mxu0 %v183
    %247 = vmatprep.subr.bf16.mxu0 0
    %248 = vmatpush2.bf16.msra.mxu0 0
    %249 = vmatprep.subr.bf16.mxu0 0
    %250 = vmatpush2.bf16.msra.mxu0 0
    %251 = vmatprep.subr.bf16.mxu0 0
    %252 = vmatpush2.bf16.msra.mxu0 0
    %253 = vmatprep.subr.bf16.mxu0 0
    %254 = vmatpush2.bf16.msra.mxu0 0
    %255 = vmatprep.subr.bf16.mxu0 0
    %256 = vmatpush2.bf16.msra.mxu0 0
    %257 = vmatprep.subr.bf16.mxu0 0
    %258 = vmatpush2.bf16.msra.mxu0 0
    %259 = vmatprep.subr.bf16.mxu0 0
    %260 = vmatpush2.bf16.msra.mxu0 0
    %261 = vmatprep.subr.bf16.mxu0 0
    %262 = vmatpush2.bf16.msra.mxu0 0
    %263 = vmatprep.mubr.bf16.mxu0 0
    %264 = vmatmul.mubr.bf16.gmra.mxu0 %v70
    %v265 = vpop.f32.mrf.mxu0
    %v266 = vadd.f32 0.0, %v265
    %v267 = vpop.f32.mrf.mxu0
    %v268 = vadd.f32 0.0, %v267
    %v269 = vpop.f32.mrf.mxu0
    %v270 = vpop.f32.mrf.mxu0
    %271 = vdwg.mxu0
    %272 = vmatprep.subr.bf16.mxu0 0
    %273 = vmatpush1.bf16.msra.mxu0 %v206
    %274 = vmatprep.subr.bf16.mxu0 0
    %275 = vmatpush1.bf16.msra.mxu0 %v203
    %276 = vmatprep.subr.bf16.mxu0 0
    %277 = vmatpush1.bf16.msra.mxu0 %v200
    %278 = vmatprep.subr.bf16.mxu0 0
    %279 = vmatpush1.bf16.msra.mxu0 %v197
    %280 = vmatprep.subr.bf16.mxu0 0
    %281 = vmatpush1.bf16.msra.mxu0 %v194
    %282 = vmatprep.subr.bf16.mxu0 0
    %283 = vmatpush1.bf16.msra.mxu0 %v191
    %284 = vmatprep.subr.bf16.mxu0 0
    %285 = vmatpush1.bf16.msra.mxu0 %v188
    %286 = vmatprep.subr.bf16.mxu0 0
    %287 = vmatpush1.bf16.msra.mxu0 %v185
    %288 = vmatprep.subr.bf16.mxu0 0
    %289 = vmatpush2.bf16.msra.mxu0 0
    %290 = vmatprep.subr.bf16.mxu0 0
    %291 = vmatpush2.bf16.msra.mxu0 0
    %292 = vmatprep.subr.bf16.mxu0 0
    %293 = vmatpush2.bf16.msra.mxu0 0
    %294 = vmatprep.subr.bf16.mxu0 0
    %295 = vmatpush2.bf16.msra.mxu0 0
    %296 = vmatprep.subr.bf16.mxu0 0
    %297 = vmatpush2.bf16.msra.mxu0 0
    %298 = vmatprep.subr.bf16.mxu0 0
    %299 = vmatpush2.bf16.msra.mxu0 0
    %300 = vmatprep.subr.bf16.mxu0 0
    %301 = vmatpush2.bf16.msra.mxu0 0
    %302 = vmatprep.subr.bf16.mxu0 0
    %303 = vmatpush2.bf16.msra.mxu0 0
    %304 = vmatprep.mubr.bf16.mxu0 0
    %305 = vmatmul.mubr.bf16.gmra.mxu0 %v70
    %v306 = vpop.f32.mrf.mxu0
    %v307 = vadd.f32 0.0, %v306
    %v308 = vpop.f32.mrf.mxu0
    %v309 = vpop.f32.mrf.mxu0
    %v310 = vpop.f32.mrf.mxu0
    %311 = vdwg.mxu0
    %v312 = vadd.f32 %v67, %v266
    %v313 = vxor.u32 %v312, 2147483648
    %v314 = vmul.f32 %v313, 1.442695
    %v315 = vpow.pop %v314
    %v316 = vadd.f32 %v315, 1.0
    %v317 = vrcp.pop %v316
    %v318 = vmul.f32 1.0, %v317
    %v319 = vadd.f32 %v68, %v268
    %v320 = vxor.u32 %v319, 2147483648
    %v321 = vmul.f32 %v320, 1.442695
    %v322 = vpow.pop %v321
    %v323 = vadd.f32 %v322, 1.0
    %v324 = vrcp.pop %v323
    %v325 = vmul.f32 1.0, %v324
    %v326 = vadd.f32 %v307, %v62
    %v327 = vmul.f32 %v318, %v326
    %v328 = vadd.f32 %v69, %v327
    %v329 = vtanh.pop %v328
    %v330 = vsub.f32 1.0, %v325
    %v331 = vmul.f32 %v330, %v329
    %v332 = vmul.f32 %v325, %v64
    %v333 = vadd.f32 %v331, %v332
    %v334 = vstv %s56
    %vm335 = vcmp.lt.s32.totalorder %v334, %v55
    %v336 = vsel %vm335, 1, 0
    %337 = vset.pattern.permute.xlu0 0
    %338 = vperm.xlu0 %337, %v336
    %v339 = vpop.permute.xlu0 %338
    %vm340 = vcmp.eq.s32.totalorder %v339, 1
    %v341 = vsel %vm340, %v333, 0.0
    %342 = vst [vmem:[#allocation7] sm:$0xff] %v341
    %v343 = vsel %vm340, %v333, %v64
    %s344 = scalar_lea.vmem [#allocation2], 12
    %v345 = vld [vmem:[%s344] sm:$0xff]
    %v346 = vld [vmem:[%s344 + $0x8] sm:$0xf]
    %v347 = vunpack.c.l.bf16 %v345
    %v348 = vunpack.c.h.bf16 %v345
    %v349 = vunpack.c.l.bf16 %v346
    %v350 = vpack.c.bf16 %v343, %v343
    %v351 = vld [vmem:[#allocation5] sm:$0xff]
    %v352 = vld [vmem:[#allocation5 + $0x8] sm:$0xf]
    %v353 = vld [vmem:[#allocation5 + $0xc] sm:$0xff]
    %v354 = vld [vmem:[#allocation5 + $0x14] sm:$0xf]
    %v355 = vld [vmem:[#allocation5 + $0x18] sm:$0xff]
    %v356 = vld [vmem:[#allocation5 + $0x20] sm:$0xf]
    %v357 = vld [vmem:[#allocation5 + $0x24] sm:$0xff]
    %v358 = vld [vmem:[#allocation5 + $0x2c] sm:$0xf]
    %v359 = vld [vmem:[#allocation5 + $0x30] sm:$0xff]
    %v360 = vld [vmem:[#allocation5 + $0x38] sm:$0xf]
    %v361 = vld [vmem:[#allocation5 + $0x3c] sm:$0xff]
    %v362 = vld [vmem:[#allocation5 + $0x44] sm:$0xf]
    %v363 = vld [vmem:[#allocation5 + $0x48] sm:$0xff]
    %v364 = vld [vmem:[#allocation5 + $0x50] sm:$0xf]
    %v365 = vld [vmem:[#allocation5 + $0x54] sm:$0xff]
    %v366 = vld [vmem:[#allocation5 + $0x5c] sm:$0xf]
    %v367 = vld [vmem:[#allocation5 + $0x60] sm:$0xff]
    %v368 = vld [vmem:[#allocation5 + $0x68] sm:$0xf]
    %v369 = vld [vmem:[#allocation5 + $0x6c] sm:$0xff]
    %v370 = vld [vmem:[#allocation5 + $0x74] sm:$0xf]
    %v371 = vld [vmem:[#allocation5 + $0x78] sm:$0xff]
    %v372 = vld [vmem:[#allocation5 + $0x80] sm:$0xf]
    %v373 = vld [vmem:[#allocation5 + $0x84] sm:$0xff]
    %v374 = vld [vmem:[#allocation5 + $0x8c] sm:$0xf]
    %v375 = vld [vmem:[#allocation5 + $0x90] sm:$0xff]
    %v376 = vld [vmem:[#allocation5 + $0x98] sm:$0xf]
    %v377 = vld [vmem:[#allocation5 + $0x9c] sm:$0xff]
    %v378 = vld [vmem:[#allocation5 + $0xa4] sm:$0xf]
    %v379 = vld [vmem:[#allocation5 + $0xa8] sm:$0xff]
    %v380 = vld [vmem:[#allocation5 + $0xb0] sm:$0xf]
    %v381 = vld [vmem:[#allocation5 + $0xb4] sm:$0xff]
    %v382 = vld [vmem:[#allocation5 + $0xbc] sm:$0xf]
    %v415 = vunpack.c.l.b16 %v351
    %v416 = vunpack.c.h.b16 %v351
    %v417 = vunpack.c.l.b16 %v352
    %v418 = vunpack.c.l.b16 %v353
    %v419 = vunpack.c.h.b16 %v353
    %v420 = vunpack.c.l.b16 %v354
    %v421 = vunpack.c.l.b16 %v355
    %v422 = vunpack.c.h.b16 %v355
    %v423 = vunpack.c.l.b16 %v356
    %v424 = vunpack.c.l.b16 %v357
    %v425 = vunpack.c.h.b16 %v357
    %v426 = vunpack.c.l.b16 %v358
    %v427 = vunpack.c.l.b16 %v359
    %v428 = vunpack.c.h.b16 %v359
    %v429 = vunpack.c.l.b16 %v360
    %v430 = vunpack.c.l.b16 %v361
    %v431 = vunpack.c.h.b16 %v361
    %v432 = vunpack.c.l.b16 %v362
    %v433 = vunpack.c.l.b16 %v363
    %v434 = vunpack.c.h.b16 %v363
    %v435 = vunpack.c.l.b16 %v364
    %v436 = vunpack.c.l.b16 %v365
    %v437 = vunpack.c.h.b16 %v365
    %v438 = vunpack.c.l.b16 %v366
    %v439 = vunpack.c.l.b16 %v367
    %v440 = vunpack.c.h.b16 %v367
    %v441 = vunpack.c.l.b16 %v368
    %v442 = vunpack.c.l.b16 %v369
    %v443 = vunpack.c.h.b16 %v369
    %v444 = vunpack.c.l.b16 %v370
    %v445 = vunpack.c.l.b16 %v371
    %v446 = vunpack.c.h.b16 %v371
    %v447 = vunpack.c.l.b16 %v372
    %v448 = vunpack.c.l.b16 %v373
    %v449 = vunpack.c.h.b16 %v373
    %v450 = vunpack.c.l.b16 %v374
    %v451 = vunpack.c.l.b16 %v375
    %v452 = vunpack.c.h.b16 %v375
    %v453 = vunpack.c.l.b16 %v376
    %v454 = vunpack.c.l.b16 %v377
    %v455 = vunpack.c.h.b16 %v377
    %v456 = vunpack.c.l.b16 %v378
    %v457 = vunpack.c.l.b16 %v379
    %v458 = vunpack.c.h.b16 %v379
    %v459 = vunpack.c.l.b16 %v380
    %v460 = vunpack.c.l.b16 %v381
    %v461 = vunpack.c.h.b16 %v381
    %v462 = vunpack.c.l.b16 %v382
    %v463 = vpack.c.b16 %v418, %v415
    %v464 = vpack.c.b16 %v419, %v416
    %v465 = vpack.c.b16 %v420, %v417
    %v466 = vpack.c.b16 %v424, %v421
    %v467 = vpack.c.b16 %v425, %v422
    %v468 = vpack.c.b16 %v426, %v423
    %v469 = vpack.c.b16 %v430, %v427
    %v470 = vpack.c.b16 %v431, %v428
    %v471 = vpack.c.b16 %v432, %v429
    %v472 = vpack.c.b16 %v436, %v433
    %v473 = vpack.c.b16 %v437, %v434
    %v474 = vpack.c.b16 %v438, %v435
    %v475 = vpack.c.b16 %v442, %v439
    %v476 = vpack.c.b16 %v443, %v440
    %v477 = vpack.c.b16 %v444, %v441
    %v478 = vpack.c.b16 %v448, %v445
    %v479 = vpack.c.b16 %v449, %v446
    %v480 = vpack.c.b16 %v450, %v447
    %v481 = vpack.c.b16 %v454, %v451
    %v482 = vpack.c.b16 %v455, %v452
    %v483 = vpack.c.b16 %v456, %v453
    %v484 = vpack.c.b16 %v460, %v457
    %v485 = vpack.c.b16 %v461, %v458
    %v486 = vpack.c.b16 %v462, %v459
    %511 = vmatprep.subr.bf16.mxu0 %v485
    %512 = vmatpush1.bf16.msra.mxu0 %v484
    %513 = vmatprep.subr.bf16.mxu0 %v482
    %514 = vmatpush1.bf16.msra.mxu0 %v481
    %515 = vmatprep.subr.bf16.mxu0 %v479
    %516 = vmatpush1.bf16.msra.mxu0 %v478
    %517 = vmatprep.subr.bf16.mxu0 %v476
    %518 = vmatpush1.bf16.msra.mxu0 %v475
    %519 = vmatprep.subr.bf16.mxu0 %v473
    %520 = vmatpush1.bf16.msra.mxu0 %v472
    %521 = vmatprep.subr.bf16.mxu0 %v470
    %522 = vmatpush1.bf16.msra.mxu0 %v469
    %523 = vmatprep.subr.bf16.mxu0 %v467
    %524 = vmatpush1.bf16.msra.mxu0 %v466
    %525 = vmatprep.subr.bf16.mxu0 %v464
    %526 = vmatpush1.bf16.msra.mxu0 %v463
    %527 = vmatprep.subr.bf16.mxu0 0
    %528 = vmatpush2.bf16.msra.mxu0 0
    %529 = vmatprep.subr.bf16.mxu0 0
    %530 = vmatpush2.bf16.msra.mxu0 0
    %531 = vmatprep.subr.bf16.mxu0 0
    %532 = vmatpush2.bf16.msra.mxu0 0
    %533 = vmatprep.subr.bf16.mxu0 0
    %534 = vmatpush2.bf16.msra.mxu0 0
    %535 = vmatprep.subr.bf16.mxu0 0
    %536 = vmatpush2.bf16.msra.mxu0 0
    %537 = vmatprep.subr.bf16.mxu0 0
    %538 = vmatpush2.bf16.msra.mxu0 0
    %539 = vmatprep.subr.bf16.mxu0 0
    %540 = vmatpush2.bf16.msra.mxu0 0
    %541 = vmatprep.subr.bf16.mxu0 0
    %542 = vmatpush2.bf16.msra.mxu0 0
    %543 = vmatprep.mubr.bf16.mxu0 0
    %544 = vmatmul.mubr.bf16.gmra.mxu0 %v350
    %v545 = vpop.f32.mrf.mxu0
    %v546 = vadd.f32 0.0, %v545
    %v547 = vpop.f32.mrf.mxu0
    %v548 = vadd.f32 0.0, %v547
    %v549 = vpop.f32.mrf.mxu0
    %v550 = vpop.f32.mrf.mxu0
    %551 = vdwg.mxu0
    %552 = vmatprep.subr.bf16.mxu0 0
    %553 = vmatpush1.bf16.msra.mxu0 %v486
    %554 = vmatprep.subr.bf16.mxu0 0
    %555 = vmatpush1.bf16.msra.mxu0 %v483
    %556 = vmatprep.subr.bf16.mxu0 0
    %557 = vmatpush1.bf16.msra.mxu0 %v480
    %558 = vmatprep.subr.bf16.mxu0 0
    %559 = vmatpush1.bf16.msra.mxu0 %v477
    %560 = vmatprep.subr.bf16.mxu0 0
    %561 = vmatpush1.bf16.msra.mxu0 %v474
    %562 = vmatprep.subr.bf16.mxu0 0
    %563 = vmatpush1.bf16.msra.mxu0 %v471
    %564 = vmatprep.subr.bf16.mxu0 0
    %565 = vmatpush1.bf16.msra.mxu0 %v468
    %566 = vmatprep.subr.bf16.mxu0 0
    %567 = vmatpush1.bf16.msra.mxu0 %v465
    %568 = vmatprep.subr.bf16.mxu0 0
    %569 = vmatpush2.bf16.msra.mxu0 0
    %570 = vmatprep.subr.bf16.mxu0 0
    %571 = vmatpush2.bf16.msra.mxu0 0
    %572 = vmatprep.subr.bf16.mxu0 0
    %573 = vmatpush2.bf16.msra.mxu0 0
    %574 = vmatprep.subr.bf16.mxu0 0
    %575 = vmatpush2.bf16.msra.mxu0 0
    %576 = vmatprep.subr.bf16.mxu0 0
    %577 = vmatpush2.bf16.msra.mxu0 0
    %578 = vmatprep.subr.bf16.mxu0 0
    %579 = vmatpush2.bf16.msra.mxu0 0
    %580 = vmatprep.subr.bf16.mxu0 0
    %581 = vmatpush2.bf16.msra.mxu0 0
    %582 = vmatprep.subr.bf16.mxu0 0
    %583 = vmatpush2.bf16.msra.mxu0 0
    %584 = vmatprep.mubr.bf16.mxu0 0
    %585 = vmatmul.mubr.bf16.gmra.mxu0 %v350
    %v586 = vpop.f32.mrf.mxu0
    %v587 = vadd.f32 0.0, %v586
    %v588 = vpop.f32.mrf.mxu0
    %v589 = vpop.f32.mrf.mxu0
    %v590 = vpop.f32.mrf.mxu0
    %591 = vdwg.mxu0
    %v592 = vadd.f32 %v347, %v546
    %v593 = vxor.u32 %v592, 2147483648
    %v594 = vmul.f32 %v593, 1.442695
    %v595 = vpow.pop %v594
    %v596 = vadd.f32 %v595, 1.0
    %v597 = vrcp.pop %v596
    %v598 = vmul.f32 1.0, %v597
    %v599 = vadd.f32 %v348, %v548
    %v600 = vxor.u32 %v599, 2147483648
    %v601 = vmul.f32 %v600, 1.442695
    %v602 = vpow.pop %v601
    %v603 = vadd.f32 %v602, 1.0
    %v604 = vrcp.pop %v603
    %v605 = vmul.f32 1.0, %v604
    %v606 = vadd.f32 %v587, %v62
    %v607 = vmul.f32 %v598, %v606
    %v608 = vadd.f32 %v349, %v607
    %v609 = vtanh.pop %v608
    %v610 = vsub.f32 1.0, %v605
    %v611 = vmul.f32 %v610, %v609
    %v612 = vmul.f32 %v605, %v343
    %v613 = vadd.f32 %v611, %v612
    %s614 = sadd.s32 %s56, 1
    %v615 = vstv %s614
    %vm616 = vcmp.lt.s32.totalorder %v615, %v55
    %v617 = vsel %vm616, 1, 0
    %618 = vset.pattern.permute.xlu0 0
    %619 = vperm.xlu0 %618, %v617
    %v620 = vpop.permute.xlu0 %619
    %vm621 = vcmp.eq.s32.totalorder %v620, 1
    %v622 = vsel %vm621, %v613, 0.0
    %s623 = scalar_lea.vmem [#allocation7], 8
    %624 = vst [vmem:[%s623] sm:$0xff] %v622
    %v625 = vsel %vm621, %v613, %v343
    %s626 = scalar_lea.vmem [#allocation2], 24
    %v627 = vld [vmem:[%s626] sm:$0xff]
    %v628 = vld [vmem:[%s626 + $0x8] sm:$0xf]
    %v629 = vunpack.c.l.bf16 %v627
    %v630 = vunpack.c.h.bf16 %v627
    %v631 = vunpack.c.l.bf16 %v628
    %v632 = vpack.c.bf16 %v625, %v625
    %v633 = vld [vmem:[#allocation5] sm:$0xff]
    %v634 = vld [vmem:[#allocation5 + $0x8] sm:$0xf]
    %v635 = vld [vmem:[#allocation5 + $0xc] sm:$0xff]
    %v636 = vld [vmem:[#allocation5 + $0x14] sm:$0xf]
    %v637 = vld [vmem:[#allocation5 + $0x18] sm:$0xff]
    %v638 = vld [vmem:[#allocation5 + $0x20] sm:$0xf]
    %v639 = vld [vmem:[#allocation5 + $0x24] sm:$0xff]
    %v640 = vld [vmem:[#allocation5 + $0x2c] sm:$0xf]
    %v641 = vld [vmem:[#allocation5 + $0x30] sm:$0xff]
    %v642 = vld [vmem:[#allocation5 + $0x38] sm:$0xf]
    %v643 = vld [vmem:[#allocation5 + $0x3c] sm:$0xff]
    %v644 = vld [vmem:[#allocation5 + $0x44] sm:$0xf]
    %v645 = vld [vmem:[#allocation5 + $0x48] sm:$0xff]
    %v646 = vld [vmem:[#allocation5 + $0x50] sm:$0xf]
    %v647 = vld [vmem:[#allocation5 + $0x54] sm:$0xff]
    %v648 = vld [vmem:[#allocation5 + $0x5c] sm:$0xf]
    %v649 = vld [vmem:[#allocation5 + $0x60] sm:$0xff]
    %v650 = vld [vmem:[#allocation5 + $0x68] sm:$0xf]
    %v651 = vld [vmem:[#allocation5 + $0x6c] sm:$0xff]
    %v652 = vld [vmem:[#allocation5 + $0x74] sm:$0xf]
    %v653 = vld [vmem:[#allocation5 + $0x78] sm:$0xff]
    %v654 = vld [vmem:[#allocation5 + $0x80] sm:$0xf]
    %v655 = vld [vmem:[#allocation5 + $0x84] sm:$0xff]
    %v656 = vld [vmem:[#allocation5 + $0x8c] sm:$0xf]
    %v657 = vld [vmem:[#allocation5 + $0x90] sm:$0xff]
    %v658 = vld [vmem:[#allocation5 + $0x98] sm:$0xf]
    %v659 = vld [vmem:[#allocation5 + $0x9c] sm:$0xff]
    %v660 = vld [vmem:[#allocation5 + $0xa4] sm:$0xf]
    %v661 = vld [vmem:[#allocation5 + $0xa8] sm:$0xff]
    %v662 = vld [vmem:[#allocation5 + $0xb0] sm:$0xf]
    %v663 = vld [vmem:[#allocation5 + $0xb4] sm:$0xff]
    %v664 = vld [vmem:[#allocation5 + $0xbc] sm:$0xf]
    %v697 = vunpack.c.l.b16 %v633
    %v698 = vunpack.c.h.b16 %v633
    %v699 = vunpack.c.l.b16 %v634
    %v700 = vunpack.c.l.b16 %v635
    %v701 = vunpack.c.h.b16 %v635
    %v702 = vunpack.c.l.b16 %v636
    %v703 = vunpack.c.l.b16 %v637
    %v704 = vunpack.c.h.b16 %v637
    %v705 = vunpack.c.l.b16 %v638
    %v706 = vunpack.c.l.b16 %v639
    %v707 = vunpack.c.h.b16 %v639
    %v708 = vunpack.c.l.b16 %v640
    %v709 = vunpack.c.l.b16 %v641
    %v710 = vunpack.c.h.b16 %v641
    %v711 = vunpack.c.l.b16 %v642
    %v712 = vunpack.c.l.b16 %v643
    %v713 = vunpack.c.h.b16 %v643
    %v714 = vunpack.c.l.b16 %v644
    %v715 = vunpack.c.l.b16 %v645
    %v716 = vunpack.c.h.b16 %v645
    %v717 = vunpack.c.l.b16 %v646
    %v718 = vunpack.c.l.b16 %v647
    %v719 = vunpack.c.h.b16 %v647
    %v720 = vunpack.c.l.b16 %v648
    %v721 = vunpack.c.l.b16 %v649
    %v722 = vunpack.c.h.b16 %v649
    %v723 = vunpack.c.l.b16 %v650
    %v724 = vunpack.c.l.b16 %v651
    %v725 = vunpack.c.h.b16 %v651
    %v726 = vunpack.c.l.b16 %v652
    %v727 = vunpack.c.l.b16 %v653
    %v728 = vunpack.c.h.b16 %v653
    %v729 = vunpack.c.l.b16 %v654
    %v730 = vunpack.c.l.b16 %v655
    %v731 = vunpack.c.h.b16 %v655
    %v732 = vunpack.c.l.b16 %v656
    %v733 = vunpack.c.l.b16 %v657
    %v734 = vunpack.c.h.b16 %v657
    %v735 = vunpack.c.l.b16 %v658
    %v736 = vunpack.c.l.b16 %v659
    %v737 = vunpack.c.h.b16 %v659
    %v738 = vunpack.c.l.b16 %v660
    %v739 = vunpack.c.l.b16 %v661
    %v740 = vunpack.c.h.b16 %v661
    %v741 = vunpack.c.l.b16 %v662
    %v742 = vunpack.c.l.b16 %v663
    %v743 = vunpack.c.h.b16 %v663
    %v744 = vunpack.c.l.b16 %v664
    %v745 = vpack.c.b16 %v700, %v697
    %v746 = vpack.c.b16 %v701, %v698
    %v747 = vpack.c.b16 %v702, %v699
    %v748 = vpack.c.b16 %v706, %v703
    %v749 = vpack.c.b16 %v707, %v704
    %v750 = vpack.c.b16 %v708, %v705
    %v751 = vpack.c.b16 %v712, %v709
    %v752 = vpack.c.b16 %v713, %v710
    %v753 = vpack.c.b16 %v714, %v711
    %v754 = vpack.c.b16 %v718, %v715
    %v755 = vpack.c.b16 %v719, %v716
    %v756 = vpack.c.b16 %v720, %v717
    %v757 = vpack.c.b16 %v724, %v721
    %v758 = vpack.c.b16 %v725, %v722
    %v759 = vpack.c.b16 %v726, %v723
    %v760 = vpack.c.b16 %v730, %v727
    %v761 = vpack.c.b16 %v731, %v728
    %v762 = vpack.c.b16 %v732, %v729
    %v763 = vpack.c.b16 %v736, %v733
    %v764 = vpack.c.b16 %v737, %v734
    %v765 = vpack.c.b16 %v738, %v735
    %v766 = vpack.c.b16 %v742, %v739
    %v767 = vpack.c.b16 %v743, %v740
    %v768 = vpack.c.b16 %v744, %v741
    %793 = vmatprep.subr.bf16.mxu0 %v767
    %794 = vmatpush1.bf16.msra.mxu0 %v766
    %795 = vmatprep.subr.bf16.mxu0 %v764
    %796 = vmatpush1.bf16.msra.mxu0 %v763
    %797 = vmatprep.subr.bf16.mxu0 %v761
    %798 = vmatpush1.bf16.msra.mxu0 %v760
    %799 = vmatprep.subr.bf16.mxu0 %v758
    %800 = vmatpush1.bf16.msra.mxu0 %v757
    %801 = vmatprep.subr.bf16.mxu0 %v755
    %802 = vmatpush1.bf16.msra.mxu0 %v754
    %803 = vmatprep.subr.bf16.mxu0 %v752
    %804 = vmatpush1.bf16.msra.mxu0 %v751
    %805 = vmatprep.subr.bf16.mxu0 %v749
    %806 = vmatpush1.bf16.msra.mxu0 %v748
    %807 = vmatprep.subr.bf16.mxu0 %v746
    %808 = vmatpush1.bf16.msra.mxu0 %v745
    %809 = vmatprep.subr.bf16.mxu0 0
    %810 = vmatpush2.bf16.msra.mxu0 0
    %811 = vmatprep.subr.bf16.mxu0 0
    %812 = vmatpush2.bf16.msra.mxu0 0
    %813 = vmatprep.subr.bf16.mxu0 0
    %814 = vmatpush2.bf16.msra.mxu0 0
    %815 = vmatprep.subr.bf16.mxu0 0
    %816 = vmatpush2.bf16.msra.mxu0 0
    %817 = vmatprep.subr.bf16.mxu0 0
    %818 = vmatpush2.bf16.msra.mxu0 0
    %819 = vmatprep.subr.bf16.mxu0 0
    %820 = vmatpush2.bf16.msra.mxu0 0
    %821 = vmatprep.subr.bf16.mxu0 0
    %822 = vmatpush2.bf16.msra.mxu0 0
    %823 = vmatprep.subr.bf16.mxu0 0
    %824 = vmatpush2.bf16.msra.mxu0 0
    %825 = vmatprep.mubr.bf16.mxu0 0
    %826 = vmatmul.mubr.bf16.gmra.mxu0 %v632
    %v827 = vpop.f32.mrf.mxu0
    %v828 = vadd.f32 0.0, %v827
    %v829 = vpop.f32.mrf.mxu0
    %v830 = vadd.f32 0.0, %v829
    %v831 = vpop.f32.mrf.mxu0
    %v832 = vpop.f32.mrf.mxu0
    %833 = vdwg.mxu0
    %834 = vmatprep.subr.bf16.mxu0 0
    %835 = vmatpush1.bf16.msra.mxu0 %v768
    %836 = vmatprep.subr.bf16.mxu0 0
    %837 = vmatpush1.bf16.msra.mxu0 %v765
    %838 = vmatprep.subr.bf16.mxu0 0
    %839 = vmatpush1.bf16.msra.mxu0 %v762
    %840 = vmatprep.subr.bf16.mxu0 0
    %841 = vmatpush1.bf16.msra.mxu0 %v759
    %842 = vmatprep.subr.bf16.mxu0 0
    %843 = vmatpush1.bf16.msra.mxu0 %v756
    %844 = vmatprep.subr.bf16.mxu0 0
    %845 = vmatpush1.bf16.msra.mxu0 %v753
    %846 = vmatprep.subr.bf16.mxu0 0
    %847 = vmatpush1.bf16.msra.mxu0 %v750
    %848 = vmatprep.subr.bf16.mxu0 0
    %849 = vmatpush1.bf16.msra.mxu0 %v747
    %850 = vmatprep.subr.bf16.mxu0 0
    %851 = vmatpush2.bf16.msra.mxu0 0
    %852 = vmatprep.subr.bf16.mxu0 0
    %853 = vmatpush2.bf16.msra.mxu0 0
    %854 = vmatprep.subr.bf16.mxu0 0
    %855 = vmatpush2.bf16.msra.mxu0 0
    %856 = vmatprep.subr.bf16.mxu0 0
    %857 = vmatpush2.bf16.msra.mxu0 0
    %858 = vmatprep.subr.bf16.mxu0 0
    %859 = vmatpush2.bf16.msra.mxu0 0
    %860 = vmatprep.subr.bf16.mxu0 0
    %861 = vmatpush2.bf16.msra.mxu0 0
    %862 = vmatprep.subr.bf16.mxu0 0
    %863 = vmatpush2.bf16.msra.mxu0 0
    %864 = vmatprep.subr.bf16.mxu0 0
    %865 = vmatpush2.bf16.msra.mxu0 0
    %866 = vmatprep.mubr.bf16.mxu0 0
    %867 = vmatmul.mubr.bf16.gmra.mxu0 %v632
    %v868 = vpop.f32.mrf.mxu0
    %v869 = vadd.f32 0.0, %v868
    %v870 = vpop.f32.mrf.mxu0
    %v871 = vpop.f32.mrf.mxu0
    %v872 = vpop.f32.mrf.mxu0
    %873 = vdwg.mxu0
    %v874 = vadd.f32 %v629, %v828
    %v875 = vxor.u32 %v874, 2147483648
    %v876 = vmul.f32 %v875, 1.442695
    %v877 = vpow.pop %v876
    %v878 = vadd.f32 %v877, 1.0
    %v879 = vrcp.pop %v878
    %v880 = vmul.f32 1.0, %v879
    %v881 = vadd.f32 %v630, %v830
    %v882 = vxor.u32 %v881, 2147483648
    %v883 = vmul.f32 %v882, 1.442695
    %v884 = vpow.pop %v883
    %v885 = vadd.f32 %v884, 1.0
    %v886 = vrcp.pop %v885
    %v887 = vmul.f32 1.0, %v886
    %v888 = vadd.f32 %v869, %v62
    %v889 = vmul.f32 %v880, %v888
    %v890 = vadd.f32 %v631, %v889
    %v891 = vtanh.pop %v890
    %v892 = vsub.f32 1.0, %v887
    %v893 = vmul.f32 %v892, %v891
    %v894 = vmul.f32 %v887, %v625
    %v895 = vadd.f32 %v893, %v894
    %s896 = sadd.s32 %s56, 2
    %v897 = vstv %s896
    %vm898 = vcmp.lt.s32.totalorder %v897, %v55
    %v899 = vsel %vm898, 1, 0
    %900 = vset.pattern.permute.xlu0 0
    %901 = vperm.xlu0 %900, %v899
    %v902 = vpop.permute.xlu0 %901
    %vm903 = vcmp.eq.s32.totalorder %v902, 1
    %v904 = vsel %vm903, %v895, 0.0
    %s905 = scalar_lea.vmem [#allocation7], 16
    %906 = vst [vmem:[%s905] sm:$0xff] %v904
    %v907 = vsel %vm903, %v895, %v625
    %s908 = scalar_lea.vmem [#allocation2], 36
    %v909 = vld [vmem:[%s908] sm:$0xff]
    %v910 = vld [vmem:[%s908 + $0x8] sm:$0xf]
    %v911 = vunpack.c.l.bf16 %v909
    %v912 = vunpack.c.h.bf16 %v909
    %v913 = vunpack.c.l.bf16 %v910
    %v914 = vpack.c.bf16 %v907, %v907
    %v915 = vld [vmem:[#allocation5] sm:$0xff]
    %v916 = vld [vmem:[#allocation5 + $0x8] sm:$0xf]
    %v917 = vld [vmem:[#allocation5 + $0xc] sm:$0xff]
    %v918 = vld [vmem:[#allocation5 + $0x14] sm:$0xf]
    %v919 = vld [vmem:[#allocation5 + $0x18] sm:$0xff]
    %v920 = vld [vmem:[#allocation5 + $0x20] sm:$0xf]
    %v921 = vld [vmem:[#allocation5 + $0x24] sm:$0xff]
    %v922 = vld [vmem:[#allocation5 + $0x2c] sm:$0xf]
    %v923 = vld [vmem:[#allocation5 + $0x30] sm:$0xff]
    %v924 = vld [vmem:[#allocation5 + $0x38] sm:$0xf]
    %v925 = vld [vmem:[#allocation5 + $0x3c] sm:$0xff]
    %v926 = vld [vmem:[#allocation5 + $0x44] sm:$0xf]
    %v927 = vld [vmem:[#allocation5 + $0x48] sm:$0xff]
    %v928 = vld [vmem:[#allocation5 + $0x50] sm:$0xf]
    %v929 = vld [vmem:[#allocation5 + $0x54] sm:$0xff]
    %v930 = vld [vmem:[#allocation5 + $0x5c] sm:$0xf]
    %v931 = vld [vmem:[#allocation5 + $0x60] sm:$0xff]
    %v932 = vld [vmem:[#allocation5 + $0x68] sm:$0xf]
    %v933 = vld [vmem:[#allocation5 + $0x6c] sm:$0xff]
    %v934 = vld [vmem:[#allocation5 + $0x74] sm:$0xf]
    %v935 = vld [vmem:[#allocation5 + $0x78] sm:$0xff]
    %v936 = vld [vmem:[#allocation5 + $0x80] sm:$0xf]
    %v937 = vld [vmem:[#allocation5 + $0x84] sm:$0xff]
    %v938 = vld [vmem:[#allocation5 + $0x8c] sm:$0xf]
    %v939 = vld [vmem:[#allocation5 + $0x90] sm:$0xff]
    %v940 = vld [vmem:[#allocation5 + $0x98] sm:$0xf]
    %v941 = vld [vmem:[#allocation5 + $0x9c] sm:$0xff]
    %v942 = vld [vmem:[#allocation5 + $0xa4] sm:$0xf]
    %v943 = vld [vmem:[#allocation5 + $0xa8] sm:$0xff]
    %v944 = vld [vmem:[#allocation5 + $0xb0] sm:$0xf]
    %v945 = vld [vmem:[#allocation5 + $0xb4] sm:$0xff]
    %v946 = vld [vmem:[#allocation5 + $0xbc] sm:$0xf]
    %v979 = vunpack.c.l.b16 %v915
    %v980 = vunpack.c.h.b16 %v915
    %v981 = vunpack.c.l.b16 %v916
    %v982 = vunpack.c.l.b16 %v917
    %v983 = vunpack.c.h.b16 %v917
    %v984 = vunpack.c.l.b16 %v918
    %v985 = vunpack.c.l.b16 %v919
    %v986 = vunpack.c.h.b16 %v919
    %v987 = vunpack.c.l.b16 %v920
    %v988 = vunpack.c.l.b16 %v921
    %v989 = vunpack.c.h.b16 %v921
    %v990 = vunpack.c.l.b16 %v922
    %v991 = vunpack.c.l.b16 %v923
    %v992 = vunpack.c.h.b16 %v923
    %v993 = vunpack.c.l.b16 %v924
    %v994 = vunpack.c.l.b16 %v925
    %v995 = vunpack.c.h.b16 %v925
    %v996 = vunpack.c.l.b16 %v926
    %v997 = vunpack.c.l.b16 %v927
    %v998 = vunpack.c.h.b16 %v927
    %v999 = vunpack.c.l.b16 %v928
    %v1000 = vunpack.c.l.b16 %v929
    %v1001 = vunpack.c.h.b16 %v929
    %v1002 = vunpack.c.l.b16 %v930
    %v1003 = vunpack.c.l.b16 %v931
    %v1004 = vunpack.c.h.b16 %v931
    %v1005 = vunpack.c.l.b16 %v932
    %v1006 = vunpack.c.l.b16 %v933
    %v1007 = vunpack.c.h.b16 %v933
    %v1008 = vunpack.c.l.b16 %v934
    %v1009 = vunpack.c.l.b16 %v935
    %v1010 = vunpack.c.h.b16 %v935
    %v1011 = vunpack.c.l.b16 %v936
    %v1012 = vunpack.c.l.b16 %v937
    %v1013 = vunpack.c.h.b16 %v937
    %v1014 = vunpack.c.l.b16 %v938
    %v1015 = vunpack.c.l.b16 %v939
    %v1016 = vunpack.c.h.b16 %v939
    %v1017 = vunpack.c.l.b16 %v940
    %v1018 = vunpack.c.l.b16 %v941
    %v1019 = vunpack.c.h.b16 %v941
    %v1020 = vunpack.c.l.b16 %v942
    %v1021 = vunpack.c.l.b16 %v943
    %v1022 = vunpack.c.h.b16 %v943
    %v1023 = vunpack.c.l.b16 %v944
    %v1024 = vunpack.c.l.b16 %v945
    %v1025 = vunpack.c.h.b16 %v945
    %v1026 = vunpack.c.l.b16 %v946
    %v1027 = vpack.c.b16 %v982, %v979
    %v1028 = vpack.c.b16 %v983, %v980
    %v1029 = vpack.c.b16 %v984, %v981
    %v1030 = vpack.c.b16 %v988, %v985
    %v1031 = vpack.c.b16 %v989, %v986
    %v1032 = vpack.c.b16 %v990, %v987
    %v1033 = vpack.c.b16 %v994, %v991
    %v1034 = vpack.c.b16 %v995, %v992
    %v1035 = vpack.c.b16 %v996, %v993
    %v1036 = vpack.c.b16 %v1000, %v997
    %v1037 = vpack.c.b16 %v1001, %v998
    %v1038 = vpack.c.b16 %v1002, %v999
    %v1039 = vpack.c.b16 %v1006, %v1003
    %v1040 = vpack.c.b16 %v1007, %v1004
    %v1041 = vpack.c.b16 %v1008, %v1005
    %v1042 = vpack.c.b16 %v1012, %v1009
    %v1043 = vpack.c.b16 %v1013, %v1010
    %v1044 = vpack.c.b16 %v1014, %v1011
    %v1045 = vpack.c.b16 %v1018, %v1015
    %v1046 = vpack.c.b16 %v1019, %v1016
    %v1047 = vpack.c.b16 %v1020, %v1017
    %v1048 = vpack.c.b16 %v1024, %v1021
    %v1049 = vpack.c.b16 %v1025, %v1022
    %v1050 = vpack.c.b16 %v1026, %v1023
    %1075 = vmatprep.subr.bf16.mxu0 %v1049
    %1076 = vmatpush1.bf16.msra.mxu0 %v1048
    %1077 = vmatprep.subr.bf16.mxu0 %v1046
    %1078 = vmatpush1.bf16.msra.mxu0 %v1045
    %1079 = vmatprep.subr.bf16.mxu0 %v1043
    %1080 = vmatpush1.bf16.msra.mxu0 %v1042
    %1081 = vmatprep.subr.bf16.mxu0 %v1040
    %1082 = vmatpush1.bf16.msra.mxu0 %v1039
    %1083 = vmatprep.subr.bf16.mxu0 %v1037
    %1084 = vmatpush1.bf16.msra.mxu0 %v1036
    %1085 = vmatprep.subr.bf16.mxu0 %v1034
    %1086 = vmatpush1.bf16.msra.mxu0 %v1033
    %1087 = vmatprep.subr.bf16.mxu0 %v1031
    %1088 = vmatpush1.bf16.msra.mxu0 %v1030
    %1089 = vmatprep.subr.bf16.mxu0 %v1028
    %1090 = vmatpush1.bf16.msra.mxu0 %v1027
    %1091 = vmatprep.subr.bf16.mxu0 0
    %1092 = vmatpush2.bf16.msra.mxu0 0
    %1093 = vmatprep.subr.bf16.mxu0 0
    %1094 = vmatpush2.bf16.msra.mxu0 0
    %1095 = vmatprep.subr.bf16.mxu0 0
    %1096 = vmatpush2.bf16.msra.mxu0 0
    %1097 = vmatprep.subr.bf16.mxu0 0
    %1098 = vmatpush2.bf16.msra.mxu0 0
    %1099 = vmatprep.subr.bf16.mxu0 0
    %1100 = vmatpush2.bf16.msra.mxu0 0
    %1101 = vmatprep.subr.bf16.mxu0 0
    %1102 = vmatpush2.bf16.msra.mxu0 0
    %1103 = vmatprep.subr.bf16.mxu0 0
    %1104 = vmatpush2.bf16.msra.mxu0 0
    %1105 = vmatprep.subr.bf16.mxu0 0
    %1106 = vmatpush2.bf16.msra.mxu0 0
    %1107 = vmatprep.mubr.bf16.mxu0 0
    %1108 = vmatmul.mubr.bf16.gmra.mxu0 %v914
    %v1109 = vpop.f32.mrf.mxu0
    %v1110 = vadd.f32 0.0, %v1109
    %v1111 = vpop.f32.mrf.mxu0
    %v1112 = vadd.f32 0.0, %v1111
    %v1113 = vpop.f32.mrf.mxu0
    %v1114 = vpop.f32.mrf.mxu0
    %1115 = vdwg.mxu0
    %1116 = vmatprep.subr.bf16.mxu0 0
    %1117 = vmatpush1.bf16.msra.mxu0 %v1050
    %1118 = vmatprep.subr.bf16.mxu0 0
    %1119 = vmatpush1.bf16.msra.mxu0 %v1047
    %1120 = vmatprep.subr.bf16.mxu0 0
    %1121 = vmatpush1.bf16.msra.mxu0 %v1044
    %1122 = vmatprep.subr.bf16.mxu0 0
    %1123 = vmatpush1.bf16.msra.mxu0 %v1041
    %1124 = vmatprep.subr.bf16.mxu0 0
    %1125 = vmatpush1.bf16.msra.mxu0 %v1038
    %1126 = vmatprep.subr.bf16.mxu0 0
    %1127 = vmatpush1.bf16.msra.mxu0 %v1035
    %1128 = vmatprep.subr.bf16.mxu0 0
    %1129 = vmatpush1.bf16.msra.mxu0 %v1032
    %1130 = vmatprep.subr.bf16.mxu0 0
    %1131 = vmatpush1.bf16.msra.mxu0 %v1029
    %1132 = vmatprep.subr.bf16.mxu0 0
    %1133 = vmatpush2.bf16.msra.mxu0 0
    %1134 = vmatprep.subr.bf16.mxu0 0
    %1135 = vmatpush2.bf16.msra.mxu0 0
    %1136 = vmatprep.subr.bf16.mxu0 0
    %1137 = vmatpush2.bf16.msra.mxu0 0
    %1138 = vmatprep.subr.bf16.mxu0 0
    %1139 = vmatpush2.bf16.msra.mxu0 0
    %1140 = vmatprep.subr.bf16.mxu0 0
    %1141 = vmatpush2.bf16.msra.mxu0 0
    %1142 = vmatprep.subr.bf16.mxu0 0
    %1143 = vmatpush2.bf16.msra.mxu0 0
    %1144 = vmatprep.subr.bf16.mxu0 0
    %1145 = vmatpush2.bf16.msra.mxu0 0
    %1146 = vmatprep.subr.bf16.mxu0 0
    %1147 = vmatpush2.bf16.msra.mxu0 0
    %1148 = vmatprep.mubr.bf16.mxu0 0
    %1149 = vmatmul.mubr.bf16.gmra.mxu0 %v914
    %v1150 = vpop.f32.mrf.mxu0
    %v1151 = vadd.f32 0.0, %v1150
    %v1152 = vpop.f32.mrf.mxu0
    %v1153 = vpop.f32.mrf.mxu0
    %v1154 = vpop.f32.mrf.mxu0
    %1155 = vdwg.mxu0
    %v1156 = vadd.f32 %v911, %v1110
    %v1157 = vxor.u32 %v1156, 2147483648
    %v1158 = vmul.f32 %v1157, 1.442695
    %v1159 = vpow.pop %v1158
    %v1160 = vadd.f32 %v1159, 1.0
    %v1161 = vrcp.pop %v1160
    %v1162 = vmul.f32 1.0, %v1161
    %v1163 = vadd.f32 %v912, %v1112
    %v1164 = vxor.u32 %v1163, 2147483648
    %v1165 = vmul.f32 %v1164, 1.442695
    %v1166 = vpow.pop %v1165
    %v1167 = vadd.f32 %v1166, 1.0
    %v1168 = vrcp.pop %v1167
    %v1169 = vmul.f32 1.0, %v1168
    %v1170 = vadd.f32 %v1151, %v62
    %v1171 = vmul.f32 %v1162, %v1170
    %v1172 = vadd.f32 %v913, %v1171
    %v1173 = vtanh.pop %v1172
    %v1174 = vsub.f32 1.0, %v1169
    %v1175 = vmul.f32 %v1174, %v1173
    %v1176 = vmul.f32 %v1169, %v907
    %v1177 = vadd.f32 %v1175, %v1176
    %s1178 = sadd.s32 %s56, 3
    %v1179 = vstv %s1178
    %vm1180 = vcmp.lt.s32.totalorder %v1179, %v55
    %v1181 = vsel %vm1180, 1, 0
    %1182 = vset.pattern.permute.xlu0 0
    %1183 = vperm.xlu0 %1182, %v1181
    %v1184 = vpop.permute.xlu0 %1183
    %vm1185 = vcmp.eq.s32.totalorder %v1184, 1
    %v1186 = vsel %vm1185, %v1177, 0.0
    %s1187 = scalar_lea.vmem [#allocation7], 24
    %1188 = vst [vmem:[%s1187] sm:$0xff] %v1186
    %v1189 = vsel %vm1185, %v1177, %v907
    %s1190 = scalar_lea.vmem [#allocation2], 48
    %v1191 = vld [vmem:[%s1190] sm:$0xff]
    %v1192 = vld [vmem:[%s1190 + $0x8] sm:$0xf]
    %v1193 = vunpack.c.l.bf16 %v1191
    %v1194 = vunpack.c.h.bf16 %v1191
    %v1195 = vunpack.c.l.bf16 %v1192
    %v1196 = vpack.c.bf16 %v1189, %v1189
    %v1197 = vld [vmem:[#allocation5] sm:$0xff]
    %v1198 = vld [vmem:[#allocation5 + $0x8] sm:$0xf]
    %v1199 = vld [vmem:[#allocation5 + $0xc] sm:$0xff]
    %v1200 = vld [vmem:[#allocation5 + $0x14] sm:$0xf]
    %v1201 = vld [vmem:[#allocation5 + $0x18] sm:$0xff]
    %v1202 = vld [vmem:[#allocation5 + $0x20] sm:$0xf]
    %v1203 = vld [vmem:[#allocation5 + $0x24] sm:$0xff]
    %v1204 = vld [vmem:[#allocation5 + $0x2c] sm:$0xf]
    %v1205 = vld [vmem:[#allocation5 + $0x30] sm:$0xff]
    %v1206 = vld [vmem:[#allocation5 + $0x38] sm:$0xf]
    %v1207 = vld [vmem:[#allocation5 + $0x3c] sm:$0xff]
    %v1208 = vld [vmem:[#allocation5 + $0x44] sm:$0xf]
    %v1209 = vld [vmem:[#allocation5 + $0x48] sm:$0xff]
    %v1210 = vld [vmem:[#allocation5 + $0x50] sm:$0xf]
    %v1211 = vld [vmem:[#allocation5 + $0x54] sm:$0xff]
    %v1212 = vld [vmem:[#allocation5 + $0x5c] sm:$0xf]
    %v1213 = vld [vmem:[#allocation5 + $0x60] sm:$0xff]
    %v1214 = vld [vmem:[#allocation5 + $0x68] sm:$0xf]
    %v1215 = vld [vmem:[#allocation5 + $0x6c] sm:$0xff]
    %v1216 = vld [vmem:[#allocation5 + $0x74] sm:$0xf]
    %v1217 = vld [vmem:[#allocation5 + $0x78] sm:$0xff]
    %v1218 = vld [vmem:[#allocation5 + $0x80] sm:$0xf]
    %v1219 = vld [vmem:[#allocation5 + $0x84] sm:$0xff]
    %v1220 = vld [vmem:[#allocation5 + $0x8c] sm:$0xf]
    %v1221 = vld [vmem:[#allocation5 + $0x90] sm:$0xff]
    %v1222 = vld [vmem:[#allocation5 + $0x98] sm:$0xf]
    %v1223 = vld [vmem:[#allocation5 + $0x9c] sm:$0xff]
    %v1224 = vld [vmem:[#allocation5 + $0xa4] sm:$0xf]
    %v1225 = vld [vmem:[#allocation5 + $0xa8] sm:$0xff]
    %v1226 = vld [vmem:[#allocation5 + $0xb0] sm:$0xf]
    %v1227 = vld [vmem:[#allocation5 + $0xb4] sm:$0xff]
    %v1228 = vld [vmem:[#allocation5 + $0xbc] sm:$0xf]
    %v1261 = vunpack.c.l.b16 %v1197
    %v1262 = vunpack.c.h.b16 %v1197
    %v1263 = vunpack.c.l.b16 %v1198
    %v1264 = vunpack.c.l.b16 %v1199
    %v1265 = vunpack.c.h.b16 %v1199
    %v1266 = vunpack.c.l.b16 %v1200
    %v1267 = vunpack.c.l.b16 %v1201
    %v1268 = vunpack.c.h.b16 %v1201
    %v1269 = vunpack.c.l.b16 %v1202
    %v1270 = vunpack.c.l.b16 %v1203
    %v1271 = vunpack.c.h.b16 %v1203
    %v1272 = vunpack.c.l.b16 %v1204
    %v1273 = vunpack.c.l.b16 %v1205
    %v1274 = vunpack.c.h.b16 %v1205
    %v1275 = vunpack.c.l.b16 %v1206
    %v1276 = vunpack.c.l.b16 %v1207
    %v1277 = vunpack.c.h.b16 %v1207
    %v1278 = vunpack.c.l.b16 %v1208
    %v1279 = vunpack.c.l.b16 %v1209
    %v1280 = vunpack.c.h.b16 %v1209
    %v1281 = vunpack.c.l.b16 %v1210
    %v1282 = vunpack.c.l.b16 %v1211
    %v1283 = vunpack.c.h.b16 %v1211
    %v1284 = vunpack.c.l.b16 %v1212
    %v1285 = vunpack.c.l.b16 %v1213
    %v1286 = vunpack.c.h.b16 %v1213
    %v1287 = vunpack.c.l.b16 %v1214
    %v1288 = vunpack.c.l.b16 %v1215
    %v1289 = vunpack.c.h.b16 %v1215
    %v1290 = vunpack.c.l.b16 %v1216
    %v1291 = vunpack.c.l.b16 %v1217
    %v1292 = vunpack.c.h.b16 %v1217
    %v1293 = vunpack.c.l.b16 %v1218
    %v1294 = vunpack.c.l.b16 %v1219
    %v1295 = vunpack.c.h.b16 %v1219
    %v1296 = vunpack.c.l.b16 %v1220
    %v1297 = vunpack.c.l.b16 %v1221
    %v1298 = vunpack.c.h.b16 %v1221
    %v1299 = vunpack.c.l.b16 %v1222
    %v1300 = vunpack.c.l.b16 %v1223
    %v1301 = vunpack.c.h.b16 %v1223
    %v1302 = vunpack.c.l.b16 %v1224
    %v1303 = vunpack.c.l.b16 %v1225
    %v1304 = vunpack.c.h.b16 %v1225
    %v1305 = vunpack.c.l.b16 %v1226
    %v1306 = vunpack.c.l.b16 %v1227
    %v1307 = vunpack.c.h.b16 %v1227
    %v1308 = vunpack.c.l.b16 %v1228
    %v1309 = vpack.c.b16 %v1264, %v1261
    %v1310 = vpack.c.b16 %v1265, %v1262
    %v1311 = vpack.c.b16 %v1266, %v1263
    %v1312 = vpack.c.b16 %v1270, %v1267
    %v1313 = vpack.c.b16 %v1271, %v1268
    %v1314 = vpack.c.b16 %v1272, %v1269
    %v1315 = vpack.c.b16 %v1276, %v1273
    %v1316 = vpack.c.b16 %v1277, %v1274
    %v1317 = vpack.c.b16 %v1278, %v1275
    %v1318 = vpack.c.b16 %v1282, %v1279
    %v1319 = vpack.c.b16 %v1283, %v1280
    %v1320 = vpack.c.b16 %v1284, %v1281
    %v1321 = vpack.c.b16 %v1288, %v1285
    %v1322 = vpack.c.b16 %v1289, %v1286
    %v1323 = vpack.c.b16 %v1290, %v1287
    %v1324 = vpack.c.b16 %v1294, %v1291
    %v1325 = vpack.c.b16 %v1295, %v1292
    %v1326 = vpack.c.b16 %v1296, %v1293
    %v1327 = vpack.c.b16 %v1300, %v1297
    %v1328 = vpack.c.b16 %v1301, %v1298
    %v1329 = vpack.c.b16 %v1302, %v1299
    %v1330 = vpack.c.b16 %v1306, %v1303
    %v1331 = vpack.c.b16 %v1307, %v1304
    %v1332 = vpack.c.b16 %v1308, %v1305
    %1357 = vmatprep.subr.bf16.mxu0 %v1331
    %1358 = vmatpush1.bf16.msra.mxu0 %v1330
    %1359 = vmatprep.subr.bf16.mxu0 %v1328
    %1360 = vmatpush1.bf16.msra.mxu0 %v1327
    %1361 = vmatprep.subr.bf16.mxu0 %v1325
    %1362 = vmatpush1.bf16.msra.mxu0 %v1324
    %1363 = vmatprep.subr.bf16.mxu0 %v1322
    %1364 = vmatpush1.bf16.msra.mxu0 %v1321
    %1365 = vmatprep.subr.bf16.mxu0 %v1319
    %1366 = vmatpush1.bf16.msra.mxu0 %v1318
    %1367 = vmatprep.subr.bf16.mxu0 %v1316
    %1368 = vmatpush1.bf16.msra.mxu0 %v1315
    %1369 = vmatprep.subr.bf16.mxu0 %v1313
    %1370 = vmatpush1.bf16.msra.mxu0 %v1312
    %1371 = vmatprep.subr.bf16.mxu0 %v1310
    %1372 = vmatpush1.bf16.msra.mxu0 %v1309
    %1373 = vmatprep.subr.bf16.mxu0 0
    %1374 = vmatpush2.bf16.msra.mxu0 0
    %1375 = vmatprep.subr.bf16.mxu0 0
    %1376 = vmatpush2.bf16.msra.mxu0 0
    %1377 = vmatprep.subr.bf16.mxu0 0
    %1378 = vmatpush2.bf16.msra.mxu0 0
    %1379 = vmatprep.subr.bf16.mxu0 0
    %1380 = vmatpush2.bf16.msra.mxu0 0
    %1381 = vmatprep.subr.bf16.mxu0 0
    %1382 = vmatpush2.bf16.msra.mxu0 0
    %1383 = vmatprep.subr.bf16.mxu0 0
    %1384 = vmatpush2.bf16.msra.mxu0 0
    %1385 = vmatprep.subr.bf16.mxu0 0
    %1386 = vmatpush2.bf16.msra.mxu0 0
    %1387 = vmatprep.subr.bf16.mxu0 0
    %1388 = vmatpush2.bf16.msra.mxu0 0
    %1389 = vmatprep.mubr.bf16.mxu0 0
    %1390 = vmatmul.mubr.bf16.gmra.mxu0 %v1196
    %v1391 = vpop.f32.mrf.mxu0
    %v1392 = vadd.f32 0.0, %v1391
    %v1393 = vpop.f32.mrf.mxu0
    %v1394 = vadd.f32 0.0, %v1393
    %v1395 = vpop.f32.mrf.mxu0
    %v1396 = vpop.f32.mrf.mxu0
    %1397 = vdwg.mxu0
    %1398 = vmatprep.subr.bf16.mxu0 0
    %1399 = vmatpush1.bf16.msra.mxu0 %v1332
    %1400 = vmatprep.subr.bf16.mxu0 0
    %1401 = vmatpush1.bf16.msra.mxu0 %v1329
    %1402 = vmatprep.subr.bf16.mxu0 0
    %1403 = vmatpush1.bf16.msra.mxu0 %v1326
    %1404 = vmatprep.subr.bf16.mxu0 0
    %1405 = vmatpush1.bf16.msra.mxu0 %v1323
    %1406 = vmatprep.subr.bf16.mxu0 0
    %1407 = vmatpush1.bf16.msra.mxu0 %v1320
    %1408 = vmatprep.subr.bf16.mxu0 0
    %1409 = vmatpush1.bf16.msra.mxu0 %v1317
    %1410 = vmatprep.subr.bf16.mxu0 0
    %1411 = vmatpush1.bf16.msra.mxu0 %v1314
    %1412 = vmatprep.subr.bf16.mxu0 0
    %1413 = vmatpush1.bf16.msra.mxu0 %v1311
    %1414 = vmatprep.subr.bf16.mxu0 0
    %1415 = vmatpush2.bf16.msra.mxu0 0
    %1416 = vmatprep.subr.bf16.mxu0 0
    %1417 = vmatpush2.bf16.msra.mxu0 0
    %1418 = vmatprep.subr.bf16.mxu0 0
    %1419 = vmatpush2.bf16.msra.mxu0 0
    %1420 = vmatprep.subr.bf16.mxu0 0
    %1421 = vmatpush2.bf16.msra.mxu0 0
    %1422 = vmatprep.subr.bf16.mxu0 0
    %1423 = vmatpush2.bf16.msra.mxu0 0
    %1424 = vmatprep.subr.bf16.mxu0 0
    %1425 = vmatpush2.bf16.msra.mxu0 0
    %1426 = vmatprep.subr.bf16.mxu0 0
    %1427 = vmatpush2.bf16.msra.mxu0 0
    %1428 = vmatprep.subr.bf16.mxu0 0
    %1429 = vmatpush2.bf16.msra.mxu0 0
    %1430 = vmatprep.mubr.bf16.mxu0 0
    %1431 = vmatmul.mubr.bf16.gmra.mxu0 %v1196
    %v1432 = vpop.f32.mrf.mxu0
    %v1433 = vadd.f32 0.0, %v1432
    %v1434 = vpop.f32.mrf.mxu0
    %v1435 = vpop.f32.mrf.mxu0
    %v1436 = vpop.f32.mrf.mxu0
    %1437 = vdwg.mxu0
    %v1438 = vadd.f32 %v1193, %v1392
    %v1439 = vxor.u32 %v1438, 2147483648
    %v1440 = vmul.f32 %v1439, 1.442695
    %v1441 = vpow.pop %v1440
    %v1442 = vadd.f32 %v1441, 1.0
    %v1443 = vrcp.pop %v1442
    %v1444 = vmul.f32 1.0, %v1443
    %v1445 = vadd.f32 %v1194, %v1394
    %v1446 = vxor.u32 %v1445, 2147483648
    %v1447 = vmul.f32 %v1446, 1.442695
    %v1448 = vpow.pop %v1447
    %v1449 = vadd.f32 %v1448, 1.0
    %v1450 = vrcp.pop %v1449
    %v1451 = vmul.f32 1.0, %v1450
    %v1452 = vadd.f32 %v1433, %v62
    %v1453 = vmul.f32 %v1444, %v1452
    %v1454 = vadd.f32 %v1195, %v1453
    %v1455 = vtanh.pop %v1454
    %v1456 = vsub.f32 1.0, %v1451
    %v1457 = vmul.f32 %v1456, %v1455
    %v1458 = vmul.f32 %v1451, %v1189
    %v1459 = vadd.f32 %v1457, %v1458
    %s1460 = sadd.s32 %s56, 4
    %v1461 = vstv %s1460
    %vm1462 = vcmp.lt.s32.totalorder %v1461, %v55
    %v1463 = vsel %vm1462, 1, 0
    %1464 = vset.pattern.permute.xlu0 0
    %1465 = vperm.xlu0 %1464, %v1463
    %v1466 = vpop.permute.xlu0 %1465
    %vm1467 = vcmp.eq.s32.totalorder %v1466, 1
    %v1468 = vsel %vm1467, %v1459, 0.0
    %s1469 = scalar_lea.vmem [#allocation7], 32
    %1470 = vst [vmem:[%s1469] sm:$0xff] %v1468
    %v1471 = vsel %vm1467, %v1459, %v1189
    %s1472 = scalar_lea.vmem [#allocation2], 60
    %v1473 = vld [vmem:[%s1472] sm:$0xff]
    %v1474 = vld [vmem:[%s1472 + $0x8] sm:$0xf]
    %v1475 = vunpack.c.l.bf16 %v1473
    %v1476 = vunpack.c.h.bf16 %v1473
    %v1477 = vunpack.c.l.bf16 %v1474
    %v1478 = vpack.c.bf16 %v1471, %v1471
    %v1479 = vld [vmem:[#allocation5] sm:$0xff]
    %v1480 = vld [vmem:[#allocation5 + $0x8] sm:$0xf]
    %v1481 = vld [vmem:[#allocation5 + $0xc] sm:$0xff]
    %v1482 = vld [vmem:[#allocation5 + $0x14] sm:$0xf]
    %v1483 = vld [vmem:[#allocation5 + $0x18] sm:$0xff]
    %v1484 = vld [vmem:[#allocation5 + $0x20] sm:$0xf]
    %v1485 = vld [vmem:[#allocation5 + $0x24] sm:$0xff]
    %v1486 = vld [vmem:[#allocation5 + $0x2c] sm:$0xf]
    %v1487 = vld [vmem:[#allocation5 + $0x30] sm:$0xff]
    %v1488 = vld [vmem:[#allocation5 + $0x38] sm:$0xf]
    %v1489 = vld [vmem:[#allocation5 + $0x3c] sm:$0xff]
    %v1490 = vld [vmem:[#allocation5 + $0x44] sm:$0xf]
    %v1491 = vld [vmem:[#allocation5 + $0x48] sm:$0xff]
    %v1492 = vld [vmem:[#allocation5 + $0x50] sm:$0xf]
    %v1493 = vld [vmem:[#allocation5 + $0x54] sm:$0xff]
    %v1494 = vld [vmem:[#allocation5 + $0x5c] sm:$0xf]
    %v1495 = vld [vmem:[#allocation5 + $0x60] sm:$0xff]
    %v1496 = vld [vmem:[#allocation5 + $0x68] sm:$0xf]
    %v1497 = vld [vmem:[#allocation5 + $0x6c] sm:$0xff]
    %v1498 = vld [vmem:[#allocation5 + $0x74] sm:$0xf]
    %v1499 = vld [vmem:[#allocation5 + $0x78] sm:$0xff]
    %v1500 = vld [vmem:[#allocation5 + $0x80] sm:$0xf]
    %v1501 = vld [vmem:[#allocation5 + $0x84] sm:$0xff]
    %v1502 = vld [vmem:[#allocation5 + $0x8c] sm:$0xf]
    %v1503 = vld [vmem:[#allocation5 + $0x90] sm:$0xff]
    %v1504 = vld [vmem:[#allocation5 + $0x98] sm:$0xf]
    %v1505 = vld [vmem:[#allocation5 + $0x9c] sm:$0xff]
    %v1506 = vld [vmem:[#allocation5 + $0xa4] sm:$0xf]
    %v1507 = vld [vmem:[#allocation5 + $0xa8] sm:$0xff]
    %v1508 = vld [vmem:[#allocation5 + $0xb0] sm:$0xf]
    %v1509 = vld [vmem:[#allocation5 + $0xb4] sm:$0xff]
    %v1510 = vld [vmem:[#allocation5 + $0xbc] sm:$0xf]
    %v1543 = vunpack.c.l.b16 %v1479
    %v1544 = vunpack.c.h.b16 %v1479
    %v1545 = vunpack.c.l.b16 %v1480
    %v1546 = vunpack.c.l.b16 %v1481
    %v1547 = vunpack.c.h.b16 %v1481
    %v1548 = vunpack.c.l.b16 %v1482
    %v1549 = vunpack.c.l.b16 %v1483
    %v1550 = vunpack.c.h.b16 %v1483
    %v1551 = vunpack.c.l.b16 %v1484
    %v1552 = vunpack.c.l.b16 %v1485
    %v1553 = vunpack.c.h.b16 %v1485
    %v1554 = vunpack.c.l.b16 %v1486
    %v1555 = vunpack.c.l.b16 %v1487
    %v1556 = vunpack.c.h.b16 %v1487
    %v1557 = vunpack.c.l.b16 %v1488
    %v1558 = vunpack.c.l.b16 %v1489
    %v1559 = vunpack.c.h.b16 %v1489
    %v1560 = vunpack.c.l.b16 %v1490
    %v1561 = vunpack.c.l.b16 %v1491
    %v1562 = vunpack.c.h.b16 %v1491
    %v1563 = vunpack.c.l.b16 %v1492
    %v1564 = vunpack.c.l.b16 %v1493
    %v1565 = vunpack.c.h.b16 %v1493
    %v1566 = vunpack.c.l.b16 %v1494
    %v1567 = vunpack.c.l.b16 %v1495
    %v1568 = vunpack.c.h.b16 %v1495
    %v1569 = vunpack.c.l.b16 %v1496
    %v1570 = vunpack.c.l.b16 %v1497
    %v1571 = vunpack.c.h.b16 %v1497
    %v1572 = vunpack.c.l.b16 %v1498
    %v1573 = vunpack.c.l.b16 %v1499
    %v1574 = vunpack.c.h.b16 %v1499
    %v1575 = vunpack.c.l.b16 %v1500
    %v1576 = vunpack.c.l.b16 %v1501
    %v1577 = vunpack.c.h.b16 %v1501
    %v1578 = vunpack.c.l.b16 %v1502
    %v1579 = vunpack.c.l.b16 %v1503
    %v1580 = vunpack.c.h.b16 %v1503
    %v1581 = vunpack.c.l.b16 %v1504
    %v1582 = vunpack.c.l.b16 %v1505
    %v1583 = vunpack.c.h.b16 %v1505
    %v1584 = vunpack.c.l.b16 %v1506
    %v1585 = vunpack.c.l.b16 %v1507
    %v1586 = vunpack.c.h.b16 %v1507
    %v1587 = vunpack.c.l.b16 %v1508
    %v1588 = vunpack.c.l.b16 %v1509
    %v1589 = vunpack.c.h.b16 %v1509
    %v1590 = vunpack.c.l.b16 %v1510
    %v1591 = vpack.c.b16 %v1546, %v1543
    %v1592 = vpack.c.b16 %v1547, %v1544
    %v1593 = vpack.c.b16 %v1548, %v1545
    %v1594 = vpack.c.b16 %v1552, %v1549
    %v1595 = vpack.c.b16 %v1553, %v1550
    %v1596 = vpack.c.b16 %v1554, %v1551
    %v1597 = vpack.c.b16 %v1558, %v1555
    %v1598 = vpack.c.b16 %v1559, %v1556
    %v1599 = vpack.c.b16 %v1560, %v1557
    %v1600 = vpack.c.b16 %v1564, %v1561
    %v1601 = vpack.c.b16 %v1565, %v1562
    %v1602 = vpack.c.b16 %v1566, %v1563
    %v1603 = vpack.c.b16 %v1570, %v1567
    %v1604 = vpack.c.b16 %v1571, %v1568
    %v1605 = vpack.c.b16 %v1572, %v1569
    %v1606 = vpack.c.b16 %v1576, %v1573
    %v1607 = vpack.c.b16 %v1577, %v1574
    %v1608 = vpack.c.b16 %v1578, %v1575
    %v1609 = vpack.c.b16 %v1582, %v1579
    %v1610 = vpack.c.b16 %v1583, %v1580
    %v1611 = vpack.c.b16 %v1584, %v1581
    %v1612 = vpack.c.b16 %v1588, %v1585
    %v1613 = vpack.c.b16 %v1589, %v1586
    %v1614 = vpack.c.b16 %v1590, %v1587
    %1639 = vmatprep.subr.bf16.mxu0 %v1613
    %1640 = vmatpush1.bf16.msra.mxu0 %v1612
    %1641 = vmatprep.subr.bf16.mxu0 %v1610
    %1642 = vmatpush1.bf16.msra.mxu0 %v1609
    %1643 = vmatprep.subr.bf16.mxu0 %v1607
    %1644 = vmatpush1.bf16.msra.mxu0 %v1606
    %1645 = vmatprep.subr.bf16.mxu0 %v1604
    %1646 = vmatpush1.bf16.msra.mxu0 %v1603
    %1647 = vmatprep.subr.bf16.mxu0 %v1601
    %1648 = vmatpush1.bf16.msra.mxu0 %v1600
    %1649 = vmatprep.subr.bf16.mxu0 %v1598
    %1650 = vmatpush1.bf16.msra.mxu0 %v1597
    %1651 = vmatprep.subr.bf16.mxu0 %v1595
    %1652 = vmatpush1.bf16.msra.mxu0 %v1594
    %1653 = vmatprep.subr.bf16.mxu0 %v1592
    %1654 = vmatpush1.bf16.msra.mxu0 %v1591
    %1655 = vmatprep.subr.bf16.mxu0 0
    %1656 = vmatpush2.bf16.msra.mxu0 0
    %1657 = vmatprep.subr.bf16.mxu0 0
    %1658 = vmatpush2.bf16.msra.mxu0 0
    %1659 = vmatprep.subr.bf16.mxu0 0
    %1660 = vmatpush2.bf16.msra.mxu0 0
    %1661 = vmatprep.subr.bf16.mxu0 0
    %1662 = vmatpush2.bf16.msra.mxu0 0
    %1663 = vmatprep.subr.bf16.mxu0 0
    %1664 = vmatpush2.bf16.msra.mxu0 0
    %1665 = vmatprep.subr.bf16.mxu0 0
    %1666 = vmatpush2.bf16.msra.mxu0 0
    %1667 = vmatprep.subr.bf16.mxu0 0
    %1668 = vmatpush2.bf16.msra.mxu0 0
    %1669 = vmatprep.subr.bf16.mxu0 0
    %1670 = vmatpush2.bf16.msra.mxu0 0
    %1671 = vmatprep.mubr.bf16.mxu0 0
    %1672 = vmatmul.mubr.bf16.gmra.mxu0 %v1478
    %v1673 = vpop.f32.mrf.mxu0
    %v1674 = vadd.f32 0.0, %v1673
    %v1675 = vpop.f32.mrf.mxu0
    %v1676 = vadd.f32 0.0, %v1675
    %v1677 = vpop.f32.mrf.mxu0
    %v1678 = vpop.f32.mrf.mxu0
    %1679 = vdwg.mxu0
    %1680 = vmatprep.subr.bf16.mxu0 0
    %1681 = vmatpush1.bf16.msra.mxu0 %v1614
    %1682 = vmatprep.subr.bf16.mxu0 0
    %1683 = vmatpush1.bf16.msra.mxu0 %v1611
    %1684 = vmatprep.subr.bf16.mxu0 0
    %1685 = vmatpush1.bf16.msra.mxu0 %v1608
    %1686 = vmatprep.subr.bf16.mxu0 0
    %1687 = vmatpush1.bf16.msra.mxu0 %v1605
    %1688 = vmatprep.subr.bf16.mxu0 0
    %1689 = vmatpush1.bf16.msra.mxu0 %v1602
    %1690 = vmatprep.subr.bf16.mxu0 0
    %1691 = vmatpush1.bf16.msra.mxu0 %v1599
    %1692 = vmatprep.subr.bf16.mxu0 0
    %1693 = vmatpush1.bf16.msra.mxu0 %v1596
    %1694 = vmatprep.subr.bf16.mxu0 0
    %1695 = vmatpush1.bf16.msra.mxu0 %v1593
    %1696 = vmatprep.subr.bf16.mxu0 0
    %1697 = vmatpush2.bf16.msra.mxu0 0
    %1698 = vmatprep.subr.bf16.mxu0 0
    %1699 = vmatpush2.bf16.msra.mxu0 0
    %1700 = vmatprep.subr.bf16.mxu0 0
    %1701 = vmatpush2.bf16.msra.mxu0 0
    %1702 = vmatprep.subr.bf16.mxu0 0
    %1703 = vmatpush2.bf16.msra.mxu0 0
    %1704 = vmatprep.subr.bf16.mxu0 0
    %1705 = vmatpush2.bf16.msra.mxu0 0
    %1706 = vmatprep.subr.bf16.mxu0 0
    %1707 = vmatpush2.bf16.msra.mxu0 0
    %1708 = vmatprep.subr.bf16.mxu0 0
    %1709 = vmatpush2.bf16.msra.mxu0 0
    %1710 = vmatprep.subr.bf16.mxu0 0
    %1711 = vmatpush2.bf16.msra.mxu0 0
    %1712 = vmatprep.mubr.bf16.mxu0 0
    %1713 = vmatmul.mubr.bf16.gmra.mxu0 %v1478
    %v1714 = vpop.f32.mrf.mxu0
    %v1715 = vadd.f32 0.0, %v1714
    %v1716 = vpop.f32.mrf.mxu0
    %v1717 = vpop.f32.mrf.mxu0
    %v1718 = vpop.f32.mrf.mxu0
    %1719 = vdwg.mxu0
    %v1720 = vadd.f32 %v1475, %v1674
    %v1721 = vxor.u32 %v1720, 2147483648
    %v1722 = vmul.f32 %v1721, 1.442695
    %v1723 = vpow.pop %v1722
    %v1724 = vadd.f32 %v1723, 1.0
    %v1725 = vrcp.pop %v1724
    %v1726 = vmul.f32 1.0, %v1725
    %v1727 = vadd.f32 %v1476, %v1676
    %v1728 = vxor.u32 %v1727, 2147483648
    %v1729 = vmul.f32 %v1728, 1.442695
    %v1730 = vpow.pop %v1729
    %v1731 = vadd.f32 %v1730, 1.0
    %v1732 = vrcp.pop %v1731
    %v1733 = vmul.f32 1.0, %v1732
    %v1734 = vadd.f32 %v1715, %v62
    %v1735 = vmul.f32 %v1726, %v1734
    %v1736 = vadd.f32 %v1477, %v1735
    %v1737 = vtanh.pop %v1736
    %v1738 = vsub.f32 1.0, %v1733
    %v1739 = vmul.f32 %v1738, %v1737
    %v1740 = vmul.f32 %v1733, %v1471
    %v1741 = vadd.f32 %v1739, %v1740
    %s1742 = sadd.s32 %s56, 5
    %v1743 = vstv %s1742
    %vm1744 = vcmp.lt.s32.totalorder %v1743, %v55
    %v1745 = vsel %vm1744, 1, 0
    %1746 = vset.pattern.permute.xlu0 0
    %1747 = vperm.xlu0 %1746, %v1745
    %v1748 = vpop.permute.xlu0 %1747
    %vm1749 = vcmp.eq.s32.totalorder %v1748, 1
    %v1750 = vsel %vm1749, %v1741, 0.0
    %s1751 = scalar_lea.vmem [#allocation7], 40
    %1752 = vst [vmem:[%s1751] sm:$0xff] %v1750
    %v1753 = vsel %vm1749, %v1741, %v1471
    %s1754 = scalar_lea.vmem [#allocation2], 72
    %v1755 = vld [vmem:[%s1754] sm:$0xff]
    %v1756 = vld [vmem:[%s1754 + $0x8] sm:$0xf]
    %v1757 = vunpack.c.l.bf16 %v1755
    %v1758 = vunpack.c.h.bf16 %v1755
    %v1759 = vunpack.c.l.bf16 %v1756
    %v1760 = vpack.c.bf16 %v1753, %v1753
    %v1761 = vld [vmem:[#allocation5] sm:$0xff]
    %v1762 = vld [vmem:[#allocation5 + $0x8] sm:$0xf]
    %v1763 = vld [vmem:[#allocation5 + $0xc] sm:$0xff]
    %v1764 = vld [vmem:[#allocation5 + $0x14] sm:$0xf]
    %v1765 = vld [vmem:[#allocation5 + $0x18] sm:$0xff]
    %v1766 = vld [vmem:[#allocation5 + $0x20] sm:$0xf]
    %v1767 = vld [vmem:[#allocation5 + $0x24] sm:$0xff]
    %v1768 = vld [vmem:[#allocation5 + $0x2c] sm:$0xf]
    %v1769 = vld [vmem:[#allocation5 + $0x30] sm:$0xff]
    %v1770 = vld [vmem:[#allocation5 + $0x38] sm:$0xf]
    %v1771 = vld [vmem:[#allocation5 + $0x3c] sm:$0xff]
    %v1772 = vld [vmem:[#allocation5 + $0x44] sm:$0xf]
    %v1773 = vld [vmem:[#allocation5 + $0x48] sm:$0xff]
    %v1774 = vld [vmem:[#allocation5 + $0x50] sm:$0xf]
    %v1775 = vld [vmem:[#allocation5 + $0x54] sm:$0xff]
    %v1776 = vld [vmem:[#allocation5 + $0x5c] sm:$0xf]
    %v1777 = vld [vmem:[#allocation5 + $0x60] sm:$0xff]
    %v1778 = vld [vmem:[#allocation5 + $0x68] sm:$0xf]
    %v1779 = vld [vmem:[#allocation5 + $0x6c] sm:$0xff]
    %v1780 = vld [vmem:[#allocation5 + $0x74] sm:$0xf]
    %v1781 = vld [vmem:[#allocation5 + $0x78] sm:$0xff]
    %v1782 = vld [vmem:[#allocation5 + $0x80] sm:$0xf]
    %v1783 = vld [vmem:[#allocation5 + $0x84] sm:$0xff]
    %v1784 = vld [vmem:[#allocation5 + $0x8c] sm:$0xf]
    %v1785 = vld [vmem:[#allocation5 + $0x90] sm:$0xff]
    %v1786 = vld [vmem:[#allocation5 + $0x98] sm:$0xf]
    %v1787 = vld [vmem:[#allocation5 + $0x9c] sm:$0xff]
    %v1788 = vld [vmem:[#allocation5 + $0xa4] sm:$0xf]
    %v1789 = vld [vmem:[#allocation5 + $0xa8] sm:$0xff]
    %v1790 = vld [vmem:[#allocation5 + $0xb0] sm:$0xf]
    %v1791 = vld [vmem:[#allocation5 + $0xb4] sm:$0xff]
    %v1792 = vld [vmem:[#allocation5 + $0xbc] sm:$0xf]
    %v1825 = vunpack.c.l.b16 %v1761
    %v1826 = vunpack.c.h.b16 %v1761
    %v1827 = vunpack.c.l.b16 %v1762
    %v1828 = vunpack.c.l.b16 %v1763
    %v1829 = vunpack.c.h.b16 %v1763
    %v1830 = vunpack.c.l.b16 %v1764
    %v1831 = vunpack.c.l.b16 %v1765
    %v1832 = vunpack.c.h.b16 %v1765
    %v1833 = vunpack.c.l.b16 %v1766
    %v1834 = vunpack.c.l.b16 %v1767
    %v1835 = vunpack.c.h.b16 %v1767
    %v1836 = vunpack.c.l.b16 %v1768
    %v1837 = vunpack.c.l.b16 %v1769
    %v1838 = vunpack.c.h.b16 %v1769
    %v1839 = vunpack.c.l.b16 %v1770
    %v1840 = vunpack.c.l.b16 %v1771
    %v1841 = vunpack.c.h.b16 %v1771
    %v1842 = vunpack.c.l.b16 %v1772
    %v1843 = vunpack.c.l.b16 %v1773
    %v1844 = vunpack.c.h.b16 %v1773
    %v1845 = vunpack.c.l.b16 %v1774
    %v1846 = vunpack.c.l.b16 %v1775
    %v1847 = vunpack.c.h.b16 %v1775
    %v1848 = vunpack.c.l.b16 %v1776
    %v1849 = vunpack.c.l.b16 %v1777
    %v1850 = vunpack.c.h.b16 %v1777
    %v1851 = vunpack.c.l.b16 %v1778
    %v1852 = vunpack.c.l.b16 %v1779
    %v1853 = vunpack.c.h.b16 %v1779
    %v1854 = vunpack.c.l.b16 %v1780
    %v1855 = vunpack.c.l.b16 %v1781
    %v1856 = vunpack.c.h.b16 %v1781
    %v1857 = vunpack.c.l.b16 %v1782
    %v1858 = vunpack.c.l.b16 %v1783
    %v1859 = vunpack.c.h.b16 %v1783
    %v1860 = vunpack.c.l.b16 %v1784
    %v1861 = vunpack.c.l.b16 %v1785
    %v1862 = vunpack.c.h.b16 %v1785
    %v1863 = vunpack.c.l.b16 %v1786
    %v1864 = vunpack.c.l.b16 %v1787
    %v1865 = vunpack.c.h.b16 %v1787
    %v1866 = vunpack.c.l.b16 %v1788
    %v1867 = vunpack.c.l.b16 %v1789
    %v1868 = vunpack.c.h.b16 %v1789
    %v1869 = vunpack.c.l.b16 %v1790
    %v1870 = vunpack.c.l.b16 %v1791
    %v1871 = vunpack.c.h.b16 %v1791
    %v1872 = vunpack.c.l.b16 %v1792
    %v1873 = vpack.c.b16 %v1828, %v1825
    %v1874 = vpack.c.b16 %v1829, %v1826
    %v1875 = vpack.c.b16 %v1830, %v1827
    %v1876 = vpack.c.b16 %v1834, %v1831
    %v1877 = vpack.c.b16 %v1835, %v1832
    %v1878 = vpack.c.b16 %v1836, %v1833
    %v1879 = vpack.c.b16 %v1840, %v1837
    %v1880 = vpack.c.b16 %v1841, %v1838
    %v1881 = vpack.c.b16 %v1842, %v1839
    %v1882 = vpack.c.b16 %v1846, %v1843
    %v1883 = vpack.c.b16 %v1847, %v1844
    %v1884 = vpack.c.b16 %v1848, %v1845
    %v1885 = vpack.c.b16 %v1852, %v1849
    %v1886 = vpack.c.b16 %v1853, %v1850
    %v1887 = vpack.c.b16 %v1854, %v1851
    %v1888 = vpack.c.b16 %v1858, %v1855
    %v1889 = vpack.c.b16 %v1859, %v1856
    %v1890 = vpack.c.b16 %v1860, %v1857
    %v1891 = vpack.c.b16 %v1864, %v1861
    %v1892 = vpack.c.b16 %v1865, %v1862
    %v1893 = vpack.c.b16 %v1866, %v1863
    %v1894 = vpack.c.b16 %v1870, %v1867
    %v1895 = vpack.c.b16 %v1871, %v1868
    %v1896 = vpack.c.b16 %v1872, %v1869
    %1921 = vmatprep.subr.bf16.mxu0 %v1895
    %1922 = vmatpush1.bf16.msra.mxu0 %v1894
    %1923 = vmatprep.subr.bf16.mxu0 %v1892
    %1924 = vmatpush1.bf16.msra.mxu0 %v1891
    %1925 = vmatprep.subr.bf16.mxu0 %v1889
    %1926 = vmatpush1.bf16.msra.mxu0 %v1888
    %1927 = vmatprep.subr.bf16.mxu0 %v1886
    %1928 = vmatpush1.bf16.msra.mxu0 %v1885
    %1929 = vmatprep.subr.bf16.mxu0 %v1883
    %1930 = vmatpush1.bf16.msra.mxu0 %v1882
    %1931 = vmatprep.subr.bf16.mxu0 %v1880
    %1932 = vmatpush1.bf16.msra.mxu0 %v1879
    %1933 = vmatprep.subr.bf16.mxu0 %v1877
    %1934 = vmatpush1.bf16.msra.mxu0 %v1876
    %1935 = vmatprep.subr.bf16.mxu0 %v1874
    %1936 = vmatpush1.bf16.msra.mxu0 %v1873
    %1937 = vmatprep.subr.bf16.mxu0 0
    %1938 = vmatpush2.bf16.msra.mxu0 0
    %1939 = vmatprep.subr.bf16.mxu0 0
    %1940 = vmatpush2.bf16.msra.mxu0 0
    %1941 = vmatprep.subr.bf16.mxu0 0
    %1942 = vmatpush2.bf16.msra.mxu0 0
    %1943 = vmatprep.subr.bf16.mxu0 0
    %1944 = vmatpush2.bf16.msra.mxu0 0
    %1945 = vmatprep.subr.bf16.mxu0 0
    %1946 = vmatpush2.bf16.msra.mxu0 0
    %1947 = vmatprep.subr.bf16.mxu0 0
    %1948 = vmatpush2.bf16.msra.mxu0 0
    %1949 = vmatprep.subr.bf16.mxu0 0
    %1950 = vmatpush2.bf16.msra.mxu0 0
    %1951 = vmatprep.subr.bf16.mxu0 0
    %1952 = vmatpush2.bf16.msra.mxu0 0
    %1953 = vmatprep.mubr.bf16.mxu0 0
    %1954 = vmatmul.mubr.bf16.gmra.mxu0 %v1760
    %v1955 = vpop.f32.mrf.mxu0
    %v1956 = vadd.f32 0.0, %v1955
    %v1957 = vpop.f32.mrf.mxu0
    %v1958 = vadd.f32 0.0, %v1957
    %v1959 = vpop.f32.mrf.mxu0
    %v1960 = vpop.f32.mrf.mxu0
    %1961 = vdwg.mxu0
    %1962 = vmatprep.subr.bf16.mxu0 0
    %1963 = vmatpush1.bf16.msra.mxu0 %v1896
    %1964 = vmatprep.subr.bf16.mxu0 0
    %1965 = vmatpush1.bf16.msra.mxu0 %v1893
    %1966 = vmatprep.subr.bf16.mxu0 0
    %1967 = vmatpush1.bf16.msra.mxu0 %v1890
    %1968 = vmatprep.subr.bf16.mxu0 0
    %1969 = vmatpush1.bf16.msra.mxu0 %v1887
    %1970 = vmatprep.subr.bf16.mxu0 0
    %1971 = vmatpush1.bf16.msra.mxu0 %v1884
    %1972 = vmatprep.subr.bf16.mxu0 0
    %1973 = vmatpush1.bf16.msra.mxu0 %v1881
    %1974 = vmatprep.subr.bf16.mxu0 0
    %1975 = vmatpush1.bf16.msra.mxu0 %v1878
    %1976 = vmatprep.subr.bf16.mxu0 0
    %1977 = vmatpush1.bf16.msra.mxu0 %v1875
    %1978 = vmatprep.subr.bf16.mxu0 0
    %1979 = vmatpush2.bf16.msra.mxu0 0
    %1980 = vmatprep.subr.bf16.mxu0 0
    %1981 = vmatpush2.bf16.msra.mxu0 0
    %1982 = vmatprep.subr.bf16.mxu0 0
    %1983 = vmatpush2.bf16.msra.mxu0 0
    %1984 = vmatprep.subr.bf16.mxu0 0
    %1985 = vmatpush2.bf16.msra.mxu0 0
    %1986 = vmatprep.subr.bf16.mxu0 0
    %1987 = vmatpush2.bf16.msra.mxu0 0
    %1988 = vmatprep.subr.bf16.mxu0 0
    %1989 = vmatpush2.bf16.msra.mxu0 0
    %1990 = vmatprep.subr.bf16.mxu0 0
    %1991 = vmatpush2.bf16.msra.mxu0 0
    %1992 = vmatprep.subr.bf16.mxu0 0
    %1993 = vmatpush2.bf16.msra.mxu0 0
    %1994 = vmatprep.mubr.bf16.mxu0 0
    %1995 = vmatmul.mubr.bf16.gmra.mxu0 %v1760
    %v1996 = vpop.f32.mrf.mxu0
    %v1997 = vadd.f32 0.0, %v1996
    %v1998 = vpop.f32.mrf.mxu0
    %v1999 = vpop.f32.mrf.mxu0
    %v2000 = vpop.f32.mrf.mxu0
    %2001 = vdwg.mxu0
    %v2002 = vadd.f32 %v1757, %v1956
    %v2003 = vxor.u32 %v2002, 2147483648
    %v2004 = vmul.f32 %v2003, 1.442695
    %v2005 = vpow.pop %v2004
    %v2006 = vadd.f32 %v2005, 1.0
    %v2007 = vrcp.pop %v2006
    %v2008 = vmul.f32 1.0, %v2007
    %v2009 = vadd.f32 %v1758, %v1958
    %v2010 = vxor.u32 %v2009, 2147483648
    %v2011 = vmul.f32 %v2010, 1.442695
    %v2012 = vpow.pop %v2011
    %v2013 = vadd.f32 %v2012, 1.0
    %v2014 = vrcp.pop %v2013
    %v2015 = vmul.f32 1.0, %v2014
    %v2016 = vadd.f32 %v1997, %v62
    %v2017 = vmul.f32 %v2008, %v2016
    %v2018 = vadd.f32 %v1759, %v2017
    %v2019 = vtanh.pop %v2018
    %v2020 = vsub.f32 1.0, %v2015
    %v2021 = vmul.f32 %v2020, %v2019
    %v2022 = vmul.f32 %v2015, %v1753
    %v2023 = vadd.f32 %v2021, %v2022
    %s2024 = sadd.s32 %s56, 6
    %v2025 = vstv %s2024
    %vm2026 = vcmp.lt.s32.totalorder %v2025, %v55
    %v2027 = vsel %vm2026, 1, 0
    %2028 = vset.pattern.permute.xlu0 0
    %2029 = vperm.xlu0 %2028, %v2027
    %v2030 = vpop.permute.xlu0 %2029
    %vm2031 = vcmp.eq.s32.totalorder %v2030, 1
    %v2032 = vsel %vm2031, %v2023, 0.0
    %s2033 = scalar_lea.vmem [#allocation7], 48
    %2034 = vst [vmem:[%s2033] sm:$0xff] %v2032
    %v2035 = vsel %vm2031, %v2023, %v1753
    %s2036 = scalar_lea.vmem [#allocation2], 84
    %v2037 = vld [vmem:[%s2036] sm:$0xff]
    %v2038 = vld [vmem:[%s2036 + $0x8] sm:$0xf]
    %v2039 = vunpack.c.l.bf16 %v2037
    %v2040 = vunpack.c.h.bf16 %v2037
    %v2041 = vunpack.c.l.bf16 %v2038
    %v2042 = vpack.c.bf16 %v2035, %v2035
    %v2043 = vld [vmem:[#allocation5] sm:$0xff]
    %v2044 = vld [vmem:[#allocation5 + $0x8] sm:$0xf]
    %v2045 = vld [vmem:[#allocation5 + $0xc] sm:$0xff]
    %v2046 = vld [vmem:[#allocation5 + $0x14] sm:$0xf]
    %v2047 = vld [vmem:[#allocation5 + $0x18] sm:$0xff]
    %v2048 = vld [vmem:[#allocation5 + $0x20] sm:$0xf]
    %v2049 = vld [vmem:[#allocation5 + $0x24] sm:$0xff]
    %v2050 = vld [vmem:[#allocation5 + $0x2c] sm:$0xf]
    %v2051 = vld [vmem:[#allocation5 + $0x30] sm:$0xff]
    %v2052 = vld [vmem:[#allocation5 + $0x38] sm:$0xf]
    %v2053 = vld [vmem:[#allocation5 + $0x3c] sm:$0xff]
    %v2054 = vld [vmem:[#allocation5 + $0x44] sm:$0xf]
    %v2055 = vld [vmem:[#allocation5 + $0x48] sm:$0xff]
    %v2056 = vld [vmem:[#allocation5 + $0x50] sm:$0xf]
    %v2057 = vld [vmem:[#allocation5 + $0x54] sm:$0xff]
    %v2058 = vld [vmem:[#allocation5 + $0x5c] sm:$0xf]
    %v2059 = vld [vmem:[#allocation5 + $0x60] sm:$0xff]
    %v2060 = vld [vmem:[#allocation5 + $0x68] sm:$0xf]
    %v2061 = vld [vmem:[#allocation5 + $0x6c] sm:$0xff]
    %v2062 = vld [vmem:[#allocation5 + $0x74] sm:$0xf]
    %v2063 = vld [vmem:[#allocation5 + $0x78] sm:$0xff]
    %v2064 = vld [vmem:[#allocation5 + $0x80] sm:$0xf]
    %v2065 = vld [vmem:[#allocation5 + $0x84] sm:$0xff]
    %v2066 = vld [vmem:[#allocation5 + $0x8c] sm:$0xf]
    %v2067 = vld [vmem:[#allocation5 + $0x90] sm:$0xff]
    %v2068 = vld [vmem:[#allocation5 + $0x98] sm:$0xf]
    %v2069 = vld [vmem:[#allocation5 + $0x9c] sm:$0xff]
    %v2070 = vld [vmem:[#allocation5 + $0xa4] sm:$0xf]
    %v2071 = vld [vmem:[#allocation5 + $0xa8] sm:$0xff]
    %v2072 = vld [vmem:[#allocation5 + $0xb0] sm:$0xf]
    %v2073 = vld [vmem:[#allocation5 + $0xb4] sm:$0xff]
    %v2074 = vld [vmem:[#allocation5 + $0xbc] sm:$0xf]
    %v2107 = vunpack.c.l.b16 %v2043
    %v2108 = vunpack.c.h.b16 %v2043
    %v2109 = vunpack.c.l.b16 %v2044
    %v2110 = vunpack.c.l.b16 %v2045
    %v2111 = vunpack.c.h.b16 %v2045
    %v2112 = vunpack.c.l.b16 %v2046
    %v2113 = vunpack.c.l.b16 %v2047
    %v2114 = vunpack.c.h.b16 %v2047
    %v2115 = vunpack.c.l.b16 %v2048
    %v2116 = vunpack.c.l.b16 %v2049
    %v2117 = vunpack.c.h.b16 %v2049
    %v2118 = vunpack.c.l.b16 %v2050
    %v2119 = vunpack.c.l.b16 %v2051
    %v2120 = vunpack.c.h.b16 %v2051
    %v2121 = vunpack.c.l.b16 %v2052
    %v2122 = vunpack.c.l.b16 %v2053
    %v2123 = vunpack.c.h.b16 %v2053
    %v2124 = vunpack.c.l.b16 %v2054
    %v2125 = vunpack.c.l.b16 %v2055
    %v2126 = vunpack.c.h.b16 %v2055
    %v2127 = vunpack.c.l.b16 %v2056
    %v2128 = vunpack.c.l.b16 %v2057
    %v2129 = vunpack.c.h.b16 %v2057
    %v2130 = vunpack.c.l.b16 %v2058
    %v2131 = vunpack.c.l.b16 %v2059
    %v2132 = vunpack.c.h.b16 %v2059
    %v2133 = vunpack.c.l.b16 %v2060
    %v2134 = vunpack.c.l.b16 %v2061
    %v2135 = vunpack.c.h.b16 %v2061
    %v2136 = vunpack.c.l.b16 %v2062
    %v2137 = vunpack.c.l.b16 %v2063
    %v2138 = vunpack.c.h.b16 %v2063
    %v2139 = vunpack.c.l.b16 %v2064
    %v2140 = vunpack.c.l.b16 %v2065
    %v2141 = vunpack.c.h.b16 %v2065
    %v2142 = vunpack.c.l.b16 %v2066
    %v2143 = vunpack.c.l.b16 %v2067
    %v2144 = vunpack.c.h.b16 %v2067
    %v2145 = vunpack.c.l.b16 %v2068
    %v2146 = vunpack.c.l.b16 %v2069
    %v2147 = vunpack.c.h.b16 %v2069
    %v2148 = vunpack.c.l.b16 %v2070
    %v2149 = vunpack.c.l.b16 %v2071
    %v2150 = vunpack.c.h.b16 %v2071
    %v2151 = vunpack.c.l.b16 %v2072
    %v2152 = vunpack.c.l.b16 %v2073
    %v2153 = vunpack.c.h.b16 %v2073
    %v2154 = vunpack.c.l.b16 %v2074
    %v2155 = vpack.c.b16 %v2110, %v2107
    %v2156 = vpack.c.b16 %v2111, %v2108
    %v2157 = vpack.c.b16 %v2112, %v2109
    %v2158 = vpack.c.b16 %v2116, %v2113
    %v2159 = vpack.c.b16 %v2117, %v2114
    %v2160 = vpack.c.b16 %v2118, %v2115
    %v2161 = vpack.c.b16 %v2122, %v2119
    %v2162 = vpack.c.b16 %v2123, %v2120
    %v2163 = vpack.c.b16 %v2124, %v2121
    %v2164 = vpack.c.b16 %v2128, %v2125
    %v2165 = vpack.c.b16 %v2129, %v2126
    %v2166 = vpack.c.b16 %v2130, %v2127
    %v2167 = vpack.c.b16 %v2134, %v2131
    %v2168 = vpack.c.b16 %v2135, %v2132
    %v2169 = vpack.c.b16 %v2136, %v2133
    %v2170 = vpack.c.b16 %v2140, %v2137
    %v2171 = vpack.c.b16 %v2141, %v2138
    %v2172 = vpack.c.b16 %v2142, %v2139
    %v2173 = vpack.c.b16 %v2146, %v2143
    %v2174 = vpack.c.b16 %v2147, %v2144
    %v2175 = vpack.c.b16 %v2148, %v2145
    %v2176 = vpack.c.b16 %v2152, %v2149
    %v2177 = vpack.c.b16 %v2153, %v2150
    %v2178 = vpack.c.b16 %v2154, %v2151
    %2203 = vmatprep.subr.bf16.mxu0 %v2177
    %2204 = vmatpush1.bf16.msra.mxu0 %v2176
    %2205 = vmatprep.subr.bf16.mxu0 %v2174
    %2206 = vmatpush1.bf16.msra.mxu0 %v2173
    %2207 = vmatprep.subr.bf16.mxu0 %v2171
    %2208 = vmatpush1.bf16.msra.mxu0 %v2170
    %2209 = vmatprep.subr.bf16.mxu0 %v2168
    %2210 = vmatpush1.bf16.msra.mxu0 %v2167
    %2211 = vmatprep.subr.bf16.mxu0 %v2165
    %2212 = vmatpush1.bf16.msra.mxu0 %v2164
    %2213 = vmatprep.subr.bf16.mxu0 %v2162
    %2214 = vmatpush1.bf16.msra.mxu0 %v2161
    %2215 = vmatprep.subr.bf16.mxu0 %v2159
    %2216 = vmatpush1.bf16.msra.mxu0 %v2158
    %2217 = vmatprep.subr.bf16.mxu0 %v2156
    %2218 = vmatpush1.bf16.msra.mxu0 %v2155
    %2219 = vmatprep.subr.bf16.mxu0 0
    %2220 = vmatpush2.bf16.msra.mxu0 0
    %2221 = vmatprep.subr.bf16.mxu0 0
    %2222 = vmatpush2.bf16.msra.mxu0 0
    %2223 = vmatprep.subr.bf16.mxu0 0
    %2224 = vmatpush2.bf16.msra.mxu0 0
    %2225 = vmatprep.subr.bf16.mxu0 0
    %2226 = vmatpush2.bf16.msra.mxu0 0
    %2227 = vmatprep.subr.bf16.mxu0 0
    %2228 = vmatpush2.bf16.msra.mxu0 0
    %2229 = vmatprep.subr.bf16.mxu0 0
    %2230 = vmatpush2.bf16.msra.mxu0 0
    %2231 = vmatprep.subr.bf16.mxu0 0
    %2232 = vmatpush2.bf16.msra.mxu0 0
    %2233 = vmatprep.subr.bf16.mxu0 0
    %2234 = vmatpush2.bf16.msra.mxu0 0
    %2235 = vmatprep.mubr.bf16.mxu0 0
    %2236 = vmatmul.mubr.bf16.gmra.mxu0 %v2042
    %v2237 = vpop.f32.mrf.mxu0
    %v2238 = vadd.f32 0.0, %v2237
    %v2239 = vpop.f32.mrf.mxu0
    %v2240 = vadd.f32 0.0, %v2239
    %v2241 = vpop.f32.mrf.mxu0
    %v2242 = vpop.f32.mrf.mxu0
    %2243 = vdwg.mxu0
    %2244 = vmatprep.subr.bf16.mxu0 0
    %2245 = vmatpush1.bf16.msra.mxu0 %v2178
    %2246 = vmatprep.subr.bf16.mxu0 0
    %2247 = vmatpush1.bf16.msra.mxu0 %v2175
    %2248 = vmatprep.subr.bf16.mxu0 0
    %2249 = vmatpush1.bf16.msra.mxu0 %v2172
    %2250 = vmatprep.subr.bf16.mxu0 0
    %2251 = vmatpush1.bf16.msra.mxu0 %v2169
    %2252 = vmatprep.subr.bf16.mxu0 0
    %2253 = vmatpush1.bf16.msra.mxu0 %v2166
    %2254 = vmatprep.subr.bf16.mxu0 0
    %2255 = vmatpush1.bf16.msra.mxu0 %v2163
    %2256 = vmatprep.subr.bf16.mxu0 0
    %2257 = vmatpush1.bf16.msra.mxu0 %v2160
    %2258 = vmatprep.subr.bf16.mxu0 0
    %2259 = vmatpush1.bf16.msra.mxu0 %v2157
    %2260 = vmatprep.subr.bf16.mxu0 0
    %2261 = vmatpush2.bf16.msra.mxu0 0
    %2262 = vmatprep.subr.bf16.mxu0 0
    %2263 = vmatpush2.bf16.msra.mxu0 0
    %2264 = vmatprep.subr.bf16.mxu0 0
    %2265 = vmatpush2.bf16.msra.mxu0 0
    %2266 = vmatprep.subr.bf16.mxu0 0
    %2267 = vmatpush2.bf16.msra.mxu0 0
    %2268 = vmatprep.subr.bf16.mxu0 0
    %2269 = vmatpush2.bf16.msra.mxu0 0
    %2270 = vmatprep.subr.bf16.mxu0 0
    %2271 = vmatpush2.bf16.msra.mxu0 0
    %2272 = vmatprep.subr.bf16.mxu0 0
    %2273 = vmatpush2.bf16.msra.mxu0 0
    %2274 = vmatprep.subr.bf16.mxu0 0
    %2275 = vmatpush2.bf16.msra.mxu0 0
    %2276 = vmatprep.mubr.bf16.mxu0 0
    %2277 = vmatmul.mubr.bf16.gmra.mxu0 %v2042
    %v2278 = vpop.f32.mrf.mxu0
    %v2279 = vadd.f32 0.0, %v2278
    %v2280 = vpop.f32.mrf.mxu0
    %v2281 = vpop.f32.mrf.mxu0
    %v2282 = vpop.f32.mrf.mxu0
    %2283 = vdwg.mxu0
    %v2284 = vadd.f32 %v2039, %v2238
    %v2285 = vxor.u32 %v2284, 2147483648
    %v2286 = vmul.f32 %v2285, 1.442695
    %v2287 = vpow.pop %v2286
    %v2288 = vadd.f32 %v2287, 1.0
    %v2289 = vrcp.pop %v2288
    %v2290 = vmul.f32 1.0, %v2289
    %v2291 = vadd.f32 %v2040, %v2240
    %v2292 = vxor.u32 %v2291, 2147483648
    %v2293 = vmul.f32 %v2292, 1.442695
    %v2294 = vpow.pop %v2293
    %v2295 = vadd.f32 %v2294, 1.0
    %v2296 = vrcp.pop %v2295
    %v2297 = vmul.f32 1.0, %v2296
    %v2298 = vadd.f32 %v2279, %v62
    %v2299 = vmul.f32 %v2290, %v2298
    %v2300 = vadd.f32 %v2041, %v2299
    %v2301 = vtanh.pop %v2300
    %v2302 = vsub.f32 1.0, %v2297
    %v2303 = vmul.f32 %v2302, %v2301
    %v2304 = vmul.f32 %v2297, %v2035
    %v2305 = vadd.f32 %v2303, %v2304
    %s2306 = sadd.s32 %s56, 7
    %v2307 = vstv %s2306
    %vm2308 = vcmp.lt.s32.totalorder %v2307, %v55
    %v2309 = vsel %vm2308, 1, 0
    %2310 = vset.pattern.permute.xlu0 0
    %2311 = vperm.xlu0 %2310, %v2309
    %v2312 = vpop.permute.xlu0 %2311
    %vm2313 = vcmp.eq.s32.totalorder %v2312, 1
    %v2314 = vsel %vm2313, %v2305, 0.0
    %s2315 = scalar_lea.vmem [#allocation7], 56
    %2316 = vst [vmem:[%s2315] sm:$0xff] %v2314
    %v2317 = vsel %vm2313, %v2305, %v2035
    %s2318 = scalar_lea.vmem [#allocation2], 96
    %v2319 = vld [vmem:[%s2318] sm:$0xff]
    %v2320 = vld [vmem:[%s2318 + $0x8] sm:$0xf]
    %v2321 = vunpack.c.l.bf16 %v2319
    %v2322 = vunpack.c.h.bf16 %v2319
    %v2323 = vunpack.c.l.bf16 %v2320
    %v2324 = vpack.c.bf16 %v2317, %v2317
    %v2325 = vld [vmem:[#allocation5] sm:$0xff]
    %v2326 = vld [vmem:[#allocation5 + $0x8] sm:$0xf]
    %v2327 = vld [vmem:[#allocation5 + $0xc] sm:$0xff]
    %v2328 = vld [vmem:[#allocation5 + $0x14] sm:$0xf]
    %v2329 = vld [vmem:[#allocation5 + $0x18] sm:$0xff]
    %v2330 = vld [vmem:[#allocation5 + $0x20] sm:$0xf]
    %v2331 = vld [vmem:[#allocation5 + $0x24] sm:$0xff]
    %v2332 = vld [vmem:[#allocation5 + $0x2c] sm:$0xf]
    %v2333 = vld [vmem:[#allocation5 + $0x30] sm:$0xff]
    %v2334 = vld [vmem:[#allocation5 + $0x38] sm:$0xf]
    %v2335 = vld [vmem:[#allocation5 + $0x3c] sm:$0xff]
    %v2336 = vld [vmem:[#allocation5 + $0x44] sm:$0xf]
    %v2337 = vld [vmem:[#allocation5 + $0x48] sm:$0xff]
    %v2338 = vld [vmem:[#allocation5 + $0x50] sm:$0xf]
    %v2339 = vld [vmem:[#allocation5 + $0x54] sm:$0xff]
    %v2340 = vld [vmem:[#allocation5 + $0x5c] sm:$0xf]
    %v2341 = vld [vmem:[#allocation5 + $0x60] sm:$0xff]
    %v2342 = vld [vmem:[#allocation5 + $0x68] sm:$0xf]
    %v2343 = vld [vmem:[#allocation5 + $0x6c] sm:$0xff]
    %v2344 = vld [vmem:[#allocation5 + $0x74] sm:$0xf]
    %v2345 = vld [vmem:[#allocation5 + $0x78] sm:$0xff]
    %v2346 = vld [vmem:[#allocation5 + $0x80] sm:$0xf]
    %v2347 = vld [vmem:[#allocation5 + $0x84] sm:$0xff]
    %v2348 = vld [vmem:[#allocation5 + $0x8c] sm:$0xf]
    %v2349 = vld [vmem:[#allocation5 + $0x90] sm:$0xff]
    %v2350 = vld [vmem:[#allocation5 + $0x98] sm:$0xf]
    %v2351 = vld [vmem:[#allocation5 + $0x9c] sm:$0xff]
    %v2352 = vld [vmem:[#allocation5 + $0xa4] sm:$0xf]
    %v2353 = vld [vmem:[#allocation5 + $0xa8] sm:$0xff]
    %v2354 = vld [vmem:[#allocation5 + $0xb0] sm:$0xf]
    %v2355 = vld [vmem:[#allocation5 + $0xb4] sm:$0xff]
    %v2356 = vld [vmem:[#allocation5 + $0xbc] sm:$0xf]
    %v2389 = vunpack.c.l.b16 %v2325
    %v2390 = vunpack.c.h.b16 %v2325
    %v2391 = vunpack.c.l.b16 %v2326
    %v2392 = vunpack.c.l.b16 %v2327
    %v2393 = vunpack.c.h.b16 %v2327
    %v2394 = vunpack.c.l.b16 %v2328
    %v2395 = vunpack.c.l.b16 %v2329
    %v2396 = vunpack.c.h.b16 %v2329
    %v2397 = vunpack.c.l.b16 %v2330
    %v2398 = vunpack.c.l.b16 %v2331
    %v2399 = vunpack.c.h.b16 %v2331
    %v2400 = vunpack.c.l.b16 %v2332
    %v2401 = vunpack.c.l.b16 %v2333
    %v2402 = vunpack.c.h.b16 %v2333
    %v2403 = vunpack.c.l.b16 %v2334
    %v2404 = vunpack.c.l.b16 %v2335
    %v2405 = vunpack.c.h.b16 %v2335
    %v2406 = vunpack.c.l.b16 %v2336
    %v2407 = vunpack.c.l.b16 %v2337
    %v2408 = vunpack.c.h.b16 %v2337
    %v2409 = vunpack.c.l.b16 %v2338
    %v2410 = vunpack.c.l.b16 %v2339
    %v2411 = vunpack.c.h.b16 %v2339
    %v2412 = vunpack.c.l.b16 %v2340
    %v2413 = vunpack.c.l.b16 %v2341
    %v2414 = vunpack.c.h.b16 %v2341
    %v2415 = vunpack.c.l.b16 %v2342
    %v2416 = vunpack.c.l.b16 %v2343
    %v2417 = vunpack.c.h.b16 %v2343
    %v2418 = vunpack.c.l.b16 %v2344
    %v2419 = vunpack.c.l.b16 %v2345
    %v2420 = vunpack.c.h.b16 %v2345
    %v2421 = vunpack.c.l.b16 %v2346
    %v2422 = vunpack.c.l.b16 %v2347
    %v2423 = vunpack.c.h.b16 %v2347
    %v2424 = vunpack.c.l.b16 %v2348
    %v2425 = vunpack.c.l.b16 %v2349
    %v2426 = vunpack.c.h.b16 %v2349
    %v2427 = vunpack.c.l.b16 %v2350
    %v2428 = vunpack.c.l.b16 %v2351
    %v2429 = vunpack.c.h.b16 %v2351
    %v2430 = vunpack.c.l.b16 %v2352
    %v2431 = vunpack.c.l.b16 %v2353
    %v2432 = vunpack.c.h.b16 %v2353
    %v2433 = vunpack.c.l.b16 %v2354
    %v2434 = vunpack.c.l.b16 %v2355
    %v2435 = vunpack.c.h.b16 %v2355
    %v2436 = vunpack.c.l.b16 %v2356
    %v2437 = vpack.c.b16 %v2392, %v2389
    %v2438 = vpack.c.b16 %v2393, %v2390
    %v2439 = vpack.c.b16 %v2394, %v2391
    %v2440 = vpack.c.b16 %v2398, %v2395
    %v2441 = vpack.c.b16 %v2399, %v2396
    %v2442 = vpack.c.b16 %v2400, %v2397
    %v2443 = vpack.c.b16 %v2404, %v2401
    %v2444 = vpack.c.b16 %v2405, %v2402
    %v2445 = vpack.c.b16 %v2406, %v2403
    %v2446 = vpack.c.b16 %v2410, %v2407
    %v2447 = vpack.c.b16 %v2411, %v2408
    %v2448 = vpack.c.b16 %v2412, %v2409
    %v2449 = vpack.c.b16 %v2416, %v2413
    %v2450 = vpack.c.b16 %v2417, %v2414
    %v2451 = vpack.c.b16 %v2418, %v2415
    %v2452 = vpack.c.b16 %v2422, %v2419
    %v2453 = vpack.c.b16 %v2423, %v2420
    %v2454 = vpack.c.b16 %v2424, %v2421
    %v2455 = vpack.c.b16 %v2428, %v2425
    %v2456 = vpack.c.b16 %v2429, %v2426
    %v2457 = vpack.c.b16 %v2430, %v2427
    %v2458 = vpack.c.b16 %v2434, %v2431
    %v2459 = vpack.c.b16 %v2435, %v2432
    %v2460 = vpack.c.b16 %v2436, %v2433
    %2485 = vmatprep.subr.bf16.mxu0 %v2459
    %2486 = vmatpush1.bf16.msra.mxu0 %v2458
    %2487 = vmatprep.subr.bf16.mxu0 %v2456
    %2488 = vmatpush1.bf16.msra.mxu0 %v2455
    %2489 = vmatprep.subr.bf16.mxu0 %v2453
    %2490 = vmatpush1.bf16.msra.mxu0 %v2452
    %2491 = vmatprep.subr.bf16.mxu0 %v2450
    %2492 = vmatpush1.bf16.msra.mxu0 %v2449
    %2493 = vmatprep.subr.bf16.mxu0 %v2447
    %2494 = vmatpush1.bf16.msra.mxu0 %v2446
    %2495 = vmatprep.subr.bf16.mxu0 %v2444
    %2496 = vmatpush1.bf16.msra.mxu0 %v2443
    %2497 = vmatprep.subr.bf16.mxu0 %v2441
    %2498 = vmatpush1.bf16.msra.mxu0 %v2440
    %2499 = vmatprep.subr.bf16.mxu0 %v2438
    %2500 = vmatpush1.bf16.msra.mxu0 %v2437
    %2501 = vmatprep.subr.bf16.mxu0 0
    %2502 = vmatpush2.bf16.msra.mxu0 0
    %2503 = vmatprep.subr.bf16.mxu0 0
    %2504 = vmatpush2.bf16.msra.mxu0 0
    %2505 = vmatprep.subr.bf16.mxu0 0
    %2506 = vmatpush2.bf16.msra.mxu0 0
    %2507 = vmatprep.subr.bf16.mxu0 0
    %2508 = vmatpush2.bf16.msra.mxu0 0
    %2509 = vmatprep.subr.bf16.mxu0 0
    %2510 = vmatpush2.bf16.msra.mxu0 0
    %2511 = vmatprep.subr.bf16.mxu0 0
    %2512 = vmatpush2.bf16.msra.mxu0 0
    %2513 = vmatprep.subr.bf16.mxu0 0
    %2514 = vmatpush2.bf16.msra.mxu0 0
    %2515 = vmatprep.subr.bf16.mxu0 0
    %2516 = vmatpush2.bf16.msra.mxu0 0
    %2517 = vmatprep.mubr.bf16.mxu0 0
    %2518 = vmatmul.mubr.bf16.gmra.mxu0 %v2324
    %v2519 = vpop.f32.mrf.mxu0
    %v2520 = vadd.f32 0.0, %v2519
    %v2521 = vpop.f32.mrf.mxu0
    %v2522 = vadd.f32 0.0, %v2521
    %v2523 = vpop.f32.mrf.mxu0
    %v2524 = vpop.f32.mrf.mxu0
    %2525 = vdwg.mxu0
    %2526 = vmatprep.subr.bf16.mxu0 0
    %2527 = vmatpush1.bf16.msra.mxu0 %v2460
    %2528 = vmatprep.subr.bf16.mxu0 0
    %2529 = vmatpush1.bf16.msra.mxu0 %v2457
    %2530 = vmatprep.subr.bf16.mxu0 0
    %2531 = vmatpush1.bf16.msra.mxu0 %v2454
    %2532 = vmatprep.subr.bf16.mxu0 0
    %2533 = vmatpush1.bf16.msra.mxu0 %v2451
    %2534 = vmatprep.subr.bf16.mxu0 0
    %2535 = vmatpush1.bf16.msra.mxu0 %v2448
    %2536 = vmatprep.subr.bf16.mxu0 0
    %2537 = vmatpush1.bf16.msra.mxu0 %v2445
    %2538 = vmatprep.subr.bf16.mxu0 0
    %2539 = vmatpush1.bf16.msra.mxu0 %v2442
    %2540 = vmatprep.subr.bf16.mxu0 0
    %2541 = vmatpush1.bf16.msra.mxu0 %v2439
    %2542 = vmatprep.subr.bf16.mxu0 0
    %2543 = vmatpush2.bf16.msra.mxu0 0
    %2544 = vmatprep.subr.bf16.mxu0 0
    %2545 = vmatpush2.bf16.msra.mxu0 0
    %2546 = vmatprep.subr.bf16.mxu0 0
    %2547 = vmatpush2.bf16.msra.mxu0 0
    %2548 = vmatprep.subr.bf16.mxu0 0
    %2549 = vmatpush2.bf16.msra.mxu0 0
    %2550 = vmatprep.subr.bf16.mxu0 0
    %2551 = vmatpush2.bf16.msra.mxu0 0
    %2552 = vmatprep.subr.bf16.mxu0 0
    %2553 = vmatpush2.bf16.msra.mxu0 0
    %2554 = vmatprep.subr.bf16.mxu0 0
    %2555 = vmatpush2.bf16.msra.mxu0 0
    %2556 = vmatprep.subr.bf16.mxu0 0
    %2557 = vmatpush2.bf16.msra.mxu0 0
    %2558 = vmatprep.mubr.bf16.mxu0 0
    %2559 = vmatmul.mubr.bf16.gmra.mxu0 %v2324
    %v2560 = vpop.f32.mrf.mxu0
    %v2561 = vadd.f32 0.0, %v2560
    %v2562 = vpop.f32.mrf.mxu0
    %v2563 = vpop.f32.mrf.mxu0
    %v2564 = vpop.f32.mrf.mxu0
    %2565 = vdwg.mxu0
    %v2566 = vadd.f32 %v2321, %v2520
    %v2567 = vxor.u32 %v2566, 2147483648
    %v2568 = vmul.f32 %v2567, 1.442695
    %v2569 = vpow.pop %v2568
    %v2570 = vadd.f32 %v2569, 1.0
    %v2571 = vrcp.pop %v2570
    %v2572 = vmul.f32 1.0, %v2571
    %v2573 = vadd.f32 %v2322, %v2522
    %v2574 = vxor.u32 %v2573, 2147483648
    %v2575 = vmul.f32 %v2574, 1.442695
    %v2576 = vpow.pop %v2575
    %v2577 = vadd.f32 %v2576, 1.0
    %v2578 = vrcp.pop %v2577
    %v2579 = vmul.f32 1.0, %v2578
    %v2580 = vadd.f32 %v2561, %v62
    %v2581 = vmul.f32 %v2572, %v2580
    %v2582 = vadd.f32 %v2323, %v2581
    %v2583 = vtanh.pop %v2582
    %v2584 = vsub.f32 1.0, %v2579
    %v2585 = vmul.f32 %v2584, %v2583
    %v2586 = vmul.f32 %v2579, %v2317
    %v2587 = vadd.f32 %v2585, %v2586
    %s2588 = sadd.s32 %s56, 8
    %v2589 = vstv %s2588
    %vm2590 = vcmp.lt.s32.totalorder %v2589, %v55
    %v2591 = vsel %vm2590, 1, 0
    %2592 = vset.pattern.permute.xlu0 0
    %2593 = vperm.xlu0 %2592, %v2591
    %v2594 = vpop.permute.xlu0 %2593
    %vm2595 = vcmp.eq.s32.totalorder %v2594, 1
    %v2596 = vsel %vm2595, %v2587, 0.0
    %s2597 = scalar_lea.vmem [#allocation7], 64
    %2598 = vst [vmem:[%s2597] sm:$0xff] %v2596
    %v2599 = vsel %vm2595, %v2587, %v2317
    %s2600 = scalar_lea.vmem [#allocation2], 108
    %v2601 = vld [vmem:[%s2600] sm:$0xff]
    %v2602 = vld [vmem:[%s2600 + $0x8] sm:$0xf]
    %v2603 = vunpack.c.l.bf16 %v2601
    %v2604 = vunpack.c.h.bf16 %v2601
    %v2605 = vunpack.c.l.bf16 %v2602
    %v2606 = vpack.c.bf16 %v2599, %v2599
    %v2607 = vld [vmem:[#allocation5] sm:$0xff]
    %v2608 = vld [vmem:[#allocation5 + $0x8] sm:$0xf]
    %v2609 = vld [vmem:[#allocation5 + $0xc] sm:$0xff]
    %v2610 = vld [vmem:[#allocation5 + $0x14] sm:$0xf]
    %v2611 = vld [vmem:[#allocation5 + $0x18] sm:$0xff]
    %v2612 = vld [vmem:[#allocation5 + $0x20] sm:$0xf]
    %v2613 = vld [vmem:[#allocation5 + $0x24] sm:$0xff]
    %v2614 = vld [vmem:[#allocation5 + $0x2c] sm:$0xf]
    %v2615 = vld [vmem:[#allocation5 + $0x30] sm:$0xff]
    %v2616 = vld [vmem:[#allocation5 + $0x38] sm:$0xf]
    %v2617 = vld [vmem:[#allocation5 + $0x3c] sm:$0xff]
    %v2618 = vld [vmem:[#allocation5 + $0x44] sm:$0xf]
    %v2619 = vld [vmem:[#allocation5 + $0x48] sm:$0xff]
    %v2620 = vld [vmem:[#allocation5 + $0x50] sm:$0xf]
    %v2621 = vld [vmem:[#allocation5 + $0x54] sm:$0xff]
    %v2622 = vld [vmem:[#allocation5 + $0x5c] sm:$0xf]
    %v2623 = vld [vmem:[#allocation5 + $0x60] sm:$0xff]
    %v2624 = vld [vmem:[#allocation5 + $0x68] sm:$0xf]
    %v2625 = vld [vmem:[#allocation5 + $0x6c] sm:$0xff]
    %v2626 = vld [vmem:[#allocation5 + $0x74] sm:$0xf]
    %v2627 = vld [vmem:[#allocation5 + $0x78] sm:$0xff]
    %v2628 = vld [vmem:[#allocation5 + $0x80] sm:$0xf]
    %v2629 = vld [vmem:[#allocation5 + $0x84] sm:$0xff]
    %v2630 = vld [vmem:[#allocation5 + $0x8c] sm:$0xf]
    %v2631 = vld [vmem:[#allocation5 + $0x90] sm:$0xff]
    %v2632 = vld [vmem:[#allocation5 + $0x98] sm:$0xf]
    %v2633 = vld [vmem:[#allocation5 + $0x9c] sm:$0xff]
    %v2634 = vld [vmem:[#allocation5 + $0xa4] sm:$0xf]
    %v2635 = vld [vmem:[#allocation5 + $0xa8] sm:$0xff]
    %v2636 = vld [vmem:[#allocation5 + $0xb0] sm:$0xf]
    %v2637 = vld [vmem:[#allocation5 + $0xb4] sm:$0xff]
    %v2638 = vld [vmem:[#allocation5 + $0xbc] sm:$0xf]
    %v2671 = vunpack.c.l.b16 %v2607
    %v2672 = vunpack.c.h.b16 %v2607
    %v2673 = vunpack.c.l.b16 %v2608
    %v2674 = vunpack.c.l.b16 %v2609
    %v2675 = vunpack.c.h.b16 %v2609
    %v2676 = vunpack.c.l.b16 %v2610
    %v2677 = vunpack.c.l.b16 %v2611
    %v2678 = vunpack.c.h.b16 %v2611
    %v2679 = vunpack.c.l.b16 %v2612
    %v2680 = vunpack.c.l.b16 %v2613
    %v2681 = vunpack.c.h.b16 %v2613
    %v2682 = vunpack.c.l.b16 %v2614
    %v2683 = vunpack.c.l.b16 %v2615
    %v2684 = vunpack.c.h.b16 %v2615
    %v2685 = vunpack.c.l.b16 %v2616
    %v2686 = vunpack.c.l.b16 %v2617
    %v2687 = vunpack.c.h.b16 %v2617
    %v2688 = vunpack.c.l.b16 %v2618
    %v2689 = vunpack.c.l.b16 %v2619
    %v2690 = vunpack.c.h.b16 %v2619
    %v2691 = vunpack.c.l.b16 %v2620
    %v2692 = vunpack.c.l.b16 %v2621
    %v2693 = vunpack.c.h.b16 %v2621
    %v2694 = vunpack.c.l.b16 %v2622
    %v2695 = vunpack.c.l.b16 %v2623
    %v2696 = vunpack.c.h.b16 %v2623
    %v2697 = vunpack.c.l.b16 %v2624
    %v2698 = vunpack.c.l.b16 %v2625
    %v2699 = vunpack.c.h.b16 %v2625
    %v2700 = vunpack.c.l.b16 %v2626
    %v2701 = vunpack.c.l.b16 %v2627
    %v2702 = vunpack.c.h.b16 %v2627
    %v2703 = vunpack.c.l.b16 %v2628
    %v2704 = vunpack.c.l.b16 %v2629
    %v2705 = vunpack.c.h.b16 %v2629
    %v2706 = vunpack.c.l.b16 %v2630
    %v2707 = vunpack.c.l.b16 %v2631
    %v2708 = vunpack.c.h.b16 %v2631
    %v2709 = vunpack.c.l.b16 %v2632
    %v2710 = vunpack.c.l.b16 %v2633
    %v2711 = vunpack.c.h.b16 %v2633
    %v2712 = vunpack.c.l.b16 %v2634
    %v2713 = vunpack.c.l.b16 %v2635
    %v2714 = vunpack.c.h.b16 %v2635
    %v2715 = vunpack.c.l.b16 %v2636
    %v2716 = vunpack.c.l.b16 %v2637
    %v2717 = vunpack.c.h.b16 %v2637
    %v2718 = vunpack.c.l.b16 %v2638
    %v2719 = vpack.c.b16 %v2674, %v2671
    %v2720 = vpack.c.b16 %v2675, %v2672
    %v2721 = vpack.c.b16 %v2676, %v2673
    %v2722 = vpack.c.b16 %v2680, %v2677
    %v2723 = vpack.c.b16 %v2681, %v2678
    %v2724 = vpack.c.b16 %v2682, %v2679
    %v2725 = vpack.c.b16 %v2686, %v2683
    %v2726 = vpack.c.b16 %v2687, %v2684
    %v2727 = vpack.c.b16 %v2688, %v2685
    %v2728 = vpack.c.b16 %v2692, %v2689
    %v2729 = vpack.c.b16 %v2693, %v2690
    %v2730 = vpack.c.b16 %v2694, %v2691
    %v2731 = vpack.c.b16 %v2698, %v2695
    %v2732 = vpack.c.b16 %v2699, %v2696
    %v2733 = vpack.c.b16 %v2700, %v2697
    %v2734 = vpack.c.b16 %v2704, %v2701
    %v2735 = vpack.c.b16 %v2705, %v2702
    %v2736 = vpack.c.b16 %v2706, %v2703
    %v2737 = vpack.c.b16 %v2710, %v2707
    %v2738 = vpack.c.b16 %v2711, %v2708
    %v2739 = vpack.c.b16 %v2712, %v2709
    %v2740 = vpack.c.b16 %v2716, %v2713
    %v2741 = vpack.c.b16 %v2717, %v2714
    %v2742 = vpack.c.b16 %v2718, %v2715
    %2767 = vmatprep.subr.bf16.mxu0 %v2741
    %2768 = vmatpush1.bf16.msra.mxu0 %v2740
    %2769 = vmatprep.subr.bf16.mxu0 %v2738
    %2770 = vmatpush1.bf16.msra.mxu0 %v2737
    %2771 = vmatprep.subr.bf16.mxu0 %v2735
    %2772 = vmatpush1.bf16.msra.mxu0 %v2734
    %2773 = vmatprep.subr.bf16.mxu0 %v2732
    %2774 = vmatpush1.bf16.msra.mxu0 %v2731
    %2775 = vmatprep.subr.bf16.mxu0 %v2729
    %2776 = vmatpush1.bf16.msra.mxu0 %v2728
    %2777 = vmatprep.subr.bf16.mxu0 %v2726
    %2778 = vmatpush1.bf16.msra.mxu0 %v2725
    %2779 = vmatprep.subr.bf16.mxu0 %v2723
    %2780 = vmatpush1.bf16.msra.mxu0 %v2722
    %2781 = vmatprep.subr.bf16.mxu0 %v2720
    %2782 = vmatpush1.bf16.msra.mxu0 %v2719
    %2783 = vmatprep.subr.bf16.mxu0 0
    %2784 = vmatpush2.bf16.msra.mxu0 0
    %2785 = vmatprep.subr.bf16.mxu0 0
    %2786 = vmatpush2.bf16.msra.mxu0 0
    %2787 = vmatprep.subr.bf16.mxu0 0
    %2788 = vmatpush2.bf16.msra.mxu0 0
    %2789 = vmatprep.subr.bf16.mxu0 0
    %2790 = vmatpush2.bf16.msra.mxu0 0
    %2791 = vmatprep.subr.bf16.mxu0 0
    %2792 = vmatpush2.bf16.msra.mxu0 0
    %2793 = vmatprep.subr.bf16.mxu0 0
    %2794 = vmatpush2.bf16.msra.mxu0 0
    %2795 = vmatprep.subr.bf16.mxu0 0
    %2796 = vmatpush2.bf16.msra.mxu0 0
    %2797 = vmatprep.subr.bf16.mxu0 0
    %2798 = vmatpush2.bf16.msra.mxu0 0
    %2799 = vmatprep.mubr.bf16.mxu0 0
    %2800 = vmatmul.mubr.bf16.gmra.mxu0 %v2606
    %v2801 = vpop.f32.mrf.mxu0
    %v2802 = vadd.f32 0.0, %v2801
    %v2803 = vpop.f32.mrf.mxu0
    %v2804 = vadd.f32 0.0, %v2803
    %v2805 = vpop.f32.mrf.mxu0
    %v2806 = vpop.f32.mrf.mxu0
    %2807 = vdwg.mxu0
    %2808 = vmatprep.subr.bf16.mxu0 0
    %2809 = vmatpush1.bf16.msra.mxu0 %v2742
    %2810 = vmatprep.subr.bf16.mxu0 0
    %2811 = vmatpush1.bf16.msra.mxu0 %v2739
    %2812 = vmatprep.subr.bf16.mxu0 0
    %2813 = vmatpush1.bf16.msra.mxu0 %v2736
    %2814 = vmatprep.subr.bf16.mxu0 0
    %2815 = vmatpush1.bf16.msra.mxu0 %v2733
    %2816 = vmatprep.subr.bf16.mxu0 0
    %2817 = vmatpush1.bf16.msra.mxu0 %v2730
    %2818 = vmatprep.subr.bf16.mxu0 0
    %2819 = vmatpush1.bf16.msra.mxu0 %v2727
    %2820 = vmatprep.subr.bf16.mxu0 0
    %2821 = vmatpush1.bf16.msra.mxu0 %v2724
    %2822 = vmatprep.subr.bf16.mxu0 0
    %2823 = vmatpush1.bf16.msra.mxu0 %v2721
    %2824 = vmatprep.subr.bf16.mxu0 0
    %2825 = vmatpush2.bf16.msra.mxu0 0
    %2826 = vmatprep.subr.bf16.mxu0 0
    %2827 = vmatpush2.bf16.msra.mxu0 0
    %2828 = vmatprep.subr.bf16.mxu0 0
    %2829 = vmatpush2.bf16.msra.mxu0 0
    %2830 = vmatprep.subr.bf16.mxu0 0
    %2831 = vmatpush2.bf16.msra.mxu0 0
    %2832 = vmatprep.subr.bf16.mxu0 0
    %2833 = vmatpush2.bf16.msra.mxu0 0
    %2834 = vmatprep.subr.bf16.mxu0 0
    %2835 = vmatpush2.bf16.msra.mxu0 0
    %2836 = vmatprep.subr.bf16.mxu0 0
    %2837 = vmatpush2.bf16.msra.mxu0 0
    %2838 = vmatprep.subr.bf16.mxu0 0
    %2839 = vmatpush2.bf16.msra.mxu0 0
    %2840 = vmatprep.mubr.bf16.mxu0 0
    %2841 = vmatmul.mubr.bf16.gmra.mxu0 %v2606
    %v2842 = vpop.f32.mrf.mxu0
    %v2843 = vadd.f32 0.0, %v2842
    %v2844 = vpop.f32.mrf.mxu0
    %v2845 = vpop.f32.mrf.mxu0
    %v2846 = vpop.f32.mrf.mxu0
    %2847 = vdwg.mxu0
    %v2848 = vadd.f32 %v2603, %v2802
    %v2849 = vxor.u32 %v2848, 2147483648
    %v2850 = vmul.f32 %v2849, 1.442695
    %v2851 = vpow.pop %v2850
    %v2852 = vadd.f32 %v2851, 1.0
    %v2853 = vrcp.pop %v2852
    %v2854 = vmul.f32 1.0, %v2853
    %v2855 = vadd.f32 %v2604, %v2804
    %v2856 = vxor.u32 %v2855, 2147483648
    %v2857 = vmul.f32 %v2856, 1.442695
    %v2858 = vpow.pop %v2857
    %v2859 = vadd.f32 %v2858, 1.0
    %v2860 = vrcp.pop %v2859
    %v2861 = vmul.f32 1.0, %v2860
    %v2862 = vadd.f32 %v2843, %v62
    %v2863 = vmul.f32 %v2854, %v2862
    %v2864 = vadd.f32 %v2605, %v2863
    %v2865 = vtanh.pop %v2864
    %v2866 = vsub.f32 1.0, %v2861
    %v2867 = vmul.f32 %v2866, %v2865
    %v2868 = vmul.f32 %v2861, %v2599
    %v2869 = vadd.f32 %v2867, %v2868
    %s2870 = sadd.s32 %s56, 9
    %v2871 = vstv %s2870
    %vm2872 = vcmp.lt.s32.totalorder %v2871, %v55
    %v2873 = vsel %vm2872, 1, 0
    %2874 = vset.pattern.permute.xlu0 0
    %2875 = vperm.xlu0 %2874, %v2873
    %v2876 = vpop.permute.xlu0 %2875
    %vm2877 = vcmp.eq.s32.totalorder %v2876, 1
    %v2878 = vsel %vm2877, %v2869, 0.0
    %s2879 = scalar_lea.vmem [#allocation7], 72
    %2880 = vst [vmem:[%s2879] sm:$0xff] %v2878
    %v2881 = vsel %vm2877, %v2869, %v2599
    %s2882 = scalar_lea.vmem [#allocation2], 120
    %v2883 = vld [vmem:[%s2882] sm:$0xff]
    %v2884 = vld [vmem:[%s2882 + $0x8] sm:$0xf]
    %v2885 = vunpack.c.l.bf16 %v2883
    %v2886 = vunpack.c.h.bf16 %v2883
    %v2887 = vunpack.c.l.bf16 %v2884
    %v2888 = vpack.c.bf16 %v2881, %v2881
    %v2889 = vld [vmem:[#allocation5] sm:$0xff]
    %v2890 = vld [vmem:[#allocation5 + $0x8] sm:$0xf]
    %v2891 = vld [vmem:[#allocation5 + $0xc] sm:$0xff]
    %v2892 = vld [vmem:[#allocation5 + $0x14] sm:$0xf]
    %v2893 = vld [vmem:[#allocation5 + $0x18] sm:$0xff]
    %v2894 = vld [vmem:[#allocation5 + $0x20] sm:$0xf]
    %v2895 = vld [vmem:[#allocation5 + $0x24] sm:$0xff]
    %v2896 = vld [vmem:[#allocation5 + $0x2c] sm:$0xf]
    %v2897 = vld [vmem:[#allocation5 + $0x30] sm:$0xff]
    %v2898 = vld [vmem:[#allocation5 + $0x38] sm:$0xf]
    %v2899 = vld [vmem:[#allocation5 + $0x3c] sm:$0xff]
    %v2900 = vld [vmem:[#allocation5 + $0x44] sm:$0xf]
    %v2901 = vld [vmem:[#allocation5 + $0x48] sm:$0xff]
    %v2902 = vld [vmem:[#allocation5 + $0x50] sm:$0xf]
    %v2903 = vld [vmem:[#allocation5 + $0x54] sm:$0xff]
    %v2904 = vld [vmem:[#allocation5 + $0x5c] sm:$0xf]
    %v2905 = vld [vmem:[#allocation5 + $0x60] sm:$0xff]
    %v2906 = vld [vmem:[#allocation5 + $0x68] sm:$0xf]
    %v2907 = vld [vmem:[#allocation5 + $0x6c] sm:$0xff]
    %v2908 = vld [vmem:[#allocation5 + $0x74] sm:$0xf]
    %v2909 = vld [vmem:[#allocation5 + $0x78] sm:$0xff]
    %v2910 = vld [vmem:[#allocation5 + $0x80] sm:$0xf]
    %v2911 = vld [vmem:[#allocation5 + $0x84] sm:$0xff]
    %v2912 = vld [vmem:[#allocation5 + $0x8c] sm:$0xf]
    %v2913 = vld [vmem:[#allocation5 + $0x90] sm:$0xff]
    %v2914 = vld [vmem:[#allocation5 + $0x98] sm:$0xf]
    %v2915 = vld [vmem:[#allocation5 + $0x9c] sm:$0xff]
    %v2916 = vld [vmem:[#allocation5 + $0xa4] sm:$0xf]
    %v2917 = vld [vmem:[#allocation5 + $0xa8] sm:$0xff]
    %v2918 = vld [vmem:[#allocation5 + $0xb0] sm:$0xf]
    %v2919 = vld [vmem:[#allocation5 + $0xb4] sm:$0xff]
    %v2920 = vld [vmem:[#allocation5 + $0xbc] sm:$0xf]
    %v2953 = vunpack.c.l.b16 %v2889
    %v2954 = vunpack.c.h.b16 %v2889
    %v2955 = vunpack.c.l.b16 %v2890
    %v2956 = vunpack.c.l.b16 %v2891
    %v2957 = vunpack.c.h.b16 %v2891
    %v2958 = vunpack.c.l.b16 %v2892
    %v2959 = vunpack.c.l.b16 %v2893
    %v2960 = vunpack.c.h.b16 %v2893
    %v2961 = vunpack.c.l.b16 %v2894
    %v2962 = vunpack.c.l.b16 %v2895
    %v2963 = vunpack.c.h.b16 %v2895
    %v2964 = vunpack.c.l.b16 %v2896
    %v2965 = vunpack.c.l.b16 %v2897
    %v2966 = vunpack.c.h.b16 %v2897
    %v2967 = vunpack.c.l.b16 %v2898
    %v2968 = vunpack.c.l.b16 %v2899
    %v2969 = vunpack.c.h.b16 %v2899
    %v2970 = vunpack.c.l.b16 %v2900
    %v2971 = vunpack.c.l.b16 %v2901
    %v2972 = vunpack.c.h.b16 %v2901
    %v2973 = vunpack.c.l.b16 %v2902
    %v2974 = vunpack.c.l.b16 %v2903
    %v2975 = vunpack.c.h.b16 %v2903
    %v2976 = vunpack.c.l.b16 %v2904
    %v2977 = vunpack.c.l.b16 %v2905
    %v2978 = vunpack.c.h.b16 %v2905
    %v2979 = vunpack.c.l.b16 %v2906
    %v2980 = vunpack.c.l.b16 %v2907
    %v2981 = vunpack.c.h.b16 %v2907
    %v2982 = vunpack.c.l.b16 %v2908
    %v2983 = vunpack.c.l.b16 %v2909
    %v2984 = vunpack.c.h.b16 %v2909
    %v2985 = vunpack.c.l.b16 %v2910
    %v2986 = vunpack.c.l.b16 %v2911
    %v2987 = vunpack.c.h.b16 %v2911
    %v2988 = vunpack.c.l.b16 %v2912
    %v2989 = vunpack.c.l.b16 %v2913
    %v2990 = vunpack.c.h.b16 %v2913
    %v2991 = vunpack.c.l.b16 %v2914
    %v2992 = vunpack.c.l.b16 %v2915
    %v2993 = vunpack.c.h.b16 %v2915
    %v2994 = vunpack.c.l.b16 %v2916
    %v2995 = vunpack.c.l.b16 %v2917
    %v2996 = vunpack.c.h.b16 %v2917
    %v2997 = vunpack.c.l.b16 %v2918
    %v2998 = vunpack.c.l.b16 %v2919
    %v2999 = vunpack.c.h.b16 %v2919
    %v3000 = vunpack.c.l.b16 %v2920
    %v3001 = vpack.c.b16 %v2956, %v2953
    %v3002 = vpack.c.b16 %v2957, %v2954
    %v3003 = vpack.c.b16 %v2958, %v2955
    %v3004 = vpack.c.b16 %v2962, %v2959
    %v3005 = vpack.c.b16 %v2963, %v2960
    %v3006 = vpack.c.b16 %v2964, %v2961
    %v3007 = vpack.c.b16 %v2968, %v2965
    %v3008 = vpack.c.b16 %v2969, %v2966
    %v3009 = vpack.c.b16 %v2970, %v2967
    %v3010 = vpack.c.b16 %v2974, %v2971
    %v3011 = vpack.c.b16 %v2975, %v2972
    %v3012 = vpack.c.b16 %v2976, %v2973
    %v3013 = vpack.c.b16 %v2980, %v2977
    %v3014 = vpack.c.b16 %v2981, %v2978
    %v3015 = vpack.c.b16 %v2982, %v2979
    %v3016 = vpack.c.b16 %v2986, %v2983
    %v3017 = vpack.c.b16 %v2987, %v2984
    %v3018 = vpack.c.b16 %v2988, %v2985
    %v3019 = vpack.c.b16 %v2992, %v2989
    %v3020 = vpack.c.b16 %v2993, %v2990
    %v3021 = vpack.c.b16 %v2994, %v2991
    %v3022 = vpack.c.b16 %v2998, %v2995
    %v3023 = vpack.c.b16 %v2999, %v2996
    %v3024 = vpack.c.b16 %v3000, %v2997
    %3049 = vmatprep.subr.bf16.mxu0 %v3023
    %3050 = vmatpush1.bf16.msra.mxu0 %v3022
    %3051 = vmatprep.subr.bf16.mxu0 %v3020
    %3052 = vmatpush1.bf16.msra.mxu0 %v3019
    %3053 = vmatprep.subr.bf16.mxu0 %v3017
    %3054 = vmatpush1.bf16.msra.mxu0 %v3016
    %3055 = vmatprep.subr.bf16.mxu0 %v3014
    %3056 = vmatpush1.bf16.msra.mxu0 %v3013
    %3057 = vmatprep.subr.bf16.mxu0 %v3011
    %3058 = vmatpush1.bf16.msra.mxu0 %v3010
    %3059 = vmatprep.subr.bf16.mxu0 %v3008
    %3060 = vmatpush1.bf16.msra.mxu0 %v3007
    %3061 = vmatprep.subr.bf16.mxu0 %v3005
    %3062 = vmatpush1.bf16.msra.mxu0 %v3004
    %3063 = vmatprep.subr.bf16.mxu0 %v3002
    %3064 = vmatpush1.bf16.msra.mxu0 %v3001
    %3065 = vmatprep.subr.bf16.mxu0 0
    %3066 = vmatpush2.bf16.msra.mxu0 0
    %3067 = vmatprep.subr.bf16.mxu0 0
    %3068 = vmatpush2.bf16.msra.mxu0 0
    %3069 = vmatprep.subr.bf16.mxu0 0
    %3070 = vmatpush2.bf16.msra.mxu0 0
    %3071 = vmatprep.subr.bf16.mxu0 0
    %3072 = vmatpush2.bf16.msra.mxu0 0
    %3073 = vmatprep.subr.bf16.mxu0 0
    %3074 = vmatpush2.bf16.msra.mxu0 0
    %3075 = vmatprep.subr.bf16.mxu0 0
    %3076 = vmatpush2.bf16.msra.mxu0 0
    %3077 = vmatprep.subr.bf16.mxu0 0
    %3078 = vmatpush2.bf16.msra.mxu0 0
    %3079 = vmatprep.subr.bf16.mxu0 0
    %3080 = vmatpush2.bf16.msra.mxu0 0
    %3081 = vmatprep.mubr.bf16.mxu0 0
    %3082 = vmatmul.mubr.bf16.gmra.mxu0 %v2888
    %v3083 = vpop.f32.mrf.mxu0
    %v3084 = vadd.f32 0.0, %v3083
    %v3085 = vpop.f32.mrf.mxu0
    %v3086 = vadd.f32 0.0, %v3085
    %v3087 = vpop.f32.mrf.mxu0
    %v3088 = vpop.f32.mrf.mxu0
    %3089 = vdwg.mxu0
    %3090 = vmatprep.subr.bf16.mxu0 0
    %3091 = vmatpush1.bf16.msra.mxu0 %v3024
    %3092 = vmatprep.subr.bf16.mxu0 0
    %3093 = vmatpush1.bf16.msra.mxu0 %v3021
    %3094 = vmatprep.subr.bf16.mxu0 0
    %3095 = vmatpush1.bf16.msra.mxu0 %v3018
    %3096 = vmatprep.subr.bf16.mxu0 0
    %3097 = vmatpush1.bf16.msra.mxu0 %v3015
    %3098 = vmatprep.subr.bf16.mxu0 0
    %3099 = vmatpush1.bf16.msra.mxu0 %v3012
    %3100 = vmatprep.subr.bf16.mxu0 0
    %3101 = vmatpush1.bf16.msra.mxu0 %v3009
    %3102 = vmatprep.subr.bf16.mxu0 0
    %3103 = vmatpush1.bf16.msra.mxu0 %v3006
    %3104 = vmatprep.subr.bf16.mxu0 0
    %3105 = vmatpush1.bf16.msra.mxu0 %v3003
    %3106 = vmatprep.subr.bf16.mxu0 0
    %3107 = vmatpush2.bf16.msra.mxu0 0
    %3108 = vmatprep.subr.bf16.mxu0 0
    %3109 = vmatpush2.bf16.msra.mxu0 0
    %3110 = vmatprep.subr.bf16.mxu0 0
    %3111 = vmatpush2.bf16.msra.mxu0 0
    %3112 = vmatprep.subr.bf16.mxu0 0
    %3113 = vmatpush2.bf16.msra.mxu0 0
    %3114 = vmatprep.subr.bf16.mxu0 0
    %3115 = vmatpush2.bf16.msra.mxu0 0
    %3116 = vmatprep.subr.bf16.mxu0 0
    %3117 = vmatpush2.bf16.msra.mxu0 0
    %3118 = vmatprep.subr.bf16.mxu0 0
    %3119 = vmatpush2.bf16.msra.mxu0 0
    %3120 = vmatprep.subr.bf16.mxu0 0
    %3121 = vmatpush2.bf16.msra.mxu0 0
    %3122 = vmatprep.mubr.bf16.mxu0 0
    %3123 = vmatmul.mubr.bf16.gmra.mxu0 %v2888
    %v3124 = vpop.f32.mrf.mxu0
    %v3125 = vadd.f32 0.0, %v3124
    %v3126 = vpop.f32.mrf.mxu0
    %v3127 = vpop.f32.mrf.mxu0
    %v3128 = vpop.f32.mrf.mxu0
    %3129 = vdwg.mxu0
    %v3130 = vadd.f32 %v2885, %v3084
    %v3131 = vxor.u32 %v3130, 2147483648
    %v3132 = vmul.f32 %v3131, 1.442695
    %v3133 = vpow.pop %v3132
    %v3134 = vadd.f32 %v3133, 1.0
    %v3135 = vrcp.pop %v3134
    %v3136 = vmul.f32 1.0, %v3135
    %v3137 = vadd.f32 %v2886, %v3086
    %v3138 = vxor.u32 %v3137, 2147483648
    %v3139 = vmul.f32 %v3138, 1.442695
    %v3140 = vpow.pop %v3139
    %v3141 = vadd.f32 %v3140, 1.0
    %v3142 = vrcp.pop %v3141
    %v3143 = vmul.f32 1.0, %v3142
    %v3144 = vadd.f32 %v3125, %v62
    %v3145 = vmul.f32 %v3136, %v3144
    %v3146 = vadd.f32 %v2887, %v3145
    %v3147 = vtanh.pop %v3146
    %v3148 = vsub.f32 1.0, %v3143
    %v3149 = vmul.f32 %v3148, %v3147
    %v3150 = vmul.f32 %v3143, %v2881
    %v3151 = vadd.f32 %v3149, %v3150
    %s3152 = sadd.s32 %s56, 10
    %v3153 = vstv %s3152
    %vm3154 = vcmp.lt.s32.totalorder %v3153, %v55
    %v3155 = vsel %vm3154, 1, 0
    %3156 = vset.pattern.permute.xlu0 0
    %3157 = vperm.xlu0 %3156, %v3155
    %v3158 = vpop.permute.xlu0 %3157
    %vm3159 = vcmp.eq.s32.totalorder %v3158, 1
    %v3160 = vsel %vm3159, %v3151, 0.0
    %s3161 = scalar_lea.vmem [#allocation7], 80
    %3162 = vst [vmem:[%s3161] sm:$0xff] %v3160
    %v3163 = vsel %vm3159, %v3151, %v2881
    %s3164 = scalar_lea.vmem [#allocation2], 132
    %v3165 = vld [vmem:[%s3164] sm:$0xff]
    %v3166 = vld [vmem:[%s3164 + $0x8] sm:$0xf]
    %v3167 = vunpack.c.l.bf16 %v3165
    %v3168 = vunpack.c.h.bf16 %v3165
    %v3169 = vunpack.c.l.bf16 %v3166
    %v3170 = vpack.c.bf16 %v3163, %v3163
    %v3171 = vld [vmem:[#allocation5] sm:$0xff]
    %v3172 = vld [vmem:[#allocation5 + $0x8] sm:$0xf]
    %v3173 = vld [vmem:[#allocation5 + $0xc] sm:$0xff]
    %v3174 = vld [vmem:[#allocation5 + $0x14] sm:$0xf]
    %v3175 = vld [vmem:[#allocation5 + $0x18] sm:$0xff]
    %v3176 = vld [vmem:[#allocation5 + $0x20] sm:$0xf]
    %v3177 = vld [vmem:[#allocation5 + $0x24] sm:$0xff]
    %v3178 = vld [vmem:[#allocation5 + $0x2c] sm:$0xf]
    %v3179 = vld [vmem:[#allocation5 + $0x30] sm:$0xff]
    %v3180 = vld [vmem:[#allocation5 + $0x38] sm:$0xf]
    %v3181 = vld [vmem:[#allocation5 + $0x3c] sm:$0xff]
    %v3182 = vld [vmem:[#allocation5 + $0x44] sm:$0xf]
    %v3183 = vld [vmem:[#allocation5 + $0x48] sm:$0xff]
    %v3184 = vld [vmem:[#allocation5 + $0x50] sm:$0xf]
    %v3185 = vld [vmem:[#allocation5 + $0x54] sm:$0xff]
    %v3186 = vld [vmem:[#allocation5 + $0x5c] sm:$0xf]
    %v3187 = vld [vmem:[#allocation5 + $0x60] sm:$0xff]
    %v3188 = vld [vmem:[#allocation5 + $0x68] sm:$0xf]
    %v3189 = vld [vmem:[#allocation5 + $0x6c] sm:$0xff]
    %v3190 = vld [vmem:[#allocation5 + $0x74] sm:$0xf]
    %v3191 = vld [vmem:[#allocation5 + $0x78] sm:$0xff]
    %v3192 = vld [vmem:[#allocation5 + $0x80] sm:$0xf]
    %v3193 = vld [vmem:[#allocation5 + $0x84] sm:$0xff]
    %v3194 = vld [vmem:[#allocation5 + $0x8c] sm:$0xf]
    %v3195 = vld [vmem:[#allocation5 + $0x90] sm:$0xff]
    %v3196 = vld [vmem:[#allocation5 + $0x98] sm:$0xf]
    %v3197 = vld [vmem:[#allocation5 + $0x9c] sm:$0xff]
    %v3198 = vld [vmem:[#allocation5 + $0xa4] sm:$0xf]
    %v3199 = vld [vmem:[#allocation5 + $0xa8] sm:$0xff]
    %v3200 = vld [vmem:[#allocation5 + $0xb0] sm:$0xf]
    %v3201 = vld [vmem:[#allocation5 + $0xb4] sm:$0xff]
    %v3202 = vld [vmem:[#allocation5 + $0xbc] sm:$0xf]
    %v3235 = vunpack.c.l.b16 %v3171
    %v3236 = vunpack.c.h.b16 %v3171
    %v3237 = vunpack.c.l.b16 %v3172
    %v3238 = vunpack.c.l.b16 %v3173
    %v3239 = vunpack.c.h.b16 %v3173
    %v3240 = vunpack.c.l.b16 %v3174
    %v3241 = vunpack.c.l.b16 %v3175
    %v3242 = vunpack.c.h.b16 %v3175
    %v3243 = vunpack.c.l.b16 %v3176
    %v3244 = vunpack.c.l.b16 %v3177
    %v3245 = vunpack.c.h.b16 %v3177
    %v3246 = vunpack.c.l.b16 %v3178
    %v3247 = vunpack.c.l.b16 %v3179
    %v3248 = vunpack.c.h.b16 %v3179
    %v3249 = vunpack.c.l.b16 %v3180
    %v3250 = vunpack.c.l.b16 %v3181
    %v3251 = vunpack.c.h.b16 %v3181
    %v3252 = vunpack.c.l.b16 %v3182
    %v3253 = vunpack.c.l.b16 %v3183
    %v3254 = vunpack.c.h.b16 %v3183
    %v3255 = vunpack.c.l.b16 %v3184
    %v3256 = vunpack.c.l.b16 %v3185
    %v3257 = vunpack.c.h.b16 %v3185
    %v3258 = vunpack.c.l.b16 %v3186
    %v3259 = vunpack.c.l.b16 %v3187
    %v3260 = vunpack.c.h.b16 %v3187
    %v3261 = vunpack.c.l.b16 %v3188
    %v3262 = vunpack.c.l.b16 %v3189
    %v3263 = vunpack.c.h.b16 %v3189
    %v3264 = vunpack.c.l.b16 %v3190
    %v3265 = vunpack.c.l.b16 %v3191
    %v3266 = vunpack.c.h.b16 %v3191
    %v3267 = vunpack.c.l.b16 %v3192
    %v3268 = vunpack.c.l.b16 %v3193
    %v3269 = vunpack.c.h.b16 %v3193
    %v3270 = vunpack.c.l.b16 %v3194
    %v3271 = vunpack.c.l.b16 %v3195
    %v3272 = vunpack.c.h.b16 %v3195
    %v3273 = vunpack.c.l.b16 %v3196
    %v3274 = vunpack.c.l.b16 %v3197
    %v3275 = vunpack.c.h.b16 %v3197
    %v3276 = vunpack.c.l.b16 %v3198
    %v3277 = vunpack.c.l.b16 %v3199
    %v3278 = vunpack.c.h.b16 %v3199
    %v3279 = vunpack.c.l.b16 %v3200
    %v3280 = vunpack.c.l.b16 %v3201
    %v3281 = vunpack.c.h.b16 %v3201
    %v3282 = vunpack.c.l.b16 %v3202
    %v3283 = vpack.c.b16 %v3238, %v3235
    %v3284 = vpack.c.b16 %v3239, %v3236
    %v3285 = vpack.c.b16 %v3240, %v3237
    %v3286 = vpack.c.b16 %v3244, %v3241
    %v3287 = vpack.c.b16 %v3245, %v3242
    %v3288 = vpack.c.b16 %v3246, %v3243
    %v3289 = vpack.c.b16 %v3250, %v3247
    %v3290 = vpack.c.b16 %v3251, %v3248
    %v3291 = vpack.c.b16 %v3252, %v3249
    %v3292 = vpack.c.b16 %v3256, %v3253
    %v3293 = vpack.c.b16 %v3257, %v3254
    %v3294 = vpack.c.b16 %v3258, %v3255
    %v3295 = vpack.c.b16 %v3262, %v3259
    %v3296 = vpack.c.b16 %v3263, %v3260
    %v3297 = vpack.c.b16 %v3264, %v3261
    %v3298 = vpack.c.b16 %v3268, %v3265
    %v3299 = vpack.c.b16 %v3269, %v3266
    %v3300 = vpack.c.b16 %v3270, %v3267
    %v3301 = vpack.c.b16 %v3274, %v3271
    %v3302 = vpack.c.b16 %v3275, %v3272
    %v3303 = vpack.c.b16 %v3276, %v3273
    %v3304 = vpack.c.b16 %v3280, %v3277
    %v3305 = vpack.c.b16 %v3281, %v3278
    %v3306 = vpack.c.b16 %v3282, %v3279
    %3331 = vmatprep.subr.bf16.mxu0 %v3305
    %3332 = vmatpush1.bf16.msra.mxu0 %v3304
    %3333 = vmatprep.subr.bf16.mxu0 %v3302
    %3334 = vmatpush1.bf16.msra.mxu0 %v3301
    %3335 = vmatprep.subr.bf16.mxu0 %v3299
    %3336 = vmatpush1.bf16.msra.mxu0 %v3298
    %3337 = vmatprep.subr.bf16.mxu0 %v3296
    %3338 = vmatpush1.bf16.msra.mxu0 %v3295
    %3339 = vmatprep.subr.bf16.mxu0 %v3293
    %3340 = vmatpush1.bf16.msra.mxu0 %v3292
    %3341 = vmatprep.subr.bf16.mxu0 %v3290
    %3342 = vmatpush1.bf16.msra.mxu0 %v3289
    %3343 = vmatprep.subr.bf16.mxu0 %v3287
    %3344 = vmatpush1.bf16.msra.mxu0 %v3286
    %3345 = vmatprep.subr.bf16.mxu0 %v3284
    %3346 = vmatpush1.bf16.msra.mxu0 %v3283
    %3347 = vmatprep.subr.bf16.mxu0 0
    %3348 = vmatpush2.bf16.msra.mxu0 0
    %3349 = vmatprep.subr.bf16.mxu0 0
    %3350 = vmatpush2.bf16.msra.mxu0 0
    %3351 = vmatprep.subr.bf16.mxu0 0
    %3352 = vmatpush2.bf16.msra.mxu0 0
    %3353 = vmatprep.subr.bf16.mxu0 0
    %3354 = vmatpush2.bf16.msra.mxu0 0
    %3355 = vmatprep.subr.bf16.mxu0 0
    %3356 = vmatpush2.bf16.msra.mxu0 0
    %3357 = vmatprep.subr.bf16.mxu0 0
    %3358 = vmatpush2.bf16.msra.mxu0 0
    %3359 = vmatprep.subr.bf16.mxu0 0
    %3360 = vmatpush2.bf16.msra.mxu0 0
    %3361 = vmatprep.subr.bf16.mxu0 0
    %3362 = vmatpush2.bf16.msra.mxu0 0
    %3363 = vmatprep.mubr.bf16.mxu0 0
    %3364 = vmatmul.mubr.bf16.gmra.mxu0 %v3170
    %v3365 = vpop.f32.mrf.mxu0
    %v3366 = vadd.f32 0.0, %v3365
    %v3367 = vpop.f32.mrf.mxu0
    %v3368 = vadd.f32 0.0, %v3367
    %v3369 = vpop.f32.mrf.mxu0
    %v3370 = vpop.f32.mrf.mxu0
    %3371 = vdwg.mxu0
    %3372 = vmatprep.subr.bf16.mxu0 0
    %3373 = vmatpush1.bf16.msra.mxu0 %v3306
    %3374 = vmatprep.subr.bf16.mxu0 0
    %3375 = vmatpush1.bf16.msra.mxu0 %v3303
    %3376 = vmatprep.subr.bf16.mxu0 0
    %3377 = vmatpush1.bf16.msra.mxu0 %v3300
    %3378 = vmatprep.subr.bf16.mxu0 0
    %3379 = vmatpush1.bf16.msra.mxu0 %v3297
    %3380 = vmatprep.subr.bf16.mxu0 0
    %3381 = vmatpush1.bf16.msra.mxu0 %v3294
    %3382 = vmatprep.subr.bf16.mxu0 0
    %3383 = vmatpush1.bf16.msra.mxu0 %v3291
    %3384 = vmatprep.subr.bf16.mxu0 0
    %3385 = vmatpush1.bf16.msra.mxu0 %v3288
    %3386 = vmatprep.subr.bf16.mxu0 0
    %3387 = vmatpush1.bf16.msra.mxu0 %v3285
    %3388 = vmatprep.subr.bf16.mxu0 0
    %3389 = vmatpush2.bf16.msra.mxu0 0
    %3390 = vmatprep.subr.bf16.mxu0 0
    %3391 = vmatpush2.bf16.msra.mxu0 0
    %3392 = vmatprep.subr.bf16.mxu0 0
    %3393 = vmatpush2.bf16.msra.mxu0 0
    %3394 = vmatprep.subr.bf16.mxu0 0
    %3395 = vmatpush2.bf16.msra.mxu0 0
    %3396 = vmatprep.subr.bf16.mxu0 0
    %3397 = vmatpush2.bf16.msra.mxu0 0
    %3398 = vmatprep.subr.bf16.mxu0 0
    %3399 = vmatpush2.bf16.msra.mxu0 0
    %3400 = vmatprep.subr.bf16.mxu0 0
    %3401 = vmatpush2.bf16.msra.mxu0 0
    %3402 = vmatprep.subr.bf16.mxu0 0
    %3403 = vmatpush2.bf16.msra.mxu0 0
    %3404 = vmatprep.mubr.bf16.mxu0 0
    %3405 = vmatmul.mubr.bf16.gmra.mxu0 %v3170
    %v3406 = vpop.f32.mrf.mxu0
    %v3407 = vadd.f32 0.0, %v3406
    %v3408 = vpop.f32.mrf.mxu0
    %v3409 = vpop.f32.mrf.mxu0
    %v3410 = vpop.f32.mrf.mxu0
    %3411 = vdwg.mxu0
    %v3412 = vadd.f32 %v3167, %v3366
    %v3413 = vxor.u32 %v3412, 2147483648
    %v3414 = vmul.f32 %v3413, 1.442695
    %v3415 = vpow.pop %v3414
    %v3416 = vadd.f32 %v3415, 1.0
    %v3417 = vrcp.pop %v3416
    %v3418 = vmul.f32 1.0, %v3417
    %v3419 = vadd.f32 %v3168, %v3368
    %v3420 = vxor.u32 %v3419, 2147483648
    %v3421 = vmul.f32 %v3420, 1.442695
    %v3422 = vpow.pop %v3421
    %v3423 = vadd.f32 %v3422, 1.0
    %v3424 = vrcp.pop %v3423
    %v3425 = vmul.f32 1.0, %v3424
    %v3426 = vadd.f32 %v3407, %v62
    %v3427 = vmul.f32 %v3418, %v3426
    %v3428 = vadd.f32 %v3169, %v3427
    %v3429 = vtanh.pop %v3428
    %v3430 = vsub.f32 1.0, %v3425
    %v3431 = vmul.f32 %v3430, %v3429
    %v3432 = vmul.f32 %v3425, %v3163
    %v3433 = vadd.f32 %v3431, %v3432
    %s3434 = sadd.s32 %s56, 11
    %v3435 = vstv %s3434
    %vm3436 = vcmp.lt.s32.totalorder %v3435, %v55
    %v3437 = vsel %vm3436, 1, 0
    %3438 = vset.pattern.permute.xlu0 0
    %3439 = vperm.xlu0 %3438, %v3437
    %v3440 = vpop.permute.xlu0 %3439
    %vm3441 = vcmp.eq.s32.totalorder %v3440, 1
    %v3442 = vsel %vm3441, %v3433, 0.0
    %s3443 = scalar_lea.vmem [#allocation7], 88
    %3444 = vst [vmem:[%s3443] sm:$0xff] %v3442
    %v3445 = vsel %vm3441, %v3433, %v3163
    %s3446 = scalar_lea.vmem [#allocation2], 144
    %v3447 = vld [vmem:[%s3446] sm:$0xff]
    %v3448 = vld [vmem:[%s3446 + $0x8] sm:$0xf]
    %v3449 = vunpack.c.l.bf16 %v3447
    %v3450 = vunpack.c.h.bf16 %v3447
    %v3451 = vunpack.c.l.bf16 %v3448
    %v3452 = vpack.c.bf16 %v3445, %v3445
    %v3453 = vld [vmem:[#allocation5] sm:$0xff]
    %v3454 = vld [vmem:[#allocation5 + $0x8] sm:$0xf]
    %v3455 = vld [vmem:[#allocation5 + $0xc] sm:$0xff]
    %v3456 = vld [vmem:[#allocation5 + $0x14] sm:$0xf]
    %v3457 = vld [vmem:[#allocation5 + $0x18] sm:$0xff]
    %v3458 = vld [vmem:[#allocation5 + $0x20] sm:$0xf]
    %v3459 = vld [vmem:[#allocation5 + $0x24] sm:$0xff]
    %v3460 = vld [vmem:[#allocation5 + $0x2c] sm:$0xf]
    %v3461 = vld [vmem:[#allocation5 + $0x30] sm:$0xff]
    %v3462 = vld [vmem:[#allocation5 + $0x38] sm:$0xf]
    %v3463 = vld [vmem:[#allocation5 + $0x3c] sm:$0xff]
    %v3464 = vld [vmem:[#allocation5 + $0x44] sm:$0xf]
    %v3465 = vld [vmem:[#allocation5 + $0x48] sm:$0xff]
    %v3466 = vld [vmem:[#allocation5 + $0x50] sm:$0xf]
    %v3467 = vld [vmem:[#allocation5 + $0x54] sm:$0xff]
    %v3468 = vld [vmem:[#allocation5 + $0x5c] sm:$0xf]
    %v3469 = vld [vmem:[#allocation5 + $0x60] sm:$0xff]
    %v3470 = vld [vmem:[#allocation5 + $0x68] sm:$0xf]
    %v3471 = vld [vmem:[#allocation5 + $0x6c] sm:$0xff]
    %v3472 = vld [vmem:[#allocation5 + $0x74] sm:$0xf]
    %v3473 = vld [vmem:[#allocation5 + $0x78] sm:$0xff]
    %v3474 = vld [vmem:[#allocation5 + $0x80] sm:$0xf]
    %v3475 = vld [vmem:[#allocation5 + $0x84] sm:$0xff]
    %v3476 = vld [vmem:[#allocation5 + $0x8c] sm:$0xf]
    %v3477 = vld [vmem:[#allocation5 + $0x90] sm:$0xff]
    %v3478 = vld [vmem:[#allocation5 + $0x98] sm:$0xf]
    %v3479 = vld [vmem:[#allocation5 + $0x9c] sm:$0xff]
    %v3480 = vld [vmem:[#allocation5 + $0xa4] sm:$0xf]
    %v3481 = vld [vmem:[#allocation5 + $0xa8] sm:$0xff]
    %v3482 = vld [vmem:[#allocation5 + $0xb0] sm:$0xf]
    %v3483 = vld [vmem:[#allocation5 + $0xb4] sm:$0xff]
    %v3484 = vld [vmem:[#allocation5 + $0xbc] sm:$0xf]
    %v3517 = vunpack.c.l.b16 %v3453
    %v3518 = vunpack.c.h.b16 %v3453
    %v3519 = vunpack.c.l.b16 %v3454
    %v3520 = vunpack.c.l.b16 %v3455
    %v3521 = vunpack.c.h.b16 %v3455
    %v3522 = vunpack.c.l.b16 %v3456
    %v3523 = vunpack.c.l.b16 %v3457
    %v3524 = vunpack.c.h.b16 %v3457
    %v3525 = vunpack.c.l.b16 %v3458
    %v3526 = vunpack.c.l.b16 %v3459
    %v3527 = vunpack.c.h.b16 %v3459
    %v3528 = vunpack.c.l.b16 %v3460
    %v3529 = vunpack.c.l.b16 %v3461
    %v3530 = vunpack.c.h.b16 %v3461
    %v3531 = vunpack.c.l.b16 %v3462
    %v3532 = vunpack.c.l.b16 %v3463
    %v3533 = vunpack.c.h.b16 %v3463
    %v3534 = vunpack.c.l.b16 %v3464
    %v3535 = vunpack.c.l.b16 %v3465
    %v3536 = vunpack.c.h.b16 %v3465
    %v3537 = vunpack.c.l.b16 %v3466
    %v3538 = vunpack.c.l.b16 %v3467
    %v3539 = vunpack.c.h.b16 %v3467
    %v3540 = vunpack.c.l.b16 %v3468
    %v3541 = vunpack.c.l.b16 %v3469
    %v3542 = vunpack.c.h.b16 %v3469
    %v3543 = vunpack.c.l.b16 %v3470
    %v3544 = vunpack.c.l.b16 %v3471
    %v3545 = vunpack.c.h.b16 %v3471
    %v3546 = vunpack.c.l.b16 %v3472
    %v3547 = vunpack.c.l.b16 %v3473
    %v3548 = vunpack.c.h.b16 %v3473
    %v3549 = vunpack.c.l.b16 %v3474
    %v3550 = vunpack.c.l.b16 %v3475
    %v3551 = vunpack.c.h.b16 %v3475
    %v3552 = vunpack.c.l.b16 %v3476
    %v3553 = vunpack.c.l.b16 %v3477
    %v3554 = vunpack.c.h.b16 %v3477
    %v3555 = vunpack.c.l.b16 %v3478
    %v3556 = vunpack.c.l.b16 %v3479
    %v3557 = vunpack.c.h.b16 %v3479
    %v3558 = vunpack.c.l.b16 %v3480
    %v3559 = vunpack.c.l.b16 %v3481
    %v3560 = vunpack.c.h.b16 %v3481
    %v3561 = vunpack.c.l.b16 %v3482
    %v3562 = vunpack.c.l.b16 %v3483
    %v3563 = vunpack.c.h.b16 %v3483
    %v3564 = vunpack.c.l.b16 %v3484
    %v3565 = vpack.c.b16 %v3520, %v3517
    %v3566 = vpack.c.b16 %v3521, %v3518
    %v3567 = vpack.c.b16 %v3522, %v3519
    %v3568 = vpack.c.b16 %v3526, %v3523
    %v3569 = vpack.c.b16 %v3527, %v3524
    %v3570 = vpack.c.b16 %v3528, %v3525
    %v3571 = vpack.c.b16 %v3532, %v3529
    %v3572 = vpack.c.b16 %v3533, %v3530
    %v3573 = vpack.c.b16 %v3534, %v3531
    %v3574 = vpack.c.b16 %v3538, %v3535
    %v3575 = vpack.c.b16 %v3539, %v3536
    %v3576 = vpack.c.b16 %v3540, %v3537
    %v3577 = vpack.c.b16 %v3544, %v3541
    %v3578 = vpack.c.b16 %v3545, %v3542
    %v3579 = vpack.c.b16 %v3546, %v3543
    %v3580 = vpack.c.b16 %v3550, %v3547
    %v3581 = vpack.c.b16 %v3551, %v3548
    %v3582 = vpack.c.b16 %v3552, %v3549
    %v3583 = vpack.c.b16 %v3556, %v3553
    %v3584 = vpack.c.b16 %v3557, %v3554
    %v3585 = vpack.c.b16 %v3558, %v3555
    %v3586 = vpack.c.b16 %v3562, %v3559
    %v3587 = vpack.c.b16 %v3563, %v3560
    %v3588 = vpack.c.b16 %v3564, %v3561
    %3613 = vmatprep.subr.bf16.mxu0 %v3587
    %3614 = vmatpush1.bf16.msra.mxu0 %v3586
    %3615 = vmatprep.subr.bf16.mxu0 %v3584
    %3616 = vmatpush1.bf16.msra.mxu0 %v3583
    %3617 = vmatprep.subr.bf16.mxu0 %v3581
    %3618 = vmatpush1.bf16.msra.mxu0 %v3580
    %3619 = vmatprep.subr.bf16.mxu0 %v3578
    %3620 = vmatpush1.bf16.msra.mxu0 %v3577
    %3621 = vmatprep.subr.bf16.mxu0 %v3575
    %3622 = vmatpush1.bf16.msra.mxu0 %v3574
    %3623 = vmatprep.subr.bf16.mxu0 %v3572
    %3624 = vmatpush1.bf16.msra.mxu0 %v3571
    %3625 = vmatprep.subr.bf16.mxu0 %v3569
    %3626 = vmatpush1.bf16.msra.mxu0 %v3568
    %3627 = vmatprep.subr.bf16.mxu0 %v3566
    %3628 = vmatpush1.bf16.msra.mxu0 %v3565
    %3629 = vmatprep.subr.bf16.mxu0 0
    %3630 = vmatpush2.bf16.msra.mxu0 0
    %3631 = vmatprep.subr.bf16.mxu0 0
    %3632 = vmatpush2.bf16.msra.mxu0 0
    %3633 = vmatprep.subr.bf16.mxu0 0
    %3634 = vmatpush2.bf16.msra.mxu0 0
    %3635 = vmatprep.subr.bf16.mxu0 0
    %3636 = vmatpush2.bf16.msra.mxu0 0
    %3637 = vmatprep.subr.bf16.mxu0 0
    %3638 = vmatpush2.bf16.msra.mxu0 0
    %3639 = vmatprep.subr.bf16.mxu0 0
    %3640 = vmatpush2.bf16.msra.mxu0 0
    %3641 = vmatprep.subr.bf16.mxu0 0
    %3642 = vmatpush2.bf16.msra.mxu0 0
    %3643 = vmatprep.subr.bf16.mxu0 0
    %3644 = vmatpush2.bf16.msra.mxu0 0
    %3645 = vmatprep.mubr.bf16.mxu0 0
    %3646 = vmatmul.mubr.bf16.gmra.mxu0 %v3452
    %v3647 = vpop.f32.mrf.mxu0
    %v3648 = vadd.f32 0.0, %v3647
    %v3649 = vpop.f32.mrf.mxu0
    %v3650 = vadd.f32 0.0, %v3649
    %v3651 = vpop.f32.mrf.mxu0
    %v3652 = vpop.f32.mrf.mxu0
    %3653 = vdwg.mxu0
    %3654 = vmatprep.subr.bf16.mxu0 0
    %3655 = vmatpush1.bf16.msra.mxu0 %v3588
    %3656 = vmatprep.subr.bf16.mxu0 0
    %3657 = vmatpush1.bf16.msra.mxu0 %v3585
    %3658 = vmatprep.subr.bf16.mxu0 0
    %3659 = vmatpush1.bf16.msra.mxu0 %v3582
    %3660 = vmatprep.subr.bf16.mxu0 0
    %3661 = vmatpush1.bf16.msra.mxu0 %v3579
    %3662 = vmatprep.subr.bf16.mxu0 0
    %3663 = vmatpush1.bf16.msra.mxu0 %v3576
    %3664 = vmatprep.subr.bf16.mxu0 0
    %3665 = vmatpush1.bf16.msra.mxu0 %v3573
    %3666 = vmatprep.subr.bf16.mxu0 0
    %3667 = vmatpush1.bf16.msra.mxu0 %v3570
    %3668 = vmatprep.subr.bf16.mxu0 0
    %3669 = vmatpush1.bf16.msra.mxu0 %v3567
    %3670 = vmatprep.subr.bf16.mxu0 0
    %3671 = vmatpush2.bf16.msra.mxu0 0
    %3672 = vmatprep.subr.bf16.mxu0 0
    %3673 = vmatpush2.bf16.msra.mxu0 0
    %3674 = vmatprep.subr.bf16.mxu0 0
    %3675 = vmatpush2.bf16.msra.mxu0 0
    %3676 = vmatprep.subr.bf16.mxu0 0
    %3677 = vmatpush2.bf16.msra.mxu0 0
    %3678 = vmatprep.subr.bf16.mxu0 0
    %3679 = vmatpush2.bf16.msra.mxu0 0
    %3680 = vmatprep.subr.bf16.mxu0 0
    %3681 = vmatpush2.bf16.msra.mxu0 0
    %3682 = vmatprep.subr.bf16.mxu0 0
    %3683 = vmatpush2.bf16.msra.mxu0 0
    %3684 = vmatprep.subr.bf16.mxu0 0
    %3685 = vmatpush2.bf16.msra.mxu0 0
    %3686 = vmatprep.mubr.bf16.mxu0 0
    %3687 = vmatmul.mubr.bf16.gmra.mxu0 %v3452
    %v3688 = vpop.f32.mrf.mxu0
    %v3689 = vadd.f32 0.0, %v3688
    %v3690 = vpop.f32.mrf.mxu0
    %v3691 = vpop.f32.mrf.mxu0
    %v3692 = vpop.f32.mrf.mxu0
    %3693 = vdwg.mxu0
    %v3694 = vadd.f32 %v3449, %v3648
    %v3695 = vxor.u32 %v3694, 2147483648
    %v3696 = vmul.f32 %v3695, 1.442695
    %v3697 = vpow.pop %v3696
    %v3698 = vadd.f32 %v3697, 1.0
    %v3699 = vrcp.pop %v3698
    %v3700 = vmul.f32 1.0, %v3699
    %v3701 = vadd.f32 %v3450, %v3650
    %v3702 = vxor.u32 %v3701, 2147483648
    %v3703 = vmul.f32 %v3702, 1.442695
    %v3704 = vpow.pop %v3703
    %v3705 = vadd.f32 %v3704, 1.0
    %v3706 = vrcp.pop %v3705
    %v3707 = vmul.f32 1.0, %v3706
    %v3708 = vadd.f32 %v3689, %v62
    %v3709 = vmul.f32 %v3700, %v3708
    %v3710 = vadd.f32 %v3451, %v3709
    %v3711 = vtanh.pop %v3710
    %v3712 = vsub.f32 1.0, %v3707
    %v3713 = vmul.f32 %v3712, %v3711
    %v3714 = vmul.f32 %v3707, %v3445
    %v3715 = vadd.f32 %v3713, %v3714
    %s3716 = sadd.s32 %s56, 12
    %v3717 = vstv %s3716
    %vm3718 = vcmp.lt.s32.totalorder %v3717, %v55
    %v3719 = vsel %vm3718, 1, 0
    %3720 = vset.pattern.permute.xlu0 0
    %3721 = vperm.xlu0 %3720, %v3719
    %v3722 = vpop.permute.xlu0 %3721
    %vm3723 = vcmp.eq.s32.totalorder %v3722, 1
    %v3724 = vsel %vm3723, %v3715, 0.0
    %s3725 = scalar_lea.vmem [#allocation7], 96
    %3726 = vst [vmem:[%s3725] sm:$0xff] %v3724
    %v3727 = vsel %vm3723, %v3715, %v3445
    %s3728 = scalar_lea.vmem [#allocation2], 156
    %v3729 = vld [vmem:[%s3728] sm:$0xff]
    %v3730 = vld [vmem:[%s3728 + $0x8] sm:$0xf]
    %v3731 = vunpack.c.l.bf16 %v3729
    %v3732 = vunpack.c.h.bf16 %v3729
    %v3733 = vunpack.c.l.bf16 %v3730
    %v3734 = vpack.c.bf16 %v3727, %v3727
    %v3735 = vld [vmem:[#allocation5] sm:$0xff]
    %v3736 = vld [vmem:[#allocation5 + $0x8] sm:$0xf]
    %v3737 = vld [vmem:[#allocation5 + $0xc] sm:$0xff]
    %v3738 = vld [vmem:[#allocation5 + $0x14] sm:$0xf]
    %v3739 = vld [vmem:[#allocation5 + $0x18] sm:$0xff]
    %v3740 = vld [vmem:[#allocation5 + $0x20] sm:$0xf]
    %v3741 = vld [vmem:[#allocation5 + $0x24] sm:$0xff]
    %v3742 = vld [vmem:[#allocation5 + $0x2c] sm:$0xf]
    %v3743 = vld [vmem:[#allocation5 + $0x30] sm:$0xff]
    %v3744 = vld [vmem:[#allocation5 + $0x38] sm:$0xf]
    %v3745 = vld [vmem:[#allocation5 + $0x3c] sm:$0xff]
    %v3746 = vld [vmem:[#allocation5 + $0x44] sm:$0xf]
    %v3747 = vld [vmem:[#allocation5 + $0x48] sm:$0xff]
    %v3748 = vld [vmem:[#allocation5 + $0x50] sm:$0xf]
    %v3749 = vld [vmem:[#allocation5 + $0x54] sm:$0xff]
    %v3750 = vld [vmem:[#allocation5 + $0x5c] sm:$0xf]
    %v3751 = vld [vmem:[#allocation5 + $0x60] sm:$0xff]
    %v3752 = vld [vmem:[#allocation5 + $0x68] sm:$0xf]
    %v3753 = vld [vmem:[#allocation5 + $0x6c] sm:$0xff]
    %v3754 = vld [vmem:[#allocation5 + $0x74] sm:$0xf]
    %v3755 = vld [vmem:[#allocation5 + $0x78] sm:$0xff]
    %v3756 = vld [vmem:[#allocation5 + $0x80] sm:$0xf]
    %v3757 = vld [vmem:[#allocation5 + $0x84] sm:$0xff]
    %v3758 = vld [vmem:[#allocation5 + $0x8c] sm:$0xf]
    %v3759 = vld [vmem:[#allocation5 + $0x90] sm:$0xff]
    %v3760 = vld [vmem:[#allocation5 + $0x98] sm:$0xf]
    %v3761 = vld [vmem:[#allocation5 + $0x9c] sm:$0xff]
    %v3762 = vld [vmem:[#allocation5 + $0xa4] sm:$0xf]
    %v3763 = vld [vmem:[#allocation5 + $0xa8] sm:$0xff]
    %v3764 = vld [vmem:[#allocation5 + $0xb0] sm:$0xf]
    %v3765 = vld [vmem:[#allocation5 + $0xb4] sm:$0xff]
    %v3766 = vld [vmem:[#allocation5 + $0xbc] sm:$0xf]
    %v3799 = vunpack.c.l.b16 %v3735
    %v3800 = vunpack.c.h.b16 %v3735
    %v3801 = vunpack.c.l.b16 %v3736
    %v3802 = vunpack.c.l.b16 %v3737
    %v3803 = vunpack.c.h.b16 %v3737
    %v3804 = vunpack.c.l.b16 %v3738
    %v3805 = vunpack.c.l.b16 %v3739
    %v3806 = vunpack.c.h.b16 %v3739
    %v3807 = vunpack.c.l.b16 %v3740
    %v3808 = vunpack.c.l.b16 %v3741
    %v3809 = vunpack.c.h.b16 %v3741
    %v3810 = vunpack.c.l.b16 %v3742
    %v3811 = vunpack.c.l.b16 %v3743
    %v3812 = vunpack.c.h.b16 %v3743
    %v3813 = vunpack.c.l.b16 %v3744
    %v3814 = vunpack.c.l.b16 %v3745
    %v3815 = vunpack.c.h.b16 %v3745
    %v3816 = vunpack.c.l.b16 %v3746
    %v3817 = vunpack.c.l.b16 %v3747
    %v3818 = vunpack.c.h.b16 %v3747
    %v3819 = vunpack.c.l.b16 %v3748
    %v3820 = vunpack.c.l.b16 %v3749
    %v3821 = vunpack.c.h.b16 %v3749
    %v3822 = vunpack.c.l.b16 %v3750
    %v3823 = vunpack.c.l.b16 %v3751
    %v3824 = vunpack.c.h.b16 %v3751
    %v3825 = vunpack.c.l.b16 %v3752
    %v3826 = vunpack.c.l.b16 %v3753
    %v3827 = vunpack.c.h.b16 %v3753
    %v3828 = vunpack.c.l.b16 %v3754
    %v3829 = vunpack.c.l.b16 %v3755
    %v3830 = vunpack.c.h.b16 %v3755
    %v3831 = vunpack.c.l.b16 %v3756
    %v3832 = vunpack.c.l.b16 %v3757
    %v3833 = vunpack.c.h.b16 %v3757
    %v3834 = vunpack.c.l.b16 %v3758
    %v3835 = vunpack.c.l.b16 %v3759
    %v3836 = vunpack.c.h.b16 %v3759
    %v3837 = vunpack.c.l.b16 %v3760
    %v3838 = vunpack.c.l.b16 %v3761
    %v3839 = vunpack.c.h.b16 %v3761
    %v3840 = vunpack.c.l.b16 %v3762
    %v3841 = vunpack.c.l.b16 %v3763
    %v3842 = vunpack.c.h.b16 %v3763
    %v3843 = vunpack.c.l.b16 %v3764
    %v3844 = vunpack.c.l.b16 %v3765
    %v3845 = vunpack.c.h.b16 %v3765
    %v3846 = vunpack.c.l.b16 %v3766
    %v3847 = vpack.c.b16 %v3802, %v3799
    %v3848 = vpack.c.b16 %v3803, %v3800
    %v3849 = vpack.c.b16 %v3804, %v3801
    %v3850 = vpack.c.b16 %v3808, %v3805
    %v3851 = vpack.c.b16 %v3809, %v3806
    %v3852 = vpack.c.b16 %v3810, %v3807
    %v3853 = vpack.c.b16 %v3814, %v3811
    %v3854 = vpack.c.b16 %v3815, %v3812
    %v3855 = vpack.c.b16 %v3816, %v3813
    %v3856 = vpack.c.b16 %v3820, %v3817
    %v3857 = vpack.c.b16 %v3821, %v3818
    %v3858 = vpack.c.b16 %v3822, %v3819
    %v3859 = vpack.c.b16 %v3826, %v3823
    %v3860 = vpack.c.b16 %v3827, %v3824
    %v3861 = vpack.c.b16 %v3828, %v3825
    %v3862 = vpack.c.b16 %v3832, %v3829
    %v3863 = vpack.c.b16 %v3833, %v3830
    %v3864 = vpack.c.b16 %v3834, %v3831
    %v3865 = vpack.c.b16 %v3838, %v3835
    %v3866 = vpack.c.b16 %v3839, %v3836
    %v3867 = vpack.c.b16 %v3840, %v3837
    %v3868 = vpack.c.b16 %v3844, %v3841
    %v3869 = vpack.c.b16 %v3845, %v3842
    %v3870 = vpack.c.b16 %v3846, %v3843
    %3895 = vmatprep.subr.bf16.mxu0 %v3869
    %3896 = vmatpush1.bf16.msra.mxu0 %v3868
    %3897 = vmatprep.subr.bf16.mxu0 %v3866
    %3898 = vmatpush1.bf16.msra.mxu0 %v3865
    %3899 = vmatprep.subr.bf16.mxu0 %v3863
    %3900 = vmatpush1.bf16.msra.mxu0 %v3862
    %3901 = vmatprep.subr.bf16.mxu0 %v3860
    %3902 = vmatpush1.bf16.msra.mxu0 %v3859
    %3903 = vmatprep.subr.bf16.mxu0 %v3857
    %3904 = vmatpush1.bf16.msra.mxu0 %v3856
    %3905 = vmatprep.subr.bf16.mxu0 %v3854
    %3906 = vmatpush1.bf16.msra.mxu0 %v3853
    %3907 = vmatprep.subr.bf16.mxu0 %v3851
    %3908 = vmatpush1.bf16.msra.mxu0 %v3850
    %3909 = vmatprep.subr.bf16.mxu0 %v3848
    %3910 = vmatpush1.bf16.msra.mxu0 %v3847
    %3911 = vmatprep.subr.bf16.mxu0 0
    %3912 = vmatpush2.bf16.msra.mxu0 0
    %3913 = vmatprep.subr.bf16.mxu0 0
    %3914 = vmatpush2.bf16.msra.mxu0 0
    %3915 = vmatprep.subr.bf16.mxu0 0
    %3916 = vmatpush2.bf16.msra.mxu0 0
    %3917 = vmatprep.subr.bf16.mxu0 0
    %3918 = vmatpush2.bf16.msra.mxu0 0
    %3919 = vmatprep.subr.bf16.mxu0 0
    %3920 = vmatpush2.bf16.msra.mxu0 0
    %3921 = vmatprep.subr.bf16.mxu0 0
    %3922 = vmatpush2.bf16.msra.mxu0 0
    %3923 = vmatprep.subr.bf16.mxu0 0
    %3924 = vmatpush2.bf16.msra.mxu0 0
    %3925 = vmatprep.subr.bf16.mxu0 0
    %3926 = vmatpush2.bf16.msra.mxu0 0
    %3927 = vmatprep.mubr.bf16.mxu0 0
    %3928 = vmatmul.mubr.bf16.gmra.mxu0 %v3734
    %v3929 = vpop.f32.mrf.mxu0
    %v3930 = vadd.f32 0.0, %v3929
    %v3931 = vpop.f32.mrf.mxu0
    %v3932 = vadd.f32 0.0, %v3931
    %v3933 = vpop.f32.mrf.mxu0
    %v3934 = vpop.f32.mrf.mxu0
    %3935 = vdwg.mxu0
    %3936 = vmatprep.subr.bf16.mxu0 0
    %3937 = vmatpush1.bf16.msra.mxu0 %v3870
    %3938 = vmatprep.subr.bf16.mxu0 0
    %3939 = vmatpush1.bf16.msra.mxu0 %v3867
    %3940 = vmatprep.subr.bf16.mxu0 0
    %3941 = vmatpush1.bf16.msra.mxu0 %v3864
    %3942 = vmatprep.subr.bf16.mxu0 0
    %3943 = vmatpush1.bf16.msra.mxu0 %v3861
    %3944 = vmatprep.subr.bf16.mxu0 0
    %3945 = vmatpush1.bf16.msra.mxu0 %v3858
    %3946 = vmatprep.subr.bf16.mxu0 0
    %3947 = vmatpush1.bf16.msra.mxu0 %v3855
    %3948 = vmatprep.subr.bf16.mxu0 0
    %3949 = vmatpush1.bf16.msra.mxu0 %v3852
    %3950 = vmatprep.subr.bf16.mxu0 0
    %3951 = vmatpush1.bf16.msra.mxu0 %v3849
    %3952 = vmatprep.subr.bf16.mxu0 0
    %3953 = vmatpush2.bf16.msra.mxu0 0
    %3954 = vmatprep.subr.bf16.mxu0 0
    %3955 = vmatpush2.bf16.msra.mxu0 0
    %3956 = vmatprep.subr.bf16.mxu0 0
    %3957 = vmatpush2.bf16.msra.mxu0 0
    %3958 = vmatprep.subr.bf16.mxu0 0
    %3959 = vmatpush2.bf16.msra.mxu0 0
    %3960 = vmatprep.subr.bf16.mxu0 0
    %3961 = vmatpush2.bf16.msra.mxu0 0
    %3962 = vmatprep.subr.bf16.mxu0 0
    %3963 = vmatpush2.bf16.msra.mxu0 0
    %3964 = vmatprep.subr.bf16.mxu0 0
    %3965 = vmatpush2.bf16.msra.mxu0 0
    %3966 = vmatprep.subr.bf16.mxu0 0
    %3967 = vmatpush2.bf16.msra.mxu0 0
    %3968 = vmatprep.mubr.bf16.mxu0 0
    %3969 = vmatmul.mubr.bf16.gmra.mxu0 %v3734
    %v3970 = vpop.f32.mrf.mxu0
    %v3971 = vadd.f32 0.0, %v3970
    %v3972 = vpop.f32.mrf.mxu0
    %v3973 = vpop.f32.mrf.mxu0
    %v3974 = vpop.f32.mrf.mxu0
    %3975 = vdwg.mxu0
    %v3976 = vadd.f32 %v3731, %v3930
    %v3977 = vxor.u32 %v3976, 2147483648
    %v3978 = vmul.f32 %v3977, 1.442695
    %v3979 = vpow.pop %v3978
    %v3980 = vadd.f32 %v3979, 1.0
    %v3981 = vrcp.pop %v3980
    %v3982 = vmul.f32 1.0, %v3981
    %v3983 = vadd.f32 %v3732, %v3932
    %v3984 = vxor.u32 %v3983, 2147483648
    %v3985 = vmul.f32 %v3984, 1.442695
    %v3986 = vpow.pop %v3985
    %v3987 = vadd.f32 %v3986, 1.0
    %v3988 = vrcp.pop %v3987
    %v3989 = vmul.f32 1.0, %v3988
    %v3990 = vadd.f32 %v3971, %v62
    %v3991 = vmul.f32 %v3982, %v3990
    %v3992 = vadd.f32 %v3733, %v3991
    %v3993 = vtanh.pop %v3992
    %v3994 = vsub.f32 1.0, %v3989
    %v3995 = vmul.f32 %v3994, %v3993
    %v3996 = vmul.f32 %v3989, %v3727
    %v3997 = vadd.f32 %v3995, %v3996
    %s3998 = sadd.s32 %s56, 13
    %v3999 = vstv %s3998
    %vm4000 = vcmp.lt.s32.totalorder %v3999, %v55
    %v4001 = vsel %vm4000, 1, 0
    %4002 = vset.pattern.permute.xlu0 0
    %4003 = vperm.xlu0 %4002, %v4001
    %v4004 = vpop.permute.xlu0 %4003
    %vm4005 = vcmp.eq.s32.totalorder %v4004, 1
    %v4006 = vsel %vm4005, %v3997, 0.0
    %s4007 = scalar_lea.vmem [#allocation7], 104
    %4008 = vst [vmem:[%s4007] sm:$0xff] %v4006
    %v4009 = vsel %vm4005, %v3997, %v3727
    %s4010 = scalar_lea.vmem [#allocation2], 168
    %v4011 = vld [vmem:[%s4010] sm:$0xff]
    %v4012 = vld [vmem:[%s4010 + $0x8] sm:$0xf]
    %v4013 = vunpack.c.l.bf16 %v4011
    %v4014 = vunpack.c.h.bf16 %v4011
    %v4015 = vunpack.c.l.bf16 %v4012
    %v4016 = vpack.c.bf16 %v4009, %v4009
    %v4017 = vld [vmem:[#allocation5] sm:$0xff]
    %v4018 = vld [vmem:[#allocation5 + $0x8] sm:$0xf]
    %v4019 = vld [vmem:[#allocation5 + $0xc] sm:$0xff]
    %v4020 = vld [vmem:[#allocation5 + $0x14] sm:$0xf]
    %v4021 = vld [vmem:[#allocation5 + $0x18] sm:$0xff]
    %v4022 = vld [vmem:[#allocation5 + $0x20] sm:$0xf]
    %v4023 = vld [vmem:[#allocation5 + $0x24] sm:$0xff]
    %v4024 = vld [vmem:[#allocation5 + $0x2c] sm:$0xf]
    %v4025 = vld [vmem:[#allocation5 + $0x30] sm:$0xff]
    %v4026 = vld [vmem:[#allocation5 + $0x38] sm:$0xf]
    %v4027 = vld [vmem:[#allocation5 + $0x3c] sm:$0xff]
    %v4028 = vld [vmem:[#allocation5 + $0x44] sm:$0xf]
    %v4029 = vld [vmem:[#allocation5 + $0x48] sm:$0xff]
    %v4030 = vld [vmem:[#allocation5 + $0x50] sm:$0xf]
    %v4031 = vld [vmem:[#allocation5 + $0x54] sm:$0xff]
    %v4032 = vld [vmem:[#allocation5 + $0x5c] sm:$0xf]
    %v4033 = vld [vmem:[#allocation5 + $0x60] sm:$0xff]
    %v4034 = vld [vmem:[#allocation5 + $0x68] sm:$0xf]
    %v4035 = vld [vmem:[#allocation5 + $0x6c] sm:$0xff]
    %v4036 = vld [vmem:[#allocation5 + $0x74] sm:$0xf]
    %v4037 = vld [vmem:[#allocation5 + $0x78] sm:$0xff]
    %v4038 = vld [vmem:[#allocation5 + $0x80] sm:$0xf]
    %v4039 = vld [vmem:[#allocation5 + $0x84] sm:$0xff]
    %v4040 = vld [vmem:[#allocation5 + $0x8c] sm:$0xf]
    %v4041 = vld [vmem:[#allocation5 + $0x90] sm:$0xff]
    %v4042 = vld [vmem:[#allocation5 + $0x98] sm:$0xf]
    %v4043 = vld [vmem:[#allocation5 + $0x9c] sm:$0xff]
    %v4044 = vld [vmem:[#allocation5 + $0xa4] sm:$0xf]
    %v4045 = vld [vmem:[#allocation5 + $0xa8] sm:$0xff]
    %v4046 = vld [vmem:[#allocation5 + $0xb0] sm:$0xf]
    %v4047 = vld [vmem:[#allocation5 + $0xb4] sm:$0xff]
    %v4048 = vld [vmem:[#allocation5 + $0xbc] sm:$0xf]
    %v4081 = vunpack.c.l.b16 %v4017
    %v4082 = vunpack.c.h.b16 %v4017
    %v4083 = vunpack.c.l.b16 %v4018
    %v4084 = vunpack.c.l.b16 %v4019
    %v4085 = vunpack.c.h.b16 %v4019
    %v4086 = vunpack.c.l.b16 %v4020
    %v4087 = vunpack.c.l.b16 %v4021
    %v4088 = vunpack.c.h.b16 %v4021
    %v4089 = vunpack.c.l.b16 %v4022
    %v4090 = vunpack.c.l.b16 %v4023
    %v4091 = vunpack.c.h.b16 %v4023
    %v4092 = vunpack.c.l.b16 %v4024
    %v4093 = vunpack.c.l.b16 %v4025
    %v4094 = vunpack.c.h.b16 %v4025
    %v4095 = vunpack.c.l.b16 %v4026
    %v4096 = vunpack.c.l.b16 %v4027
    %v4097 = vunpack.c.h.b16 %v4027
    %v4098 = vunpack.c.l.b16 %v4028
    %v4099 = vunpack.c.l.b16 %v4029
    %v4100 = vunpack.c.h.b16 %v4029
    %v4101 = vunpack.c.l.b16 %v4030
    %v4102 = vunpack.c.l.b16 %v4031
    %v4103 = vunpack.c.h.b16 %v4031
    %v4104 = vunpack.c.l.b16 %v4032
    %v4105 = vunpack.c.l.b16 %v4033
    %v4106 = vunpack.c.h.b16 %v4033
    %v4107 = vunpack.c.l.b16 %v4034
    %v4108 = vunpack.c.l.b16 %v4035
    %v4109 = vunpack.c.h.b16 %v4035
    %v4110 = vunpack.c.l.b16 %v4036
    %v4111 = vunpack.c.l.b16 %v4037
    %v4112 = vunpack.c.h.b16 %v4037
    %v4113 = vunpack.c.l.b16 %v4038
    %v4114 = vunpack.c.l.b16 %v4039
    %v4115 = vunpack.c.h.b16 %v4039
    %v4116 = vunpack.c.l.b16 %v4040
    %v4117 = vunpack.c.l.b16 %v4041
    %v4118 = vunpack.c.h.b16 %v4041
    %v4119 = vunpack.c.l.b16 %v4042
    %v4120 = vunpack.c.l.b16 %v4043
    %v4121 = vunpack.c.h.b16 %v4043
    %v4122 = vunpack.c.l.b16 %v4044
    %v4123 = vunpack.c.l.b16 %v4045
    %v4124 = vunpack.c.h.b16 %v4045
    %v4125 = vunpack.c.l.b16 %v4046
    %v4126 = vunpack.c.l.b16 %v4047
    %v4127 = vunpack.c.h.b16 %v4047
    %v4128 = vunpack.c.l.b16 %v4048
    %v4129 = vpack.c.b16 %v4084, %v4081
    %v4130 = vpack.c.b16 %v4085, %v4082
    %v4131 = vpack.c.b16 %v4086, %v4083
    %v4132 = vpack.c.b16 %v4090, %v4087
    %v4133 = vpack.c.b16 %v4091, %v4088
    %v4134 = vpack.c.b16 %v4092, %v4089
    %v4135 = vpack.c.b16 %v4096, %v4093
    %v4136 = vpack.c.b16 %v4097, %v4094
    %v4137 = vpack.c.b16 %v4098, %v4095
    %v4138 = vpack.c.b16 %v4102, %v4099
    %v4139 = vpack.c.b16 %v4103, %v4100
    %v4140 = vpack.c.b16 %v4104, %v4101
    %v4141 = vpack.c.b16 %v4108, %v4105
    %v4142 = vpack.c.b16 %v4109, %v4106
    %v4143 = vpack.c.b16 %v4110, %v4107
    %v4144 = vpack.c.b16 %v4114, %v4111
    %v4145 = vpack.c.b16 %v4115, %v4112
    %v4146 = vpack.c.b16 %v4116, %v4113
    %v4147 = vpack.c.b16 %v4120, %v4117
    %v4148 = vpack.c.b16 %v4121, %v4118
    %v4149 = vpack.c.b16 %v4122, %v4119
    %v4150 = vpack.c.b16 %v4126, %v4123
    %v4151 = vpack.c.b16 %v4127, %v4124
    %v4152 = vpack.c.b16 %v4128, %v4125
    %4177 = vmatprep.subr.bf16.mxu0 %v4151
    %4178 = vmatpush1.bf16.msra.mxu0 %v4150
    %4179 = vmatprep.subr.bf16.mxu0 %v4148
    %4180 = vmatpush1.bf16.msra.mxu0 %v4147
    %4181 = vmatprep.subr.bf16.mxu0 %v4145
    %4182 = vmatpush1.bf16.msra.mxu0 %v4144
    %4183 = vmatprep.subr.bf16.mxu0 %v4142
    %4184 = vmatpush1.bf16.msra.mxu0 %v4141
    %4185 = vmatprep.subr.bf16.mxu0 %v4139
    %4186 = vmatpush1.bf16.msra.mxu0 %v4138
    %4187 = vmatprep.subr.bf16.mxu0 %v4136
    %4188 = vmatpush1.bf16.msra.mxu0 %v4135
    %4189 = vmatprep.subr.bf16.mxu0 %v4133
    %4190 = vmatpush1.bf16.msra.mxu0 %v4132
    %4191 = vmatprep.subr.bf16.mxu0 %v4130
    %4192 = vmatpush1.bf16.msra.mxu0 %v4129
    %4193 = vmatprep.subr.bf16.mxu0 0
    %4194 = vmatpush2.bf16.msra.mxu0 0
    %4195 = vmatprep.subr.bf16.mxu0 0
    %4196 = vmatpush2.bf16.msra.mxu0 0
    %4197 = vmatprep.subr.bf16.mxu0 0
    %4198 = vmatpush2.bf16.msra.mxu0 0
    %4199 = vmatprep.subr.bf16.mxu0 0
    %4200 = vmatpush2.bf16.msra.mxu0 0
    %4201 = vmatprep.subr.bf16.mxu0 0
    %4202 = vmatpush2.bf16.msra.mxu0 0
    %4203 = vmatprep.subr.bf16.mxu0 0
    %4204 = vmatpush2.bf16.msra.mxu0 0
    %4205 = vmatprep.subr.bf16.mxu0 0
    %4206 = vmatpush2.bf16.msra.mxu0 0
    %4207 = vmatprep.subr.bf16.mxu0 0
    %4208 = vmatpush2.bf16.msra.mxu0 0
    %4209 = vmatprep.mubr.bf16.mxu0 0
    %4210 = vmatmul.mubr.bf16.gmra.mxu0 %v4016
    %v4211 = vpop.f32.mrf.mxu0
    %v4212 = vadd.f32 0.0, %v4211
    %v4213 = vpop.f32.mrf.mxu0
    %v4214 = vadd.f32 0.0, %v4213
    %v4215 = vpop.f32.mrf.mxu0
    %v4216 = vpop.f32.mrf.mxu0
    %4217 = vdwg.mxu0
    %4218 = vmatprep.subr.bf16.mxu0 0
    %4219 = vmatpush1.bf16.msra.mxu0 %v4152
    %4220 = vmatprep.subr.bf16.mxu0 0
    %4221 = vmatpush1.bf16.msra.mxu0 %v4149
    %4222 = vmatprep.subr.bf16.mxu0 0
    %4223 = vmatpush1.bf16.msra.mxu0 %v4146
    %4224 = vmatprep.subr.bf16.mxu0 0
    %4225 = vmatpush1.bf16.msra.mxu0 %v4143
    %4226 = vmatprep.subr.bf16.mxu0 0
    %4227 = vmatpush1.bf16.msra.mxu0 %v4140
    %4228 = vmatprep.subr.bf16.mxu0 0
    %4229 = vmatpush1.bf16.msra.mxu0 %v4137
    %4230 = vmatprep.subr.bf16.mxu0 0
    %4231 = vmatpush1.bf16.msra.mxu0 %v4134
    %4232 = vmatprep.subr.bf16.mxu0 0
    %4233 = vmatpush1.bf16.msra.mxu0 %v4131
    %4234 = vmatprep.subr.bf16.mxu0 0
    %4235 = vmatpush2.bf16.msra.mxu0 0
    %4236 = vmatprep.subr.bf16.mxu0 0
    %4237 = vmatpush2.bf16.msra.mxu0 0
    %4238 = vmatprep.subr.bf16.mxu0 0
    %4239 = vmatpush2.bf16.msra.mxu0 0
    %4240 = vmatprep.subr.bf16.mxu0 0
    %4241 = vmatpush2.bf16.msra.mxu0 0
    %4242 = vmatprep.subr.bf16.mxu0 0
    %4243 = vmatpush2.bf16.msra.mxu0 0
    %4244 = vmatprep.subr.bf16.mxu0 0
    %4245 = vmatpush2.bf16.msra.mxu0 0
    %4246 = vmatprep.subr.bf16.mxu0 0
    %4247 = vmatpush2.bf16.msra.mxu0 0
    %4248 = vmatprep.subr.bf16.mxu0 0
    %4249 = vmatpush2.bf16.msra.mxu0 0
    %4250 = vmatprep.mubr.bf16.mxu0 0
    %4251 = vmatmul.mubr.bf16.gmra.mxu0 %v4016
    %v4252 = vpop.f32.mrf.mxu0
    %v4253 = vadd.f32 0.0, %v4252
    %v4254 = vpop.f32.mrf.mxu0
    %v4255 = vpop.f32.mrf.mxu0
    %v4256 = vpop.f32.mrf.mxu0
    %4257 = vdwg.mxu0
    %v4258 = vadd.f32 %v4013, %v4212
    %v4259 = vxor.u32 %v4258, 2147483648
    %v4260 = vmul.f32 %v4259, 1.442695
    %v4261 = vpow.pop %v4260
    %v4262 = vadd.f32 %v4261, 1.0
    %v4263 = vrcp.pop %v4262
    %v4264 = vmul.f32 1.0, %v4263
    %v4265 = vadd.f32 %v4014, %v4214
    %v4266 = vxor.u32 %v4265, 2147483648
    %v4267 = vmul.f32 %v4266, 1.442695
    %v4268 = vpow.pop %v4267
    %v4269 = vadd.f32 %v4268, 1.0
    %v4270 = vrcp.pop %v4269
    %v4271 = vmul.f32 1.0, %v4270
    %v4272 = vadd.f32 %v4253, %v62
    %v4273 = vmul.f32 %v4264, %v4272
    %v4274 = vadd.f32 %v4015, %v4273
    %v4275 = vtanh.pop %v4274
    %v4276 = vsub.f32 1.0, %v4271
    %v4277 = vmul.f32 %v4276, %v4275
    %v4278 = vmul.f32 %v4271, %v4009
    %v4279 = vadd.f32 %v4277, %v4278
    %s4280 = sadd.s32 %s56, 14
    %v4281 = vstv %s4280
    %vm4282 = vcmp.lt.s32.totalorder %v4281, %v55
    %v4283 = vsel %vm4282, 1, 0
    %4284 = vset.pattern.permute.xlu0 0
    %4285 = vperm.xlu0 %4284, %v4283
    %v4286 = vpop.permute.xlu0 %4285
    %vm4287 = vcmp.eq.s32.totalorder %v4286, 1
    %v4288 = vsel %vm4287, %v4279, 0.0
    %s4289 = scalar_lea.vmem [#allocation7], 112
    %4290 = vst [vmem:[%s4289] sm:$0xff] %v4288
    %v4291 = vsel %vm4287, %v4279, %v4009
    %s4292 = scalar_lea.vmem [#allocation2], 180
    %v4293 = vld [vmem:[%s4292] sm:$0xff]
    %v4294 = vld [vmem:[%s4292 + $0x8] sm:$0xf]
    %v4295 = vunpack.c.l.bf16 %v4293
    %v4296 = vunpack.c.h.bf16 %v4293
    %v4297 = vunpack.c.l.bf16 %v4294
    %v4298 = vpack.c.bf16 %v4291, %v4291
    %v4299 = vld [vmem:[#allocation5] sm:$0xff]
    %v4300 = vld [vmem:[#allocation5 + $0x8] sm:$0xf]
    %v4301 = vld [vmem:[#allocation5 + $0xc] sm:$0xff]
    %v4302 = vld [vmem:[#allocation5 + $0x14] sm:$0xf]
    %v4303 = vld [vmem:[#allocation5 + $0x18] sm:$0xff]
    %v4304 = vld [vmem:[#allocation5 + $0x20] sm:$0xf]
    %v4305 = vld [vmem:[#allocation5 + $0x24] sm:$0xff]
    %v4306 = vld [vmem:[#allocation5 + $0x2c] sm:$0xf]
    %v4307 = vld [vmem:[#allocation5 + $0x30] sm:$0xff]
    %v4308 = vld [vmem:[#allocation5 + $0x38] sm:$0xf]
    %v4309 = vld [vmem:[#allocation5 + $0x3c] sm:$0xff]
    %v4310 = vld [vmem:[#allocation5 + $0x44] sm:$0xf]
    %v4311 = vld [vmem:[#allocation5 + $0x48] sm:$0xff]
    %v4312 = vld [vmem:[#allocation5 + $0x50] sm:$0xf]
    %v4313 = vld [vmem:[#allocation5 + $0x54] sm:$0xff]
    %v4314 = vld [vmem:[#allocation5 + $0x5c] sm:$0xf]
    %v4315 = vld [vmem:[#allocation5 + $0x60] sm:$0xff]
    %v4316 = vld [vmem:[#allocation5 + $0x68] sm:$0xf]
    %v4317 = vld [vmem:[#allocation5 + $0x6c] sm:$0xff]
    %v4318 = vld [vmem:[#allocation5 + $0x74] sm:$0xf]
    %v4319 = vld [vmem:[#allocation5 + $0x78] sm:$0xff]
    %v4320 = vld [vmem:[#allocation5 + $0x80] sm:$0xf]
    %v4321 = vld [vmem:[#allocation5 + $0x84] sm:$0xff]
    %v4322 = vld [vmem:[#allocation5 + $0x8c] sm:$0xf]
    %v4323 = vld [vmem:[#allocation5 + $0x90] sm:$0xff]
    %v4324 = vld [vmem:[#allocation5 + $0x98] sm:$0xf]
    %v4325 = vld [vmem:[#allocation5 + $0x9c] sm:$0xff]
    %v4326 = vld [vmem:[#allocation5 + $0xa4] sm:$0xf]
    %v4327 = vld [vmem:[#allocation5 + $0xa8] sm:$0xff]
    %v4328 = vld [vmem:[#allocation5 + $0xb0] sm:$0xf]
    %v4329 = vld [vmem:[#allocation5 + $0xb4] sm:$0xff]
    %v4330 = vld [vmem:[#allocation5 + $0xbc] sm:$0xf]
    %v4363 = vunpack.c.l.b16 %v4299
    %v4364 = vunpack.c.h.b16 %v4299
    %v4365 = vunpack.c.l.b16 %v4300
    %v4366 = vunpack.c.l.b16 %v4301
    %v4367 = vunpack.c.h.b16 %v4301
    %v4368 = vunpack.c.l.b16 %v4302
    %v4369 = vunpack.c.l.b16 %v4303
    %v4370 = vunpack.c.h.b16 %v4303
    %v4371 = vunpack.c.l.b16 %v4304
    %v4372 = vunpack.c.l.b16 %v4305
    %v4373 = vunpack.c.h.b16 %v4305
    %v4374 = vunpack.c.l.b16 %v4306
    %v4375 = vunpack.c.l.b16 %v4307
    %v4376 = vunpack.c.h.b16 %v4307
    %v4377 = vunpack.c.l.b16 %v4308
    %v4378 = vunpack.c.l.b16 %v4309
    %v4379 = vunpack.c.h.b16 %v4309
    %v4380 = vunpack.c.l.b16 %v4310
    %v4381 = vunpack.c.l.b16 %v4311
    %v4382 = vunpack.c.h.b16 %v4311
    %v4383 = vunpack.c.l.b16 %v4312
    %v4384 = vunpack.c.l.b16 %v4313
    %v4385 = vunpack.c.h.b16 %v4313
    %v4386 = vunpack.c.l.b16 %v4314
    %v4387 = vunpack.c.l.b16 %v4315
    %v4388 = vunpack.c.h.b16 %v4315
    %v4389 = vunpack.c.l.b16 %v4316
    %v4390 = vunpack.c.l.b16 %v4317
    %v4391 = vunpack.c.h.b16 %v4317
    %v4392 = vunpack.c.l.b16 %v4318
    %v4393 = vunpack.c.l.b16 %v4319
    %v4394 = vunpack.c.h.b16 %v4319
    %v4395 = vunpack.c.l.b16 %v4320
    %v4396 = vunpack.c.l.b16 %v4321
    %v4397 = vunpack.c.h.b16 %v4321
    %v4398 = vunpack.c.l.b16 %v4322
    %v4399 = vunpack.c.l.b16 %v4323
    %v4400 = vunpack.c.h.b16 %v4323
    %v4401 = vunpack.c.l.b16 %v4324
    %v4402 = vunpack.c.l.b16 %v4325
    %v4403 = vunpack.c.h.b16 %v4325
    %v4404 = vunpack.c.l.b16 %v4326
    %v4405 = vunpack.c.l.b16 %v4327
    %v4406 = vunpack.c.h.b16 %v4327
    %v4407 = vunpack.c.l.b16 %v4328
    %v4408 = vunpack.c.l.b16 %v4329
    %v4409 = vunpack.c.h.b16 %v4329
    %v4410 = vunpack.c.l.b16 %v4330
    %v4411 = vpack.c.b16 %v4366, %v4363
    %v4412 = vpack.c.b16 %v4367, %v4364
    %v4413 = vpack.c.b16 %v4368, %v4365
    %v4414 = vpack.c.b16 %v4372, %v4369
    %v4415 = vpack.c.b16 %v4373, %v4370
    %v4416 = vpack.c.b16 %v4374, %v4371
    %v4417 = vpack.c.b16 %v4378, %v4375
    %v4418 = vpack.c.b16 %v4379, %v4376
    %v4419 = vpack.c.b16 %v4380, %v4377
    %v4420 = vpack.c.b16 %v4384, %v4381
    %v4421 = vpack.c.b16 %v4385, %v4382
    %v4422 = vpack.c.b16 %v4386, %v4383
    %v4423 = vpack.c.b16 %v4390, %v4387
    %v4424 = vpack.c.b16 %v4391, %v4388
    %v4425 = vpack.c.b16 %v4392, %v4389
    %v4426 = vpack.c.b16 %v4396, %v4393
    %v4427 = vpack.c.b16 %v4397, %v4394
    %v4428 = vpack.c.b16 %v4398, %v4395
    %v4429 = vpack.c.b16 %v4402, %v4399
    %v4430 = vpack.c.b16 %v4403, %v4400
    %v4431 = vpack.c.b16 %v4404, %v4401
    %v4432 = vpack.c.b16 %v4408, %v4405
    %v4433 = vpack.c.b16 %v4409, %v4406
    %v4434 = vpack.c.b16 %v4410, %v4407
    %4459 = vmatprep.subr.bf16.mxu0 %v4433
    %4460 = vmatpush1.bf16.msra.mxu0 %v4432
    %4461 = vmatprep.subr.bf16.mxu0 %v4430
    %4462 = vmatpush1.bf16.msra.mxu0 %v4429
    %4463 = vmatprep.subr.bf16.mxu0 %v4427
    %4464 = vmatpush1.bf16.msra.mxu0 %v4426
    %4465 = vmatprep.subr.bf16.mxu0 %v4424
    %4466 = vmatpush1.bf16.msra.mxu0 %v4423
    %4467 = vmatprep.subr.bf16.mxu0 %v4421
    %4468 = vmatpush1.bf16.msra.mxu0 %v4420
    %4469 = vmatprep.subr.bf16.mxu0 %v4418
    %4470 = vmatpush1.bf16.msra.mxu0 %v4417
    %4471 = vmatprep.subr.bf16.mxu0 %v4415
    %4472 = vmatpush1.bf16.msra.mxu0 %v4414
    %4473 = vmatprep.subr.bf16.mxu0 %v4412
    %4474 = vmatpush1.bf16.msra.mxu0 %v4411
    %4475 = vmatprep.subr.bf16.mxu0 0
    %4476 = vmatpush2.bf16.msra.mxu0 0
    %4477 = vmatprep.subr.bf16.mxu0 0
    %4478 = vmatpush2.bf16.msra.mxu0 0
    %4479 = vmatprep.subr.bf16.mxu0 0
    %4480 = vmatpush2.bf16.msra.mxu0 0
    %4481 = vmatprep.subr.bf16.mxu0 0
    %4482 = vmatpush2.bf16.msra.mxu0 0
    %4483 = vmatprep.subr.bf16.mxu0 0
    %4484 = vmatpush2.bf16.msra.mxu0 0
    %4485 = vmatprep.subr.bf16.mxu0 0
    %4486 = vmatpush2.bf16.msra.mxu0 0
    %4487 = vmatprep.subr.bf16.mxu0 0
    %4488 = vmatpush2.bf16.msra.mxu0 0
    %4489 = vmatprep.subr.bf16.mxu0 0
    %4490 = vmatpush2.bf16.msra.mxu0 0
    %4491 = vmatprep.mubr.bf16.mxu0 0
    %4492 = vmatmul.mubr.bf16.gmra.mxu0 %v4298
    %v4493 = vpop.f32.mrf.mxu0
    %v4494 = vadd.f32 0.0, %v4493
    %v4495 = vpop.f32.mrf.mxu0
    %v4496 = vadd.f32 0.0, %v4495
    %v4497 = vpop.f32.mrf.mxu0
    %v4498 = vpop.f32.mrf.mxu0
    %4499 = vdwg.mxu0
    %4500 = vmatprep.subr.bf16.mxu0 0
    %4501 = vmatpush1.bf16.msra.mxu0 %v4434
    %4502 = vmatprep.subr.bf16.mxu0 0
    %4503 = vmatpush1.bf16.msra.mxu0 %v4431
    %4504 = vmatprep.subr.bf16.mxu0 0
    %4505 = vmatpush1.bf16.msra.mxu0 %v4428
    %4506 = vmatprep.subr.bf16.mxu0 0
    %4507 = vmatpush1.bf16.msra.mxu0 %v4425
    %4508 = vmatprep.subr.bf16.mxu0 0
    %4509 = vmatpush1.bf16.msra.mxu0 %v4422
    %4510 = vmatprep.subr.bf16.mxu0 0
    %4511 = vmatpush1.bf16.msra.mxu0 %v4419
    %4512 = vmatprep.subr.bf16.mxu0 0
    %4513 = vmatpush1.bf16.msra.mxu0 %v4416
    %4514 = vmatprep.subr.bf16.mxu0 0
    %4515 = vmatpush1.bf16.msra.mxu0 %v4413
    %4516 = vmatprep.subr.bf16.mxu0 0
    %4517 = vmatpush2.bf16.msra.mxu0 0
    %4518 = vmatprep.subr.bf16.mxu0 0
    %4519 = vmatpush2.bf16.msra.mxu0 0
    %4520 = vmatprep.subr.bf16.mxu0 0
    %4521 = vmatpush2.bf16.msra.mxu0 0
    %4522 = vmatprep.subr.bf16.mxu0 0
    %4523 = vmatpush2.bf16.msra.mxu0 0
    %4524 = vmatprep.subr.bf16.mxu0 0
    %4525 = vmatpush2.bf16.msra.mxu0 0
    %4526 = vmatprep.subr.bf16.mxu0 0
    %4527 = vmatpush2.bf16.msra.mxu0 0
    %4528 = vmatprep.subr.bf16.mxu0 0
    %4529 = vmatpush2.bf16.msra.mxu0 0
    %4530 = vmatprep.subr.bf16.mxu0 0
    %4531 = vmatpush2.bf16.msra.mxu0 0
    %4532 = vmatprep.mubr.bf16.mxu0 0
    %4533 = vmatmul.mubr.bf16.gmra.mxu0 %v4298
    %v4534 = vpop.f32.mrf.mxu0
    %v4535 = vadd.f32 0.0, %v4534
    %v4536 = vpop.f32.mrf.mxu0
    %v4537 = vpop.f32.mrf.mxu0
    %v4538 = vpop.f32.mrf.mxu0
    %4539 = vdwg.mxu0
    %v4540 = vadd.f32 %v4295, %v4494
    %v4541 = vxor.u32 %v4540, 2147483648
    %v4542 = vmul.f32 %v4541, 1.442695
    %v4543 = vpow.pop %v4542
    %v4544 = vadd.f32 %v4543, 1.0
    %v4545 = vrcp.pop %v4544
    %v4546 = vmul.f32 1.0, %v4545
    %v4547 = vadd.f32 %v4296, %v4496
    %v4548 = vxor.u32 %v4547, 2147483648
    %v4549 = vmul.f32 %v4548, 1.442695
    %v4550 = vpow.pop %v4549
    %v4551 = vadd.f32 %v4550, 1.0
    %v4552 = vrcp.pop %v4551
    %v4553 = vmul.f32 1.0, %v4552
    %v4554 = vadd.f32 %v4535, %v62
    %v4555 = vmul.f32 %v4546, %v4554
    %v4556 = vadd.f32 %v4297, %v4555
    %v4557 = vtanh.pop %v4556
    %v4558 = vsub.f32 1.0, %v4553
    %v4559 = vmul.f32 %v4558, %v4557
    %v4560 = vmul.f32 %v4553, %v4291
    %v4561 = vadd.f32 %v4559, %v4560
    %s4562 = sadd.s32 %s56, 15
    %v4563 = vstv %s4562
    %vm4564 = vcmp.lt.s32.totalorder %v4563, %v55
    %v4565 = vsel %vm4564, 1, 0
    %4566 = vset.pattern.permute.xlu0 0
    %4567 = vperm.xlu0 %4566, %v4565
    %v4568 = vpop.permute.xlu0 %4567
    %vm4569 = vcmp.eq.s32.totalorder %v4568, 1
    %v4570 = vsel %vm4569, %v4561, 0.0
    %s4571 = scalar_lea.vmem [#allocation7], 120
    %4572 = vst [vmem:[%s4571] sm:$0xff] %v4570
    %v4573 = vsel %vm4569, %v4561, %v4291
    %4574 = vst [vmem:[#allocation8] sm:$0xff] %v4573
    // Predicated region
    $region30: #{tpu_custom_call.1} parent=1 // pred_check
      _
    $region31: #{tpu_custom_call.1} parent=1 // pred_check_branch
      %4576 = sbr.rel (0) target = $region33
    $region32: #{tpu_custom_call.1} parent=1 // pred_region
      %s4578 = ssub.s32 2048, 2048
      %4579 = vsyncadd [#allocation4], %s4578
      %s4580 = sshll.u32 [#allocation7], 4
      %s4581 = int_to_ptr.vmem [resolvable:$true] %s4580
      %4586 = dma.vmem_to_hbm [thread:$0]  %s4581, 2048, %s4, [#allocation4], 128, 128, 8
    $region33: #{tpu_custom_call.1} parent=1 // pred_fallthru
      _
    // Predicated region
    $region34: #{tpu_custom_call.1} parent=1 // pred_check
      _
    $region35: #{tpu_custom_call.1} parent=1 // pred_check_branch
      %4588 = sbr.rel (0) target = $region37
    $region36: #{tpu_custom_call.1} parent=1 // pred_region
      %s4590 = ssub.s32 128, 128
      %4591 = vsyncadd [#allocation9], %s4590
      %s4593 = sshll.u32 [#allocation8], 4
      %s4594 = int_to_ptr.vmem [resolvable:$true] %s4593
      %4596 = dma.vmem_to_hbm [thread:$0]  %s4594, 128, %s5, [#allocation9]
    $region37: #{tpu_custom_call.1} parent=1 // pred_fallthru
      _
    // Predicated region
    $region38: #{tpu_custom_call.1} parent=1 // pred_check
      _
    $region39: #{tpu_custom_call.1} parent=1 // pred_check_branch
      %4598 = sbr.rel (0) target = $region41
    $region40: #{tpu_custom_call.1} parent=1 // pred_region
      %4599 = dma.done [#allocation4], 2048
    $region41: #{tpu_custom_call.1} parent=1 // pred_fallthru
      _
    // Predicated region
    $region42: #{tpu_custom_call.1} parent=1 // pred_check
      _
    $region43: #{tpu_custom_call.1} parent=1 // pred_check_branch
      %4601 = sbr.rel (0) target = $region45
    $region44: #{tpu_custom_call.1} parent=1 // pred_region
      %4602 = dma.done [#allocation9], 128
    $region45: #{tpu_custom_call.1} parent=1 // pred_fallthru
      _
    %4603 = vsyncpa [#allocation3], 1
    %4604 = vsyncpa [#allocation6], 1
    %4605 = vsyncpa [#allocation4], 1
    %4606 = vsyncpa [#allocation9], 1

</llo_original>
